<compile_context>
chip_gen: v7x
topology: tpu7x:2x2x1
jax: 0.10.0
libtpu: 0.0.40
codegen_flags: <defaults>
</compile_context>

<pallas_src>
import functools

import jax
import jax.numpy as jnp
import numpy as np
from jax.experimental import pallas as pl
from jax.experimental.pallas import tpu as pltpu

SELU_ALPHA = 1.6732632423543772
SELU_SCALE = 1.0507009873554805
BN_EPS = 1e-5


def _selu(x):
    return SELU_SCALE * jnp.where(x > 0, x, SELU_ALPHA * (jnp.exp(x) - 1.0))


def _bn_fold(gamma, beta, mean, var, eps=BN_EPS):
    s = gamma / jnp.sqrt(var + eps)
    t = beta - mean * s
    return s.reshape(1, -1), t.reshape(1, -1)


def _pick_row_block(total, cap, multiple=1):
    """Largest divisor of `total` that is <= cap and a multiple of `multiple`."""
    cap = max(multiple, min(cap, total))
    for t in range(cap, 0, -1):
        if total % t == 0 and t % multiple == 0:
            return t
    return total


# ==========================================================================
# Kernel A: fused ConvTranspose2d(2,2) + bias + SELU + BN  +  skip branch
#           (1x1 conv + bias + SELU + BN)  +  residual add.
# Output layout (N, H, 2, W, 2*C) == (N, 2H, 2W, C) after a free reshape.
# ==========================================================================
def _deconv_skip_kernel(x_ref, sk_ref, wd_ref, bd_ref, sd_ref, td_ref,
                        ws_ref, bs_ref, ss_ref, ts_ref, o_ref):
    # x_ref : (1, TH, W, Cin)       input rows
    # sk_ref: (1, TH, 2, W, 2*Cs)   skip, interleaved layout (free reshape outside)
    # wd_ref: (2, Cin, 2*C)         deconv taps, ki major; (kj, co) packed on lanes
    # ws_ref: (2*Cs, 2*C)           block-diagonal 1x1-conv weights
    # o_ref : (1, TH, 2, W, 2*C)
    x = x_ref[0]                                  # (TH, W, Cin)
    ws = ws_ref[...]
    # hoist per-channel constants out of the tap loop (loaded once per tile)
    bd = bd_ref[...]; sd = sd_ref[...]; td = td_ref[...]
    bs = bs_ref[...]; ss = ss_ref[...]; ts = ts_ref[...]

    for ki in range(2):
        # both kj taps of deconv row `ki` fused into ONE matmul of width 2*C
        y = jnp.einsum("hwc,cd->hwd", x, wd_ref[ki],
                       preferred_element_type=jnp.float32) + bd
        y = _selu(y) * sd + td
        # skip branch: 1x1 conv (both kj columns at once via block-diag weights)
        sk = sk_ref[0, :, ki, :, :]               # (TH, W, 2*Cs)
        z = jnp.einsum("hwc,cd->hwd", sk, ws,
                       preferred_element_type=jnp.float32) + bs
        z = _selu(z) * ss + ts
        o_ref[0, :, ki, :, :] = (y + z).astype(o_ref.dtype)


def fused_deconv_skip(x, skip6, wd2, bd2, sd2, td2, ws2, bs2, ss2, ts2,
                      row_block=64):
    N, H, W, Cin = x.shape
    C2 = wd2.shape[-1]                            # 2 * C
    Cs2 = skip6.shape[-1]                         # 2 * Cs
    th = _pick_row_block(H, row_block)
    grid = (N, H // th)

    out = pl.pallas_call(
        _deconv_skip_kernel,
        out_shape=jax.ShapeDtypeStruct((N, H, 2, W, C2), x.dtype),
        grid_spec=pltpu.PrefetchScalarGridSpec(
            num_scalar_prefetch=0,
            grid=grid,
            in_specs=[
                pl.BlockSpec((1, th, W, Cin), lambda n, r: (n, r, 0, 0)),
                pl.BlockSpec((1, th, 2, W, Cs2), lambda n, r: (n, r, 0, 0, 0)),
                pl.BlockSpec(wd2.shape, lambda n, r: (0, 0, 0)),
                pl.BlockSpec(bd2.shape, lambda n, r: (0, 0)),
                pl.BlockSpec(sd2.shape, lambda n, r: (0, 0)),
                pl.BlockSpec(td2.shape, lambda n, r: (0, 0)),
                pl.BlockSpec(ws2.shape, lambda n, r: (0, 0)),
                pl.BlockSpec(bs2.shape, lambda n, r: (0, 0)),
                pl.BlockSpec(ss2.shape, lambda n, r: (0, 0)),
                pl.BlockSpec(ts2.shape, lambda n, r: (0, 0)),
            ],
            out_specs=pl.BlockSpec((1, th, 2, W, C2),
                                   lambda n, r: (n, r, 0, 0, 0)),
        ),
        compiler_params=pltpu.CompilerParams(
            dimension_semantics=("parallel", "parallel")),
    )(x, skip6, wd2, bd2, sd2, td2, ws2, bs2, ss2, ts2)

    C = C2 // 2
    return out.reshape(N, 2 * H, 2 * W, C)        # free reshape (pure view)


# ==========================================================================
# Kernel B: 3x3 dilation-2 'same' conv + bias + SELU + BN.
# Grid over (batch, row blocks); the 2-row halo above/below each block comes in
# through two extra BlockSpecs on the same input; 'same' zero padding is
# assembled in a VMEM scratch (no XLA jnp.pad HBM pass).
# ==========================================================================
def _dilated_conv_kernel(mid_ref, top_ref, bot_ref, w_ref, b_ref, s_ref, t_ref,
                         o_ref, xp_ref):
    r = pl.program_id(1)
    n_r = pl.num_programs(1)
    TH, W2, Ci = mid_ref.shape[1], mid_ref.shape[2], mid_ref.shape[3]

    # --- build the zero-padded input tile in VMEM scratch (TH+4, W2+4, Ci) ---
    zcol = jnp.zeros((TH + 4, 2, Ci), xp_ref.dtype)
    xp_ref[0, :, 0:2, :] = zcol                         # left 'same' pad
    xp_ref[0, :, W2 + 2:W2 + 4, :] = zcol               # right 'same' pad
    xp_ref[0, 0:2, 2:W2 + 2, :] = jnp.where(
        r > 0, top_ref[0], 0.0).astype(xp_ref.dtype)     # top halo / top pad
    xp_ref[0, 2:TH + 2, 2:W2 + 2, :] = mid_ref[0].astype(xp_ref.dtype)
    xp_ref[0, TH + 2:TH + 4, 2:W2 + 2, :] = jnp.where(
        r < n_r - 1, bot_ref[0], 0.0).astype(xp_ref.dtype)  # bottom halo / pad

    # --- 9-tap dilated conv as accumulating channel matmuls ---
    acc = None
    for ti in range(3):
        for tj in range(3):
            xw = xp_ref[0, 2 * ti:2 * ti + TH, 2 * tj:2 * tj + W2, :]
            part = jnp.einsum("hwc,cd->hwd", xw, w_ref[ti, tj],
                              preferred_element_type=jnp.float32)
            acc = part if acc is None else acc + part
    acc = acc + b_ref[...]
    acc = _selu(acc) * s_ref[...] + t_ref[...]
    o_ref[0] = acc.astype(o_ref.dtype)


def dilated_conv_selu_bn(x, w, b, s, t, row_block=64):
    # x: (N, R, W2, Ci) NHWC; w: (3,3,Ci,Co) HWIO
    N, R, W2, Ci = x.shape
    Co = w.shape[-1]
    th = _pick_row_block(R, row_block, multiple=2)
    n_r = R // th
    rows_half = R // 2          # row count in units of the 2-row halo blocks

    def mid_map(n, r):
        return (n, r, 0, 0)

    def top_map(n, r):          # rows [r*th - 2, r*th): block index r*th/2 - 1
        return (n, jnp.maximum(r * (th // 2) - 1, 0), 0, 0)

    def bot_map(n, r):          # rows [r*th + th, r*th + th + 2)
        return (n, jnp.minimum(r * (th // 2) + th // 2, rows_half - 1), 0, 0)

    def const2(n, r):
        return (0, 0)

    return pl.pallas_call(
        _dilated_conv_kernel,
        out_shape=jax.ShapeDtypeStruct((N, R, W2, Co), x.dtype),
        grid_spec=pltpu.PrefetchScalarGridSpec(
            num_scalar_prefetch=0,
            grid=(N, n_r),
            in_specs=[
                pl.BlockSpec((1, th, W2, Ci), mid_map),
                pl.BlockSpec((1, 2, W2, Ci), top_map),
                pl.BlockSpec((1, 2, W2, Ci), bot_map),
                pl.BlockSpec(w.shape, lambda n, r: (0, 0, 0, 0)),
                pl.BlockSpec(b.shape, const2),
                pl.BlockSpec(s.shape, const2),
                pl.BlockSpec(t.shape, const2),
            ],
            out_specs=pl.BlockSpec((1, th, W2, Co), mid_map),
            scratch_shapes=[pltpu.VMEM((1, th + 4, W2 + 4, Ci), jnp.float32)],
        ),
        compiler_params=pltpu.CompilerParams(
            dimension_semantics=("parallel", "parallel")),
    )(x, x, x, w, b, s, t)


# --------------------------------------------------------------------------
# Parameters (deterministic, synthetic) -- PyTorch weight layouts.
# --------------------------------------------------------------------------
def _init_bn(key, c):
    k1, k2, k3, k4 = jax.random.split(key, 4)
    gamma = 1.0 + 0.1 * jax.random.normal(k1, (c,), jnp.float32)
    beta = 0.1 * jax.random.normal(k2, (c,), jnp.float32)
    mean = 0.1 * jax.random.normal(k3, (c,), jnp.float32)
    var = 1.0 + 0.1 * jax.random.uniform(k4, (c,), jnp.float32)
    return gamma, beta, mean, var


def init_params(key, cin, cs, cout):
    ks = jax.random.split(key, 12)
    p = {}
    p["deconv_w"] = 0.1 * jax.random.normal(ks[0], (cin, cin, 2, 2), jnp.float32)  # (Cin,Cout,kh,kw)
    p["deconv_b"] = 0.1 * jax.random.normal(ks[1], (cin,), jnp.float32)
    p["deconv_bn"] = _init_bn(ks[2], cin)
    p["skip_w"] = 0.1 * jax.random.normal(ks[3], (cin, cs, 1, 1), jnp.float32)      # (Cout,Cin,1,1)
    p["skip_b"] = 0.1 * jax.random.normal(ks[4], (cin,), jnp.float32)
    p["skip_bn"] = _init_bn(ks[5], cin)
    p["conv1_w"] = 0.1 * jax.random.normal(ks[6], (cin, cin, 3, 3), jnp.float32)    # (Cout,Cin,kh,kw)
    p["conv1_b"] = 0.1 * jax.random.normal(ks[7], (cin,), jnp.float32)
    p["conv1_bn"] = _init_bn(ks[8], cin)
    p["conv2_w"] = 0.1 * jax.random.normal(ks[9], (cout, cin, 3, 3), jnp.float32)
    p["conv2_b"] = 0.1 * jax.random.normal(ks[10], (cout,), jnp.float32)
    p["conv2_bn"] = _init_bn(ks[11], cout)
    return p


# --------------------------------------------------------------------------
# Full DeconvBlock forward (inputs/outputs are NCHW like PyTorch).
# --------------------------------------------------------------------------
@functools.partial(jax.jit, static_argnames=("row_block_a", "row_block_c"))
def deconv_block_forward(params, x_nchw, skip_nchw, row_block_a=64, row_block_c=64):
    x = jnp.transpose(x_nchw, (0, 2, 3, 1))       # NHWC
    skip = jnp.transpose(skip_nchw, (0, 2, 3, 1))
    N, H, W, Cin = x.shape
    Cs = skip.shape[-1]

    # deconv weights (Cin, Cout, kh, kw) -> (ki, Cin, kj*Cout + co)
    wd2 = jnp.transpose(params["deconv_w"], (2, 0, 3, 1)).reshape(2, Cin, 2 * Cin)
    s0, t0 = _bn_fold(*params["deconv_bn"])
    bd2 = jnp.tile(params["deconv_b"].reshape(1, -1), (1, 2))
    sd2 = jnp.tile(s0, (1, 2))
    td2 = jnp.tile(t0, (1, 2))

    # skip 1x1 conv (Cout, Cs, 1, 1) -> block-diagonal (2*Cs, 2*Cout)
    ws = jnp.transpose(params["skip_w"][:, :, 0, 0], (1, 0))           # (Cs, Cin)
    ws2 = jnp.kron(jnp.eye(2, dtype=ws.dtype), ws)
    s1, t1 = _bn_fold(*params["skip_bn"])
    bs2 = jnp.tile(params["skip_b"].reshape(1, -1), (1, 2))
    ss2 = jnp.tile(s1, (1, 2))
    ts2 = jnp.tile(t1, (1, 2))

    # skip in interleaved layout (free reshape): (N,2H,2W,Cs) -> (N,H,2,W,2*Cs)
    skip6 = skip.reshape(N, H, 2, W, 2 * Cs)

    # fused deconv + SELU + BN + skip branch + residual add
    z = fused_deconv_skip(x, skip6, wd2, bd2, sd2, td2, ws2, bs2, ss2, ts2,
                          row_block=row_block_a)          # (N, 2H, 2W, Cin)
    # TODO(synk): AlphaDropout(p=0.5) is identity in eval mode (kept as identity).

    # conv_block: two dilated 3x3 convs, each + SELU + BN ('same' pad in-kernel)
    w1 = jnp.transpose(params["conv1_w"], (2, 3, 1, 0))                # HWIO
    s2, t2 = _bn_fold(*params["conv1_bn"])
    z = dilated_conv_selu_bn(z, w1, params["conv1_b"].reshape(1, -1), s2, t2,
                             row_block=row_block_c)

    w2 = jnp.transpose(params["conv2_w"], (2, 3, 1, 0))
    s3, t3 = _bn_fold(*params["conv2_bn"])
    y = dilated_conv_selu_bn(z, w2, params["conv2_b"].reshape(1, -1), s3, t3,
                             row_block=row_block_c)

    return jnp.transpose(y, (0, 3, 1, 2))         # back to NCHW


# --------------------------------------------------------------------------
# Pure-JAX reference (different code path: lax.conv_general_dilated) for sanity.
# --------------------------------------------------------------------------
def reference_forward(params, x_nchw, skip_nchw):
    x = jnp.transpose(x_nchw, (0, 2, 3, 1))
    skip = jnp.transpose(skip_nchw, (0, 2, 3, 1))
    N, H, W, C = x.shape

    wd = jnp.transpose(params["deconv_w"], (2, 3, 0, 1))
    d = jnp.zeros((N, 2 * H, 2 * W, C), jnp.float32)
    for ki in range(2):
        for kj in range(2):
            y = jnp.einsum("nhwc,cd->nhwd", x, wd[ki, kj]) + params["deconv_b"]
            d = d.at[:, ki::2, kj::2, :].set(y)
    s0, t0 = _bn_fold(*params["deconv_bn"])
    d = _selu(d) * s0 + t0

    ws = jnp.transpose(params["skip_w"][:, :, 0, 0], (1, 0))
    y = jnp.einsum("nhwc,cd->nhwd", skip, ws) + params["skip_b"]
    s1, t1 = _bn_fold(*params["skip_bn"])
    z = d + (_selu(y) * s1 + t1)

    dn = ("NHWC", "HWIO", "NHWC")
    w1 = jnp.transpose(params["conv1_w"], (2, 3, 1, 0))
    z = jax.lax.conv_general_dilated(z, w1, (1, 1), "SAME", rhs_dilation=(2, 2),
                                     dimension_numbers=dn) + params["conv1_b"]
    s2, t2 = _bn_fold(*params["conv1_bn"])
    z = _selu(z) * s2 + t2

    w2 = jnp.transpose(params["conv2_w"], (2, 3, 1, 0))
    z = jax.lax.conv_general_dilated(z, w2, (1, 1), "SAME", rhs_dilation=(2, 2),
                                     dimension_numbers=dn) + params["conv2_b"]
    s3, t3 = _bn_fold(*params["conv2_bn"])
    z = _selu(z) * s3 + t3
    return jnp.transpose(z, (0, 3, 1, 2))


if __name__ == "__main__":
    N, CIN, CS, COUT, H, W = 2, 8, 4, 8, 8, 8

    key = jax.random.PRNGKey(0)
    kx, ksk, kp = jax.random.split(key, 3)
    x = jax.random.normal(kx, (N, CIN, H, W), jnp.float32)             # NCHW
    skip = jax.random.normal(ksk, (N, CS, 2 * H, 2 * W), jnp.float32)  # NCHW
    params = init_params(kp, CIN, CS, COUT)

    # small row blocks so this tiny test exercises multi-block grids + row halos
    out = deconv_block_forward(params, x, skip, row_block_a=4, row_block_c=8)
    out = jax.block_until_ready(out)

    ref = jax.block_until_ready(reference_forward(params, x, skip))
    assert out.shape == (N, COUT, 2 * H, 2 * W), out.shape
    assert bool(jnp.all(jnp.isfinite(out)))
    np.testing.assert_allclose(np.asarray(out), np.asarray(ref), rtol=2e-2, atol=2e-2)

    print("KERNEL_OK")
</pallas_src>

<mosaic_0001>
module attributes {stable_mosaic.version = 11 : i64} {
  func.func @_deconv_skip_kernel(%arg0: i32, %arg1: i32, %arg2: memref<1x4x8x8xf32, #tpu.memory_space<vmem>>, %arg3: memref<1x4x2x8x8xf32, #tpu.memory_space<vmem>>, %arg4: memref<2x8x16xf32, #tpu.memory_space<vmem>>, %arg5: memref<1x16xf32, #tpu.memory_space<vmem>>, %arg6: memref<1x16xf32, #tpu.memory_space<vmem>>, %arg7: memref<1x16xf32, #tpu.memory_space<vmem>>, %arg8: memref<8x16xf32, #tpu.memory_space<vmem>>, %arg9: memref<1x16xf32, #tpu.memory_space<vmem>>, %arg10: memref<1x16xf32, #tpu.memory_space<vmem>>, %arg11: memref<1x16xf32, #tpu.memory_space<vmem>>, %arg12: memref<1x4x2x8x16xf32, #tpu.memory_space<vmem>>) attributes {dimension_semantics = [#tpu.dimension_semantics<parallel>, #tpu.dimension_semantics<parallel>], iteration_bounds = array<i64: 2, 2>, scalar_prefetch = 0 : i64, scratch_operands = 0 : i64, tpu.core_type = #tpu.core_type<tc>, window_params = [{transform_indices = @transform_0, window_bounds = array<i64: 1, 4, 8, 8>}, {transform_indices = @transform_1, window_bounds = array<i64: 1, 4, 2, 8, 8>}, {pipeline_mode = #tpu.pipeline_mode<synchronous>, transform_indices = @transform_2, window_bounds = array<i64: 2, 8, 16>}, {pipeline_mode = #tpu.pipeline_mode<synchronous>, transform_indices = @transform_3, window_bounds = array<i64: 1, 16>}, {pipeline_mode = #tpu.pipeline_mode<synchronous>, transform_indices = @transform_4, window_bounds = array<i64: 1, 16>}, {pipeline_mode = #tpu.pipeline_mode<synchronous>, transform_indices = @transform_5, window_bounds = array<i64: 1, 16>}, {pipeline_mode = #tpu.pipeline_mode<synchronous>, transform_indices = @transform_6, window_bounds = array<i64: 8, 16>}, {pipeline_mode = #tpu.pipeline_mode<synchronous>, transform_indices = @transform_7, window_bounds = array<i64: 1, 16>}, {pipeline_mode = #tpu.pipeline_mode<synchronous>, transform_indices = @transform_8, window_bounds = array<i64: 1, 16>}, {pipeline_mode = #tpu.pipeline_mode<synchronous>, transform_indices = @transform_9, window_bounds = array<i64: 1, 16>}, {transform_indices = @transform_10, window_bounds = array<i64: 1, 4, 2, 8, 16>}]} {
    %c0 = arith.constant 0 : index
    %c0_0 = arith.constant 0 : index
    %c0_1 = arith.constant 0 : index
    %c0_2 = arith.constant 0 : index
    %0 = vector.load %arg2[%c0, %c0_0, %c0_1, %c0_2] : memref<1x4x8x8xf32, #tpu.memory_space<vmem>>, vector<1x4x8x8xf32>
    %1 = vector.shape_cast %0 : vector<1x4x8x8xf32> to vector<4x8x8xf32>
    %c0_3 = arith.constant 0 : index
    %c0_4 = arith.constant 0 : index
    %2 = vector.load %arg8[%c0_3, %c0_4] : memref<8x16xf32, #tpu.memory_space<vmem>>, vector<8x16xf32>
    %c0_5 = arith.constant 0 : index
    %c0_6 = arith.constant 0 : index
    %3 = vector.load %arg5[%c0_5, %c0_6] : memref<1x16xf32, #tpu.memory_space<vmem>>, vector<1x16xf32>
    %c0_7 = arith.constant 0 : index
    %c0_8 = arith.constant 0 : index
    %4 = vector.load %arg6[%c0_7, %c0_8] : memref<1x16xf32, #tpu.memory_space<vmem>>, vector<1x16xf32>
    %c0_9 = arith.constant 0 : index
    %c0_10 = arith.constant 0 : index
    %5 = vector.load %arg7[%c0_9, %c0_10] : memref<1x16xf32, #tpu.memory_space<vmem>>, vector<1x16xf32>
    %c0_11 = arith.constant 0 : index
    %c0_12 = arith.constant 0 : index
    %6 = vector.load %arg9[%c0_11, %c0_12] : memref<1x16xf32, #tpu.memory_space<vmem>>, vector<1x16xf32>
    %c0_13 = arith.constant 0 : index
    %c0_14 = arith.constant 0 : index
    %7 = vector.load %arg10[%c0_13, %c0_14] : memref<1x16xf32, #tpu.memory_space<vmem>>, vector<1x16xf32>
    %c0_15 = arith.constant 0 : index
    %c0_16 = arith.constant 0 : index
    %8 = vector.load %arg11[%c0_15, %c0_16] : memref<1x16xf32, #tpu.memory_space<vmem>>, vector<1x16xf32>
    %c0_17 = arith.constant 0 : index
    %c0_18 = arith.constant 0 : index
    %c0_19 = arith.constant 0 : index
    %9 = vector.load %arg4[%c0_17, %c0_18, %c0_19] : memref<2x8x16xf32, #tpu.memory_space<vmem>>, vector<1x8x16xf32>
    %10 = vector.shape_cast %9 : vector<1x8x16xf32> to vector<8x16xf32>
    "tpu.trace_start"() <{level = 10 : i32, message = "hwc,cd->hwd"}> : () -> ()
    %cst = arith.constant dense<0.000000e+00> : vector<4x8x16xf32>
    %11 = tpu.matmul %1, %10, %cst {dimension_numbers = #tpu.dot_dimension_numbers<[2], [0], [0, 1], [1], [0, 0, 0, 1, 1, 1], [], []>} : vector<4x8x8xf32>, vector<8x16xf32>, vector<4x8x16xf32> -> vector<4x8x16xf32>
    "tpu.trace_stop"() : () -> ()
    %12 = vector.shape_cast %3 : vector<1x16xf32> to vector<1x1x16xf32>
    %13 = vector.broadcast %12 : vector<1x1x16xf32> to vector<4x8x16xf32>
    %14 = arith.addf %11, %13 : vector<4x8x16xf32>
    %cst_20 = arith.constant 0.000000e+00 : f32
    %15 = vector.broadcast %cst_20 : f32 to vector<4x8x16xf32>
    %16 = arith.cmpf ogt, %14, %15 : vector<4x8x16xf32>
    %17 = math.exp %14 : vector<4x8x16xf32>
    %cst_21 = arith.constant 1.000000e+00 : f32
    %18 = vector.broadcast %cst_21 : f32 to vector<4x8x16xf32>
    %19 = arith.subf %17, %18 : vector<4x8x16xf32>
    %cst_22 = arith.constant 1.67326319 : f32
    %20 = vector.broadcast %cst_22 : f32 to vector<4x8x16xf32>
    %21 = arith.mulf %20, %19 : vector<4x8x16xf32>
    %22 = arith.select %16, %14, %21 : vector<4x8x16xi1>, vector<4x8x16xf32>
    %cst_23 = arith.constant 1.05070102 : f32
    %23 = vector.broadcast %cst_23 : f32 to vector<4x8x16xf32>
    %24 = arith.mulf %23, %22 : vector<4x8x16xf32>
    %25 = vector.shape_cast %4 : vector<1x16xf32> to vector<1x1x16xf32>
    %26 = vector.broadcast %25 : vector<1x1x16xf32> to vector<4x8x16xf32>
    %27 = arith.mulf %24, %26 : vector<4x8x16xf32>
    %28 = vector.shape_cast %5 : vector<1x16xf32> to vector<1x1x16xf32>
    %29 = vector.broadcast %28 : vector<1x1x16xf32> to vector<4x8x16xf32>
    %30 = arith.addf %27, %29 : vector<4x8x16xf32>
    %c0_24 = arith.constant 0 : index
    %c0_25 = arith.constant 0 : index
    %c0_26 = arith.constant 0 : index
    %c0_27 = arith.constant 0 : index
    %c0_28 = arith.constant 0 : index
    %31 = vector.load %arg3[%c0_24, %c0_25, %c0_26, %c0_27, %c0_28] : memref<1x4x2x8x8xf32, #tpu.memory_space<vmem>>, vector<1x4x1x8x8xf32>
    %32 = vector.shape_cast %31 : vector<1x4x1x8x8xf32> to vector<4x8x8xf32>
    "tpu.trace_start"() <{level = 10 : i32, message = "hwc,cd->hwd"}> : () -> ()
    %cst_29 = arith.constant dense<0.000000e+00> : vector<4x8x16xf32>
    %33 = tpu.matmul %32, %2, %cst_29 {dimension_numbers = #tpu.dot_dimension_numbers<[2], [0], [0, 1], [1], [0, 0, 0, 1, 1, 1], [], []>} : vector<4x8x8xf32>, vector<8x16xf32>, vector<4x8x16xf32> -> vector<4x8x16xf32>
    "tpu.trace_stop"() : () -> ()
    %34 = vector.shape_cast %6 : vector<1x16xf32> to vector<1x1x16xf32>
    %35 = vector.broadcast %34 : vector<1x1x16xf32> to vector<4x8x16xf32>
    %36 = arith.addf %33, %35 : vector<4x8x16xf32>
    %cst_30 = arith.constant 0.000000e+00 : f32
    %37 = vector.broadcast %cst_30 : f32 to vector<4x8x16xf32>
    %38 = arith.cmpf ogt, %36, %37 : vector<4x8x16xf32>
    %39 = math.exp %36 : vector<4x8x16xf32>
    %cst_31 = arith.constant 1.000000e+00 : f32
    %40 = vector.broadcast %cst_31 : f32 to vector<4x8x16xf32>
    %41 = arith.subf %39, %40 : vector<4x8x16xf32>
    %cst_32 = arith.constant 1.67326319 : f32
    %42 = vector.broadcast %cst_32 : f32 to vector<4x8x16xf32>
    %43 = arith.mulf %42, %41 : vector<4x8x16xf32>
    %44 = arith.select %38, %36, %43 : vector<4x8x16xi1>, vector<4x8x16xf32>
    %cst_33 = arith.constant 1.05070102 : f32
    %45 = vector.broadcast %cst_33 : f32 to vector<4x8x16xf32>
    %46 = arith.mulf %45, %44 : vector<4x8x16xf32>
    %47 = vector.shape_cast %7 : vector<1x16xf32> to vector<1x1x16xf32>
    %48 = vector.broadcast %47 : vector<1x1x16xf32> to vector<4x8x16xf32>
    %49 = arith.mulf %46, %48 : vector<4x8x16xf32>
    %50 = vector.shape_cast %8 : vector<1x16xf32> to vector<1x1x16xf32>
    %51 = vector.broadcast %50 : vector<1x1x16xf32> to vector<4x8x16xf32>
    %52 = arith.addf %49, %51 : vector<4x8x16xf32>
    %53 = arith.addf %30, %52 : vector<4x8x16xf32>
    %c0_34 = arith.constant 0 : index
    %c0_35 = arith.constant 0 : index
    %c0_36 = arith.constant 0 : index
    %c0_37 = arith.constant 0 : index
    %c0_38 = arith.constant 0 : index
    %54 = vector.load %arg12[%c0_34, %c0_35, %c0_36, %c0_37, %c0_38] : memref<1x4x2x8x16xf32, #tpu.memory_space<vmem>>, vector<1x4x1x8x16xf32>
    %55 = vector.shape_cast %54 : vector<1x4x1x8x16xf32> to vector<4x8x16xf32>
    %56 = vector.shape_cast %53 : vector<4x8x16xf32> to vector<1x4x1x8x16xf32>
    tpu.vector_store %arg12[%c0_34, %c0_35, %c0_36, %c0_37, %c0_38], %56 {strides = array<i32>} : memref<1x4x2x8x16xf32, #tpu.memory_space<vmem>>, vector<1x4x1x8x16xf32>,
    %c1 = arith.constant 1 : index
    %c0_39 = arith.constant 0 : index
    %c0_40 = arith.constant 0 : index
    %57 = vector.load %arg4[%c1, %c0_39, %c0_40] : memref<2x8x16xf32, #tpu.memory_space<vmem>>, vector<1x8x16xf32>
    %58 = vector.shape_cast %57 : vector<1x8x16xf32> to vector<8x16xf32>
    "tpu.trace_start"() <{level = 10 : i32, message = "hwc,cd->hwd"}> : () -> ()
    %cst_41 = arith.constant dense<0.000000e+00> : vector<4x8x16xf32>
    %59 = tpu.matmul %1, %58, %cst_41 {dimension_numbers = #tpu.dot_dimension_numbers<[2], [0], [0, 1], [1], [0, 0, 0, 1, 1, 1], [], []>} : vector<4x8x8xf32>, vector<8x16xf32>, vector<4x8x16xf32> -> vector<4x8x16xf32>
    "tpu.trace_stop"() : () -> ()
    %60 = vector.shape_cast %3 : vector<1x16xf32> to vector<1x1x16xf32>
    %61 = vector.broadcast %60 : vector<1x1x16xf32> to vector<4x8x16xf32>
    %62 = arith.addf %59, %61 : vector<4x8x16xf32>
    %cst_42 = arith.constant 0.000000e+00 : f32
    %63 = vector.broadcast %cst_42 : f32 to vector<4x8x16xf32>
    %64 = arith.cmpf ogt, %62, %63 : vector<4x8x16xf32>
    %65 = math.exp %62 : vector<4x8x16xf32>
    %cst_43 = arith.constant 1.000000e+00 : f32
    %66 = vector.broadcast %cst_43 : f32 to vector<4x8x16xf32>
    %67 = arith.subf %65, %66 : vector<4x8x16xf32>
    %cst_44 = arith.constant 1.67326319 : f32
    %68 = vector.broadcast %cst_44 : f32 to vector<4x8x16xf32>
    %69 = arith.mulf %68, %67 : vector<4x8x16xf32>
    %70 = arith.select %64, %62, %69 : vector<4x8x16xi1>, vector<4x8x16xf32>
    %cst_45 = arith.constant 1.05070102 : f32
    %71 = vector.broadcast %cst_45 : f32 to vector<4x8x16xf32>
    %72 = arith.mulf %71, %70 : vector<4x8x16xf32>
    %73 = vector.shape_cast %4 : vector<1x16xf32> to vector<1x1x16xf32>
    %74 = vector.broadcast %73 : vector<1x1x16xf32> to vector<4x8x16xf32>
    %75 = arith.mulf %72, %74 : vector<4x8x16xf32>
    %76 = vector.shape_cast %5 : vector<1x16xf32> to vector<1x1x16xf32>
    %77 = vector.broadcast %76 : vector<1x1x16xf32> to vector<4x8x16xf32>
    %78 = arith.addf %75, %77 : vector<4x8x16xf32>
    %c0_46 = arith.constant 0 : index
    %c0_47 = arith.constant 0 : index
    %c1_48 = arith.constant 1 : index
    %c0_49 = arith.constant 0 : index
    %c0_50 = arith.constant 0 : index
    %79 = vector.load %arg3[%c0_46, %c0_47, %c1_48, %c0_49, %c0_50] : memref<1x4x2x8x8xf32, #tpu.memory_space<vmem>>, vector<1x4x1x8x8xf32>
    %80 = vector.shape_cast %79 : vector<1x4x1x8x8xf32> to vector<4x8x8xf32>
    "tpu.trace_start"() <{level = 10 : i32, message = "hwc,cd->hwd"}> : () -> ()
    %cst_51 = arith.constant dense<0.000000e+00> : vector<4x8x16xf32>
    %81 = tpu.matmul %80, %2, %cst_51 {dimension_numbers = #tpu.dot_dimension_numbers<[2], [0], [0, 1], [1], [0, 0, 0, 1, 1, 1], [], []>} : vector<4x8x8xf32>, vector<8x16xf32>, vector<4x8x16xf32> -> vector<4x8x16xf32>
    "tpu.trace_stop"() : () -> ()
    %82 = vector.shape_cast %6 : vector<1x16xf32> to vector<1x1x16xf32>
    %83 = vector.broadcast %82 : vector<1x1x16xf32> to vector<4x8x16xf32>
    %84 = arith.addf %81, %83 : vector<4x8x16xf32>
    %cst_52 = arith.constant 0.000000e+00 : f32
    %85 = vector.broadcast %cst_52 : f32 to vector<4x8x16xf32>
    %86 = arith.cmpf ogt, %84, %85 : vector<4x8x16xf32>
    %87 = math.exp %84 : vector<4x8x16xf32>
    %cst_53 = arith.constant 1.000000e+00 : f32
    %88 = vector.broadcast %cst_53 : f32 to vector<4x8x16xf32>
    %89 = arith.subf %87, %88 : vector<4x8x16xf32>
    %cst_54 = arith.constant 1.67326319 : f32
    %90 = vector.broadcast %cst_54 : f32 to vector<4x8x16xf32>
    %91 = arith.mulf %90, %89 : vector<4x8x16xf32>
    %92 = arith.select %86, %84, %91 : vector<4x8x16xi1>, vector<4x8x16xf32>
    %cst_55 = arith.constant 1.05070102 : f32
    %93 = vector.broadcast %cst_55 : f32 to vector<4x8x16xf32>
    %94 = arith.mulf %93, %92 : vector<4x8x16xf32>
    %95 = vector.shape_cast %7 : vector<1x16xf32> to vector<1x1x16xf32>
    %96 = vector.broadcast %95 : vector<1x1x16xf32> to vector<4x8x16xf32>
    %97 = arith.mulf %94, %96 : vector<4x8x16xf32>
    %98 = vector.shape_cast %8 : vector<1x16xf32> to vector<1x1x16xf32>
    %99 = vector.broadcast %98 : vector<1x1x16xf32> to vector<4x8x16xf32>
    %100 = arith.addf %97, %99 : vector<4x8x16xf32>
    %101 = arith.addf %78, %100 : vector<4x8x16xf32>
    %c0_56 = arith.constant 0 : index
    %c0_57 = arith.constant 0 : index
    %c1_58 = arith.constant 1 : index
    %c0_59 = arith.constant 0 : index
    %c0_60 = arith.constant 0 : index
    %102 = vector.load %arg12[%c0_56, %c0_57, %c1_58, %c0_59, %c0_60] : memref<1x4x2x8x16xf32, #tpu.memory_space<vmem>>, vector<1x4x1x8x16xf32>
    %103 = vector.shape_cast %102 : vector<1x4x1x8x16xf32> to vector<4x8x16xf32>
    %104 = vector.shape_cast %101 : vector<4x8x16xf32> to vector<1x4x1x8x16xf32>
    tpu.vector_store %arg12[%c0_56, %c0_57, %c1_58, %c0_59, %c0_60], %104 {strides = array<i32>} : memref<1x4x2x8x16xf32, #tpu.memory_space<vmem>>, vector<1x4x1x8x16xf32>,
    return
  }
  func.func @transform_0(%arg0: i32, %arg1: i32) -> (i32, i32, i32, i32) {
    %c0_i32 = arith.constant 0 : i32
    %c0_i32_0 = arith.constant 0 : i32
    %c0_i32_1 = arith.constant 0 : i32
    return %arg0, %arg1, %c0_i32, %c0_i32_0 : i32, i32, i32, i32
  }
  func.func @transform_1(%arg0: i32, %arg1: i32) -> (i32, i32, i32, i32, i32) {
    %c0_i32 = arith.constant 0 : i32
    %c0_i32_0 = arith.constant 0 : i32
    %c0_i32_1 = arith.constant 0 : i32
    %c0_i32_2 = arith.constant 0 : i32
    return %arg0, %arg1, %c0_i32, %c0_i32_0, %c0_i32_1 : i32, i32, i32, i32, i32
  }
  func.func @transform_2(%arg0: i32, %arg1: i32) -> (i32, i32, i32) {
    %c0_i32 = arith.constant 0 : i32
    %c0_i32_0 = arith.constant 0 : i32
    %c0_i32_1 = arith.constant 0 : i32
    %c0_i32_2 = arith.constant 0 : i32
    return %c0_i32, %c0_i32_0, %c0_i32_1 : i32, i32, i32
  }
  func.func @transform_3(%arg0: i32, %arg1: i32) -> (i32, i32) {
    %c0_i32 = arith.constant 0 : i32
    %c0_i32_0 = arith.constant 0 : i32
    %c0_i32_1 = arith.constant 0 : i32
    return %c0_i32, %c0_i32_0 : i32, i32
  }
  func.func @transform_4(%arg0: i32, %arg1: i32) -> (i32, i32) {
    %c0_i32 = arith.constant 0 : i32
    %c0_i32_0 = arith.constant 0 : i32
    %c0_i32_1 = arith.constant 0 : i32
    return %c0_i32, %c0_i32_0 : i32, i32
  }
  func.func @transform_5(%arg0: i32, %arg1: i32) -> (i32, i32) {
    %c0_i32 = arith.constant 0 : i32
    %c0_i32_0 = arith.constant 0 : i32
    %c0_i32_1 = arith.constant 0 : i32
    return %c0_i32, %c0_i32_0 : i32, i32
  }
  func.func @transform_6(%arg0: i32, %arg1: i32) -> (i32, i32) {
    %c0_i32 = arith.constant 0 : i32
    %c0_i32_0 = arith.constant 0 : i32
    %c0_i32_1 = arith.constant 0 : i32
    return %c0_i32, %c0_i32_0 : i32, i32
  }
  func.func @transform_7(%arg0: i32, %arg1: i32) -> (i32, i32) {
    %c0_i32 = arith.constant 0 : i32
    %c0_i32_0 = arith.constant 0 : i32
    %c0_i32_1 = arith.constant 0 : i32
    return %c0_i32, %c0_i32_0 : i32, i32
  }
  func.func @transform_8(%arg0: i32, %arg1: i32) -> (i32, i32) {
    %c0_i32 = arith.constant 0 : i32
    %c0_i32_0 = arith.constant 0 : i32
    %c0_i32_1 = arith.constant 0 : i32
    return %c0_i32, %c0_i32_0 : i32, i32
  }
  func.func @transform_9(%arg0: i32, %arg1: i32) -> (i32, i32) {
    %c0_i32 = arith.constant 0 : i32
    %c0_i32_0 = arith.constant 0 : i32
    %c0_i32_1 = arith.constant 0 : i32
    return %c0_i32, %c0_i32_0 : i32, i32
  }
  func.func @transform_10(%arg0: i32, %arg1: i32) -> (i32, i32, i32, i32, i32) {
    %c0_i32 = arith.constant 0 : i32
    %c0_i32_0 = arith.constant 0 : i32
    %c0_i32_1 = arith.constant 0 : i32
    %c0_i32_2 = arith.constant 0 : i32
    return %arg0, %arg1, %c0_i32, %c0_i32_0, %c0_i32_1 : i32, i32, i32, i32, i32
  }
}

module attributes {stable_mosaic.version = 11 : i64} {
  func.func @_dilated_conv_kernel(%arg0: i32, %arg1: i32, %arg2: memref<1x8x16x8xf32, #tpu.memory_space<vmem>>, %arg3: memref<1x2x16x8xf32, #tpu.memory_space<vmem>>, %arg4: memref<1x2x16x8xf32, #tpu.memory_space<vmem>>, %arg5: memref<3x3x8x8xf32, #tpu.memory_space<vmem>>, %arg6: memref<1x8xf32, #tpu.memory_space<vmem>>, %arg7: memref<1x8xf32, #tpu.memory_space<vmem>>, %arg8: memref<1x8xf32, #tpu.memory_space<vmem>>, %arg9: memref<1x8x16x8xf32, #tpu.memory_space<vmem>>, %arg10: memref<1x12x20x8xf32, #tpu.memory_space<vmem>>) attributes {dimension_semantics = [#tpu.dimension_semantics<parallel>, #tpu.dimension_semantics<parallel>], iteration_bounds = array<i64: 2, 2>, scalar_prefetch = 0 : i64, scratch_operands = 1 : i64, tpu.core_type = #tpu.core_type<tc>, window_params = [{transform_indices = @transform_0, window_bounds = array<i64: 1, 8, 16, 8>}, {transform_indices = @transform_1, window_bounds = array<i64: 1, 2, 16, 8>}, {transform_indices = @transform_2, window_bounds = array<i64: 1, 2, 16, 8>}, {pipeline_mode = #tpu.pipeline_mode<synchronous>, transform_indices = @transform_3, window_bounds = array<i64: 3, 3, 8, 8>}, {pipeline_mode = #tpu.pipeline_mode<synchronous>, transform_indices = @transform_4, window_bounds = array<i64: 1, 8>}, {pipeline_mode = #tpu.pipeline_mode<synchronous>, transform_indices = @transform_5, window_bounds = array<i64: 1, 8>}, {pipeline_mode = #tpu.pipeline_mode<synchronous>, transform_indices = @transform_6, window_bounds = array<i64: 1, 8>}, {transform_indices = @transform_7, window_bounds = array<i64: 1, 8, 16, 8>}]} {
    %cst = arith.constant 0.000000e+00 : f32
    %0 = vector.broadcast %cst : f32 to vector<12x2x8xf32>
    %c0 = arith.constant 0 : index
    %c0_0 = arith.constant 0 : index
    %c0_1 = arith.constant 0 : index
    %c0_2 = arith.constant 0 : index
    %1 = vector.load %arg10[%c0, %c0_0, %c0_1, %c0_2] : memref<1x12x20x8xf32, #tpu.memory_space<vmem>>, vector<1x12x2x8xf32>
    %2 = vector.shape_cast %1 : vector<1x12x2x8xf32> to vector<12x2x8xf32>
    %3 = vector.shape_cast %0 : vector<12x2x8xf32> to vector<1x12x2x8xf32>
    tpu.vector_store %arg10[%c0, %c0_0, %c0_1, %c0_2], %3 {strides = array<i32>} : memref<1x12x20x8xf32, #tpu.memory_space<vmem>>, vector<1x12x2x8xf32>,
    %c0_3 = arith.constant 0 : index
    %c0_4 = arith.constant 0 : index
    %c18 = arith.constant 18 : index
    %c0_5 = arith.constant 0 : index
    %4 = vector.load %arg10[%c0_3, %c0_4, %c18, %c0_5] : memref<1x12x20x8xf32, #tpu.memory_space<vmem>>, vector<1x12x2x8xf32>
    %5 = vector.shape_cast %4 : vector<1x12x2x8xf32> to vector<12x2x8xf32>
    %6 = vector.shape_cast %0 : vector<12x2x8xf32> to vector<1x12x2x8xf32>
    tpu.vector_store %arg10[%c0_3, %c0_4, %c18, %c0_5], %6 {strides = array<i32>} : memref<1x12x20x8xf32, #tpu.memory_space<vmem>>, vector<1x12x2x8xf32>,
    %c0_i32 = arith.constant 0 : i32
    %7 = arith.cmpi sgt, %arg1, %c0_i32 : i32
    %c0_6 = arith.constant 0 : index
    %c0_7 = arith.constant 0 : index
    %c0_8 = arith.constant 0 : index
    %c0_9 = arith.constant 0 : index
    %8 = vector.load %arg3[%c0_6, %c0_7, %c0_8, %c0_9] : memref<1x2x16x8xf32, #tpu.memory_space<vmem>>, vector<1x2x16x8xf32>
    %9 = vector.shape_cast %8 : vector<1x2x16x8xf32> to vector<2x16x8xf32>
    %cst_10 = arith.constant 0.000000e+00 : f32
    %10 = vector.broadcast %cst_10 : f32 to vector<2x16x8xf32>
    %11 = arith.select %7, %9, %10 : vector<2x16x8xf32>
    %c0_11 = arith.constant 0 : index
    %c0_12 = arith.constant 0 : index
    %c2 = arith.constant 2 : index
    %c0_13 = arith.constant 0 : index
    %12 = vector.load %arg10[%c0_11, %c0_12, %c2, %c0_13] : memref<1x12x20x8xf32, #tpu.memory_space<vmem>>, vector<1x2x16x8xf32>
    %13 = vector.shape_cast %12 : vector<1x2x16x8xf32> to vector<2x16x8xf32>
    %14 = vector.shape_cast %11 : vector<2x16x8xf32> to vector<1x2x16x8xf32>
    tpu.vector_store %arg10[%c0_11, %c0_12, %c2, %c0_13], %14 {strides = array<i32>} : memref<1x12x20x8xf32, #tpu.memory_space<vmem>>, vector<1x2x16x8xf32>,
    %c0_14 = arith.constant 0 : index
    %c0_15 = arith.constant 0 : index
    %c0_16 = arith.constant 0 : index
    %c0_17 = arith.constant 0 : index
    %15 = vector.load %arg2[%c0_14, %c0_15, %c0_16, %c0_17] : memref<1x8x16x8xf32, #tpu.memory_space<vmem>>, vector<1x8x16x8xf32>
    %16 = vector.shape_cast %15 : vector<1x8x16x8xf32> to vector<8x16x8xf32>
    %c0_18 = arith.constant 0 : index
    %c2_19 = arith.constant 2 : index
    %c2_20 = arith.constant 2 : index
    %c0_21 = arith.constant 0 : index
    %17 = vector.load %arg10[%c0_18, %c2_19, %c2_20, %c0_21] : memref<1x12x20x8xf32, #tpu.memory_space<vmem>>, vector<1x8x16x8xf32>
    %18 = vector.shape_cast %17 : vector<1x8x16x8xf32> to vector<8x16x8xf32>
    %19 = vector.shape_cast %16 : vector<8x16x8xf32> to vector<1x8x16x8xf32>
    tpu.vector_store %arg10[%c0_18, %c2_19, %c2_20, %c0_21], %19 {strides = array<i32>} : memref<1x12x20x8xf32, #tpu.memory_space<vmem>>, vector<1x8x16x8xf32>,
    %c1_i32 = arith.constant 1 : i32
    %20 = arith.cmpi slt, %arg1, %c1_i32 : i32
    %c0_22 = arith.constant 0 : index
    %c0_23 = arith.constant 0 : index
    %c0_24 = arith.constant 0 : index
    %c0_25 = arith.constant 0 : index
    %21 = vector.load %arg4[%c0_22, %c0_23, %c0_24, %c0_25] : memref<1x2x16x8xf32, #tpu.memory_space<vmem>>, vector<1x2x16x8xf32>
    %22 = vector.shape_cast %21 : vector<1x2x16x8xf32> to vector<2x16x8xf32>
    %cst_26 = arith.constant 0.000000e+00 : f32
    %23 = vector.broadcast %cst_26 : f32 to vector<2x16x8xf32>
    %24 = arith.select %20, %22, %23 : vector<2x16x8xf32>
    %c0_27 = arith.constant 0 : index
    %c10 = arith.constant 10 : index
    %c2_28 = arith.constant 2 : index
    %c0_29 = arith.constant 0 : index
    %25 = vector.load %arg10[%c0_27, %c10, %c2_28, %c0_29] : memref<1x12x20x8xf32, #tpu.memory_space<vmem>>, vector<1x2x16x8xf32>
    %26 = vector.shape_cast %25 : vector<1x2x16x8xf32> to vector<2x16x8xf32>
    %27 = vector.shape_cast %24 : vector<2x16x8xf32> to vector<1x2x16x8xf32>
    tpu.vector_store %arg10[%c0_27, %c10, %c2_28, %c0_29], %27 {strides = array<i32>} : memref<1x12x20x8xf32, #tpu.memory_space<vmem>>, vector<1x2x16x8xf32>,
    %c0_30 = arith.constant 0 : index
    %c0_31 = arith.constant 0 : index
    %c0_32 = arith.constant 0 : index
    %c0_33 = arith.constant 0 : index
    %28 = vector.load %arg10[%c0_30, %c0_31, %c0_32, %c0_33] : memref<1x12x20x8xf32, #tpu.memory_space<vmem>>, vector<1x8x16x8xf32>
    %29 = vector.shape_cast %28 : vector<1x8x16x8xf32> to vector<8x16x8xf32>
    %c0_34 = arith.constant 0 : index
    %c0_35 = arith.constant 0 : index
    %c0_36 = arith.constant 0 : index
    %c0_37 = arith.constant 0 : index
    %30 = vector.load %arg5[%c0_34, %c0_35, %c0_36, %c0_37] : memref<3x3x8x8xf32, #tpu.memory_space<vmem>>, vector<1x1x8x8xf32>
    %31 = vector.shape_cast %30 : vector<1x1x8x8xf32> to vector<8x8xf32>
    "tpu.trace_start"() <{level = 10 : i32, message = "hwc,cd->hwd"}> : () -> ()
    %cst_38 = arith.constant dense<0.000000e+00> : vector<8x16x8xf32>
    %32 = tpu.matmul %29, %31, %cst_38 {dimension_numbers = #tpu.dot_dimension_numbers<[2], [0], [0, 1], [1], [0, 0, 0, 1, 1, 1], [], []>} : vector<8x16x8xf32>, vector<8x8xf32>, vector<8x16x8xf32> -> vector<8x16x8xf32>
    "tpu.trace_stop"() : () -> ()
    %c0_39 = arith.constant 0 : index
    %c0_40 = arith.constant 0 : index
    %c2_41 = arith.constant 2 : index
    %c0_42 = arith.constant 0 : index
    %33 = vector.load %arg10[%c0_39, %c0_40, %c2_41, %c0_42] : memref<1x12x20x8xf32, #tpu.memory_space<vmem>>, vector<1x8x16x8xf32>
    %34 = vector.shape_cast %33 : vector<1x8x16x8xf32> to vector<8x16x8xf32>
    %c0_43 = arith.constant 0 : index
    %c1 = arith.constant 1 : index
    %c0_44 = arith.constant 0 : index
    %c0_45 = arith.constant 0 : index
    %35 = vector.load %arg5[%c0_43, %c1, %c0_44, %c0_45] : memref<3x3x8x8xf32, #tpu.memory_space<vmem>>, vector<1x1x8x8xf32>
    %36 = vector.shape_cast %35 : vector<1x1x8x8xf32> to vector<8x8xf32>
    "tpu.trace_start"() <{level = 10 : i32, message = "hwc,cd->hwd"}> : () -> ()
    %cst_46 = arith.constant dense<0.000000e+00> : vector<8x16x8xf32>
    %37 = tpu.matmul %34, %36, %cst_46 {dimension_numbers = #tpu.dot_dimension_numbers<[2], [0], [0, 1], [1], [0, 0, 0, 1, 1, 1], [], []>} : vector<8x16x8xf32>, vector<8x8xf32>, vector<8x16x8xf32> -> vector<8x16x8xf32>
    "tpu.trace_stop"() : () -> ()
    %38 = arith.addf %32, %37 : vector<8x16x8xf32>
    %c0_47 = arith.constant 0 : index
    %c0_48 = arith.constant 0 : index
    %c4 = arith.constant 4 : index
    %c0_49 = arith.constant 0 : index
    %39 = vector.load %arg10[%c0_47, %c0_48, %c4, %c0_49] : memref<1x12x20x8xf32, #tpu.memory_space<vmem>>, vector<1x8x16x8xf32>
    %40 = vector.shape_cast %39 : vector<1x8x16x8xf32> to vector<8x16x8xf32>
    %c0_50 = arith.constant 0 : index
    %c2_51 = arith.constant 2 : index
    %c0_52 = arith.constant 0 : index
    %c0_53 = arith.constant 0 : index
    %41 = vector.load %arg5[%c0_50, %c2_51, %c0_52, %c0_53] : memref<3x3x8x8xf32, #tpu.memory_space<vmem>>, vector<1x1x8x8xf32>
    %42 = vector.shape_cast %41 : vector<1x1x8x8xf32> to vector<8x8xf32>
    "tpu.trace_start"() <{level = 10 : i32, message = "hwc,cd->hwd"}> : () -> ()
    %cst_54 = arith.constant dense<0.000000e+00> : vector<8x16x8xf32>
    %43 = tpu.matmul %40, %42, %cst_54 {dimension_numbers = #tpu.dot_dimension_numbers<[2], [0], [0, 1], [1], [0, 0, 0, 1, 1, 1], [], []>} : vector<8x16x8xf32>, vector<8x8xf32>, vector<8x16x8xf32> -> vector<8x16x8xf32>
    "tpu.trace_stop"() : () -> ()
    %44 = arith.addf %38, %43 : vector<8x16x8xf32>
    %c0_55 = arith.constant 0 : index
    %c2_56 = arith.constant 2 : index
    %c0_57 = arith.constant 0 : index
    %c0_58 = arith.constant 0 : index
    %45 = vector.load %arg10[%c0_55, %c2_56, %c0_57, %c0_58] : memref<1x12x20x8xf32, #tpu.memory_space<vmem>>, vector<1x8x16x8xf32>
    %46 = vector.shape_cast %45 : vector<1x8x16x8xf32> to vector<8x16x8xf32>
    %c1_59 = arith.constant 1 : index
    %c0_60 = arith.constant 0 : index
    %c0_61 = arith.constant 0 : index
    %c0_62 = arith.constant 0 : index
    %47 = vector.load %arg5[%c1_59, %c0_60, %c0_61, %c0_62] : memref<3x3x8x8xf32, #tpu.memory_space<vmem>>, vector<1x1x8x8xf32>
    %48 = vector.shape_cast %47 : vector<1x1x8x8xf32> to vector<8x8xf32>
    "tpu.trace_start"() <{level = 10 : i32, message = "hwc,cd->hwd"}> : () -> ()
    %cst_63 = arith.constant dense<0.000000e+00> : vector<8x16x8xf32>
    %49 = tpu.matmul %46, %48, %cst_63 {dimension_numbers = #tpu.dot_dimension_numbers<[2], [0], [0, 1], [1], [0, 0, 0, 1, 1, 1], [], []>} : vector<8x16x8xf32>, vector<8x8xf32>, vector<8x16x8xf32> -> vector<8x16x8xf32>
    "tpu.trace_stop"() : () -> ()
    %50 = arith.addf %44, %49 : vector<8x16x8xf32>
    %c0_64 = arith.constant 0 : index
    %c2_65 = arith.constant 2 : index
    %c2_66 = arith.constant 2 : index
    %c0_67 = arith.constant 0 : index
    %51 = vector.load %arg10[%c0_64, %c2_65, %c2_66, %c0_67] : memref<1x12x20x8xf32, #tpu.memory_space<vmem>>, vector<1x8x16x8xf32>
    %52 = vector.shape_cast %51 : vector<1x8x16x8xf32> to vector<8x16x8xf32>
    %c1_68 = arith.constant 1 : index
    %c1_69 = arith.constant 1 : index
    %c0_70 = arith.constant 0 : index
    %c0_71 = arith.constant 0 : index
    %53 = vector.load %arg5[%c1_68, %c1_69, %c0_70, %c0_71] : memref<3x3x8x8xf32, #tpu.memory_space<vmem>>, vector<1x1x8x8xf32>
    %54 = vector.shape_cast %53 : vector<1x1x8x8xf32> to vector<8x8xf32>
    "tpu.trace_start"() <{level = 10 : i32, message = "hwc,cd->hwd"}> : () -> ()
    %cst_72 = arith.constant dense<0.000000e+00> : vector<8x16x8xf32>
    %55 = tpu.matmul %52, %54, %cst_72 {dimension_numbers = #tpu.dot_dimension_numbers<[2], [0], [0, 1], [1], [0, 0, 0, 1, 1, 1], [], []>} : vector<8x16x8xf32>, vector<8x8xf32>, vector<8x16x8xf32> -> vector<8x16x8xf32>
    "tpu.trace_stop"() : () -> ()
    %56 = arith.addf %50, %55 : vector<8x16x8xf32>
    %c0_73 = arith.constant 0 : index
    %c2_74 = arith.constant 2 : index
    %c4_75 = arith.constant 4 : index
    %c0_76 = arith.constant 0 : index
    %57 = vector.load %arg10[%c0_73, %c2_74, %c4_75, %c0_76] : memref<1x12x20x8xf32, #tpu.memory_space<vmem>>, vector<1x8x16x8xf32>
    %58 = vector.shape_cast %57 : vector<1x8x16x8xf32> to vector<8x16x8xf32>
    %c1_77 = arith.constant 1 : index
    %c2_78 = arith.constant 2 : index
    %c0_79 = arith.constant 0 : index
    %c0_80 = arith.constant 0 : index
    %59 = vector.load %arg5[%c1_77, %c2_78, %c0_79, %c0_80] : memref<3x3x8x8xf32, #tpu.memory_space<vmem>>, vector<1x1x8x8xf32>
    %60 = vector.shape_cast %59 : vector<1x1x8x8xf32> to vector<8x8xf32>
    "tpu.trace_start"() <{level = 10 : i32, message = "hwc,cd->hwd"}> : () -> ()
    %cst_81 = arith.constant dense<0.000000e+00> : vector<8x16x8xf32>
    %61 = tpu.matmul %58, %60, %cst_81 {dimension_numbers = #tpu.dot_dimension_numbers<[2], [0], [0, 1], [1], [0, 0, 0, 1, 1, 1], [], []>} : vector<8x16x8xf32>, vector<8x8xf32>, vector<8x16x8xf32> -> vector<8x16x8xf32>
    "tpu.trace_stop"() : () -> ()
    %62 = arith.addf %56, %61 : vector<8x16x8xf32>
    %c0_82 = arith.constant 0 : index
    %c4_83 = arith.constant 4 : index
    %c0_84 = arith.constant 0 : index
    %c0_85 = arith.constant 0 : index
    %63 = vector.load %arg10[%c0_82, %c4_83, %c0_84, %c0_85] : memref<1x12x20x8xf32, #tpu.memory_space<vmem>>, vector<1x8x16x8xf32>
    %64 = vector.shape_cast %63 : vector<1x8x16x8xf32> to vector<8x16x8xf32>
    %c2_86 = arith.constant 2 : index
    %c0_87 = arith.constant 0 : index
    %c0_88 = arith.constant 0 : index
    %c0_89 = arith.constant 0 : index
    %65 = vector.load %arg5[%c2_86, %c0_87, %c0_88, %c0_89] : memref<3x3x8x8xf32, #tpu.memory_space<vmem>>, vector<1x1x8x8xf32>
    %66 = vector.shape_cast %65 : vector<1x1x8x8xf32> to vector<8x8xf32>
    "tpu.trace_start"() <{level = 10 : i32, message = "hwc,cd->hwd"}> : () -> ()
    %cst_90 = arith.constant dense<0.000000e+00> : vector<8x16x8xf32>
    %67 = tpu.matmul %64, %66, %cst_90 {dimension_numbers = #tpu.dot_dimension_numbers<[2], [0], [0, 1], [1], [0, 0, 0, 1, 1, 1], [], []>} : vector<8x16x8xf32>, vector<8x8xf32>, vector<8x16x8xf32> -> vector<8x16x8xf32>
    "tpu.trace_stop"() : () -> ()
    %68 = arith.addf %62, %67 : vector<8x16x8xf32>
    %c0_91 = arith.constant 0 : index
    %c4_92 = arith.constant 4 : index
    %c2_93 = arith.constant 2 : index
    %c0_94 = arith.constant 0 : index
    %69 = vector.load %arg10[%c0_91, %c4_92, %c2_93, %c0_94] : memref<1x12x20x8xf32, #tpu.memory_space<vmem>>, vector<1x8x16x8xf32>
    %70 = vector.shape_cast %69 : vector<1x8x16x8xf32> to vector<8x16x8xf32>
    %c2_95 = arith.constant 2 : index
    %c1_96 = arith.constant 1 : index
    %c0_97 = arith.constant 0 : index
    %c0_98 = arith.constant 0 : index
    %71 = vector.load %arg5[%c2_95, %c1_96, %c0_97, %c0_98] : memref<3x3x8x8xf32, #tpu.memory_space<vmem>>, vector<1x1x8x8xf32>
    %72 = vector.shape_cast %71 : vector<1x1x8x8xf32> to vector<8x8xf32>
    "tpu.trace_start"() <{level = 10 : i32, message = "hwc,cd->hwd"}> : () -> ()
    %cst_99 = arith.constant dense<0.000000e+00> : vector<8x16x8xf32>
    %73 = tpu.matmul %70, %72, %cst_99 {dimension_numbers = #tpu.dot_dimension_numbers<[2], [0], [0, 1], [1], [0, 0, 0, 1, 1, 1], [], []>} : vector<8x16x8xf32>, vector<8x8xf32>, vector<8x16x8xf32> -> vector<8x16x8xf32>
    "tpu.trace_stop"() : () -> ()
    %74 = arith.addf %68, %73 : vector<8x16x8xf32>
    %c0_100 = arith.constant 0 : index
    %c4_101 = arith.constant 4 : index
    %c4_102 = arith.constant 4 : index
    %c0_103 = arith.constant 0 : index
    %75 = vector.load %arg10[%c0_100, %c4_101, %c4_102, %c0_103] : memref<1x12x20x8xf32, #tpu.memory_space<vmem>>, vector<1x8x16x8xf32>
    %76 = vector.shape_cast %75 : vector<1x8x16x8xf32> to vector<8x16x8xf32>
    %c2_104 = arith.constant 2 : index
    %c2_105 = arith.constant 2 : index
    %c0_106 = arith.constant 0 : index
    %c0_107 = arith.constant 0 : index
    %77 = vector.load %arg5[%c2_104, %c2_105, %c0_106, %c0_107] : memref<3x3x8x8xf32, #tpu.memory_space<vmem>>, vector<1x1x8x8xf32>
    %78 = vector.shape_cast %77 : vector<1x1x8x8xf32> to vector<8x8xf32>
    "tpu.trace_start"() <{level = 10 : i32, message = "hwc,cd->hwd"}> : () -> ()
    %cst_108 = arith.constant dense<0.000000e+00> : vector<8x16x8xf32>
    %79 = tpu.matmul %76, %78, %cst_108 {dimension_numbers = #tpu.dot_dimension_numbers<[2], [0], [0, 1], [1], [0, 0, 0, 1, 1, 1], [], []>} : vector<8x16x8xf32>, vector<8x8xf32>, vector<8x16x8xf32> -> vector<8x16x8xf32>
    "tpu.trace_stop"() : () -> ()
    %80 = arith.addf %74, %79 : vector<8x16x8xf32>
    %c0_109 = arith.constant 0 : index
    %c0_110 = arith.constant 0 : index
    %81 = vector.load %arg6[%c0_109, %c0_110] : memref<1x8xf32, #tpu.memory_space<vmem>>, vector<1x8xf32>
    %82 = vector.shape_cast %81 : vector<1x8xf32> to vector<1x1x8xf32>
    %83 = vector.broadcast %82 : vector<1x1x8xf32> to vector<8x16x8xf32>
    %84 = arith.addf %80, %83 : vector<8x16x8xf32>
    %cst_111 = arith.constant 0.000000e+00 : f32
    %85 = vector.broadcast %cst_111 : f32 to vector<8x16x8xf32>
    %86 = arith.cmpf ogt, %84, %85 : vector<8x16x8xf32>
    %87 = math.exp %84 : vector<8x16x8xf32>
    %cst_112 = arith.constant 1.000000e+00 : f32
    %88 = vector.broadcast %cst_112 : f32 to vector<8x16x8xf32>
    %89 = arith.subf %87, %88 : vector<8x16x8xf32>
    %cst_113 = arith.constant 1.67326319 : f32
    %90 = vector.broadcast %cst_113 : f32 to vector<8x16x8xf32>
    %91 = arith.mulf %90, %89 : vector<8x16x8xf32>
    %92 = arith.select %86, %84, %91 : vector<8x16x8xi1>, vector<8x16x8xf32>
    %cst_114 = arith.constant 1.05070102 : f32
    %93 = vector.broadcast %cst_114 : f32 to vector<8x16x8xf32>
    %94 = arith.mulf %93, %92 : vector<8x16x8xf32>
    %c0_115 = arith.constant 0 : index
    %c0_116 = arith.constant 0 : index
    %95 = vector.load %arg7[%c0_115, %c0_116] : memref<1x8xf32, #tpu.memory_space<vmem>>, vector<1x8xf32>
    %96 = vector.shape_cast %95 : vector<1x8xf32> to vector<1x1x8xf32>
    %97 = vector.broadcast %96 : vector<1x1x8xf32> to vector<8x16x8xf32>
    %98 = arith.mulf %94, %97 : vector<8x16x8xf32>
    %c0_117 = arith.constant 0 : index
    %c0_118 = arith.constant 0 : index
    %99 = vector.load %arg8[%c0_117, %c0_118] : memref<1x8xf32, #tpu.memory_space<vmem>>, vector<1x8xf32>
    %100 = vector.shape_cast %99 : vector<1x8xf32> to vector<1x1x8xf32>
    %101 = vector.broadcast %100 : vector<1x1x8xf32> to vector<8x16x8xf32>
    %102 = arith.addf %98, %101 : vector<8x16x8xf32>
    %c0_119 = arith.constant 0 : index
    %c0_120 = arith.constant 0 : index
    %c0_121 = arith.constant 0 : index
    %c0_122 = arith.constant 0 : index
    %103 = vector.load %arg9[%c0_119, %c0_120, %c0_121, %c0_122] : memref<1x8x16x8xf32, #tpu.memory_space<vmem>>, vector<1x8x16x8xf32>
    %104 = vector.shape_cast %103 : vector<1x8x16x8xf32> to vector<8x16x8xf32>
    %105 = vector.shape_cast %102 : vector<8x16x8xf32> to vector<1x8x16x8xf32>
    tpu.vector_store %arg9[%c0_119, %c0_120, %c0_121, %c0_122], %105 {strides = array<i32>} : memref<1x8x16x8xf32, #tpu.memory_space<vmem>>, vector<1x8x16x8xf32>,
    return
  }
  func.func @transform_0(%arg0: i32, %arg1: i32) -> (i32, i32, i32, i32) {
    %c0_i32 = arith.constant 0 : i32
    %c0_i32_0 = arith.constant 0 : i32
    %c0_i32_1 = arith.constant 0 : i32
    return %arg0, %arg1, %c0_i32, %c0_i32_0 : i32, i32, i32, i32
  }
  func.func @transform_1(%arg0: i32, %arg1: i32) -> (i32, i32, i32, i32) {
    %c4_i32 = arith.constant 4 : i32
    %0 = arith.muli %arg1, %c4_i32 : i32
    %c1_i32 = arith.constant 1 : i32
    %1 = arith.subi %0, %c1_i32 : i32
    %c0_i32 = arith.constant 0 : i32
    %2 = arith.maxsi %1, %c0_i32 : i32
    %c0_i32_0 = arith.constant 0 : i32
    %c0_i32_1 = arith.constant 0 : i32
    %c0_i32_2 = arith.constant 0 : i32
    return %arg0, %2, %c0_i32_0, %c0_i32_1 : i32, i32, i32, i32
  }
  func.func @transform_2(%arg0: i32, %arg1: i32) -> (i32, i32, i32, i32) {
    %c4_i32 = arith.constant 4 : i32
    %0 = arith.muli %arg1, %c4_i32 : i32
    %c4_i32_0 = arith.constant 4 : i32
    %1 = arith.addi %0, %c4_i32_0 : i32
    %c7_i32 = arith.constant 7 : i32
    %2 = arith.minsi %1, %c7_i32 : i32
    %c0_i32 = arith.constant 0 : i32
    %c0_i32_1 = arith.constant 0 : i32
    %c0_i32_2 = arith.constant 0 : i32
    return %arg0, %2, %c0_i32, %c0_i32_1 : i32, i32, i32, i32
  }
  func.func @transform_3(%arg0: i32, %arg1: i32) -> (i32, i32, i32, i32) {
    %c0_i32 = arith.constant 0 : i32
    %c0_i32_0 = arith.constant 0 : i32
    %c0_i32_1 = arith.constant 0 : i32
    %c0_i32_2 = arith.constant 0 : i32
    %c0_i32_3 = arith.constant 0 : i32
    return %c0_i32, %c0_i32_0, %c0_i32_1, %c0_i32_2 : i32, i32, i32, i32
  }
  func.func @transform_4(%arg0: i32, %arg1: i32) -> (i32, i32) {
    %c0_i32 = arith.constant 0 : i32
    %c0_i32_0 = arith.constant 0 : i32
    %c0_i32_1 = arith.constant 0 : i32
    return %c0_i32, %c0_i32_0 : i32, i32
  }
  func.func @transform_5(%arg0: i32, %arg1: i32) -> (i32, i32) {
    %c0_i32 = arith.constant 0 : i32
    %c0_i32_0 = arith.constant 0 : i32
    %c0_i32_1 = arith.constant 0 : i32
    return %c0_i32, %c0_i32_0 : i32, i32
  }
  func.func @transform_6(%arg0: i32, %arg1: i32) -> (i32, i32) {
    %c0_i32 = arith.constant 0 : i32
    %c0_i32_0 = arith.constant 0 : i32
    %c0_i32_1 = arith.constant 0 : i32
    return %c0_i32, %c0_i32_0 : i32, i32
  }
  func.func @transform_7(%arg0: i32, %arg1: i32) -> (i32, i32, i32, i32) {
    %c0_i32 = arith.constant 0 : i32
    %c0_i32_0 = arith.constant 0 : i32
    %c0_i32_1 = arith.constant 0 : i32
    return %arg0, %arg1, %c0_i32, %c0_i32_0 : i32, i32, i32, i32
  }
}

</mosaic_0001>

<llo_original>
// kernel: deconv_block_forward.3
$region0: #{deconv_block_forward.3}
  #allocation0 [shape = 'u32[]', space=smem, size = 0x4, offset = 0x4, fixed_abs, tag = 'smem constant byte address 0x4 - core index']
  #allocation1 [shape = 'u32[144,128]{1,0:T(1,128)}', space=vmem, size = 0x12000, scoped, tag = 'internal scratch']
  %s0 = inlined_call_operand.vmem [shape: f32[2,8,8,8], index: 0, kind: input, shape index: {}]
  %s1 = inlined_call_operand.vmem [shape: f32[2,8,2,8,8], index: 1, kind: input, shape index: {}]
  %s2 = inlined_call_operand.vmem [shape: f32[2,8,16], index: 2, kind: input, shape index: {}]
  %s3 = inlined_call_operand.vmem [shape: f32[1,16], index: 3, kind: input, shape index: {}]
  %s4 = inlined_call_operand.vmem [shape: f32[1,16], index: 4, kind: input, shape index: {}]
  %s5 = inlined_call_operand.vmem [shape: f32[1,16], index: 5, kind: input, shape index: {}]
  %s6 = inlined_call_operand.vmem [shape: f32[8,16], index: 6, kind: input, shape index: {}]
  %s7 = inlined_call_operand.vmem [shape: f32[1,16], index: 7, kind: input, shape index: {}]
  %s8 = inlined_call_operand.vmem [shape: f32[1,16], index: 8, kind: input, shape index: {}]
  %s9 = inlined_call_operand.vmem [shape: f32[1,16], index: 9, kind: input, shape index: {}]
  %s10 = inlined_call_operand.vmem [shape: f32[2,8,2,8,16], index: 10, kind: output, shape index: {}]
  %s11 = sld [smem:[#allocation0]]
  $region73: #{deconv_block_forward.3} parent=0
    _
  %s13 = ssub.s32 1, %s11
  %s14 = scalar_select 0, %s13, %s11
  loop: start=0, step=1, limit=6
  $region2: #{deconv_block_forward.3} parent=0 // loop_pre_header
    _
  $region3: #{deconv_block_forward.3} parent=0 // loop_header
    %s16 = sphi 0, %s20
    %p17 = scmp.ge.s32.totalorder %s16, 6
    %s23 = sphi 0, %s35
    %s24 = sphi 0, %s31
    %s25 = sphi 0, %s23
    %s26 = sphi 0, %s24
    %s27 = sphi 0, %s25
    %s28 = sphi 0, %s26
    %s40 = sphi 0, %s42
    %s43 = sphi 0, %s40
    %s44 = sphi 0, %s43
    %s60 = sphi 0, %s44
    %s68 = sphi 0, %s70
    %s71 = sphi 0, %s68
    %s72 = sphi 0, %s71
    %s88 = sphi 0, %s72
    %s92 = sphi 0, %s92
    %s94 = sphi 0, %s92
    %s95 = sphi 0, %s94
    %s109 = sphi 0, %s95
    %s113 = sphi 0, %s113
    %s115 = sphi 0, %s113
    %s116 = sphi 0, %s115
    %s130 = sphi 0, %s116
    %s134 = sphi 0, %s134
    %s136 = sphi 0, %s134
    %s137 = sphi 0, %s136
    %s151 = sphi 0, %s137
    %s155 = sphi 0, %s155
    %s157 = sphi 0, %s155
    %s158 = sphi 0, %s157
    %s172 = sphi 0, %s158
    %s176 = sphi 0, %s176
    %s178 = sphi 0, %s176
    %s179 = sphi 0, %s178
    %s193 = sphi 0, %s179
    %s197 = sphi 0, %s197
    %s199 = sphi 0, %s197
    %s200 = sphi 0, %s199
    %s214 = sphi 0, %s200
    %s218 = sphi 0, %s218
    %s220 = sphi 0, %s218
    %s221 = sphi 0, %s220
    %s235 = sphi 0, %s221
    %s239 = sphi 0, %s239
    %s241 = sphi 0, %s239
    %s242 = sphi 0, %s241
    %s256 = sphi 0, %s242
    %s264 = sphi 0, %s266
    %s267 = sphi 0, %s264
    %s268 = sphi 0, %s267
    %s284 = sphi 0, %s268
  $region4: #{deconv_block_forward.3} parent=0 // loop_header_branch
    %19 = sbr.rel (%p17) target = $region8
  $region5: #{deconv_block_forward.3} parent=0 // loop_body
    %s21 = ssub.s32 %s16, 1
    %s22 = ssub.s32 %s16, 2
    %s29 = sadd.s32 1, %s24
    %p30 = scmp.ge.s32.totalorder %s29, 2
    %s31 = scalar_select %p30, 0, %s29
    %s32 = sadd.s32 1, %s23
    %s33 = scalar_select %p30, %s32, %s23
    %p34 = scmp.ge.s32.totalorder %s33, 2
    %s35 = scalar_select %p34, 0, %s33
    %s36 = ssub.s32 %s23, %s35
    %s37 = ssub.s32 %s24, %s31
    %s38 = sor.u32 %s36, %s37
    %p39 = scmp.eq.s32.totalorder %s38, 0
    %s41 = sadd.s32 %s40, 1
    %s42 = scalar_select %p39, %s40, %s41
    %p45 = pneg %p39
    %p46 = scmp.eq.s32.totalorder %s16, 3
    %p47 = por %p45, %p46
    %p48 = scmp.ne.s32.totalorder %s40, %s43
    %p49 = scmp.eq.s32.totalorder %s16, 0
    %p50 = por %p48, %p49
    %p51 = scmp.ne.s32.totalorder %s40, %s43
    %p52 = scmp.eq.s32.totalorder %s21, 3
    %p53 = por %p51, %p52
    %p54 = scmp.ne.s32.totalorder %s43, %s44
    %p55 = scmp.eq.s32.totalorder %s21, 0
    %p56 = por %p54, %p55
    %p57 = scmp.ne.s32.totalorder %s43, %s44
    %p58 = scmp.eq.s32.totalorder %s22, 3
    %p59 = por %p57, %p58
    %p61 = scmp.ne.s32.totalorder %s44, %s60
    %p62 = scmp.eq.s32.totalorder %s22, 0
    %p63 = por %p61, %p62
    %s64 = ssub.s32 %s23, %s35
    %s65 = ssub.s32 %s24, %s31
    %s66 = sor.u32 %s64, %s65
    %p67 = scmp.eq.s32.totalorder %s66, 0
    %s69 = sadd.s32 %s68, 1
    %s70 = scalar_select %p67, %s68, %s69
    %p73 = pneg %p67
    %p74 = scmp.eq.s32.totalorder %s16, 3
    %p75 = por %p73, %p74
    %p76 = scmp.ne.s32.totalorder %s68, %s71
    %p77 = scmp.eq.s32.totalorder %s16, 0
    %p78 = por %p76, %p77
    %p79 = scmp.ne.s32.totalorder %s68, %s71
    %p80 = scmp.eq.s32.totalorder %s21, 3
    %p81 = por %p79, %p80
    %p82 = scmp.ne.s32.totalorder %s71, %s72
    %p83 = scmp.eq.s32.totalorder %s21, 0
    %p84 = por %p82, %p83
    %p85 = scmp.ne.s32.totalorder %s71, %s72
    %p86 = scmp.eq.s32.totalorder %s22, 3
    %p87 = por %p85, %p86
    %p89 = scmp.ne.s32.totalorder %s72, %s88
    %p90 = scmp.eq.s32.totalorder %s22, 0
    %p91 = por %p89, %p90
    %s93 = sadd.s32 %s92, 1
    %p96 = scmp.eq.s32.totalorder %s16, 3
    %p97 = scmp.ne.s32.totalorder %s92, %s94
    %p98 = scmp.eq.s32.totalorder %s16, 0
    %p99 = por %p97, %p98
    %p100 = scmp.ne.s32.totalorder %s92, %s94
    %p101 = scmp.eq.s32.totalorder %s21, 3
    %p102 = por %p100, %p101
    %p103 = scmp.ne.s32.totalorder %s94, %s95
    %p104 = scmp.eq.s32.totalorder %s21, 0
    %p105 = por %p103, %p104
    %p106 = scmp.ne.s32.totalorder %s94, %s95
    %p107 = scmp.eq.s32.totalorder %s22, 3
    %p108 = por %p106, %p107
    %p110 = scmp.ne.s32.totalorder %s95, %s109
    %p111 = scmp.eq.s32.totalorder %s22, 0
    %p112 = por %p110, %p111
    %s114 = sadd.s32 %s113, 1
    %p117 = scmp.eq.s32.totalorder %s16, 3
    %p118 = scmp.ne.s32.totalorder %s113, %s115
    %p119 = scmp.eq.s32.totalorder %s16, 0
    %p120 = por %p118, %p119
    %p121 = scmp.ne.s32.totalorder %s113, %s115
    %p122 = scmp.eq.s32.totalorder %s21, 3
    %p123 = por %p121, %p122
    %p124 = scmp.ne.s32.totalorder %s115, %s116
    %p125 = scmp.eq.s32.totalorder %s21, 0
    %p126 = por %p124, %p125
    %p127 = scmp.ne.s32.totalorder %s115, %s116
    %p128 = scmp.eq.s32.totalorder %s22, 3
    %p129 = por %p127, %p128
    %p131 = scmp.ne.s32.totalorder %s116, %s130
    %p132 = scmp.eq.s32.totalorder %s22, 0
    %p133 = por %p131, %p132
    %s135 = sadd.s32 %s134, 1
    %p138 = scmp.eq.s32.totalorder %s16, 3
    %p139 = scmp.ne.s32.totalorder %s134, %s136
    %p140 = scmp.eq.s32.totalorder %s16, 0
    %p141 = por %p139, %p140
    %p142 = scmp.ne.s32.totalorder %s134, %s136
    %p143 = scmp.eq.s32.totalorder %s21, 3
    %p144 = por %p142, %p143
    %p145 = scmp.ne.s32.totalorder %s136, %s137
    %p146 = scmp.eq.s32.totalorder %s21, 0
    %p147 = por %p145, %p146
    %p148 = scmp.ne.s32.totalorder %s136, %s137
    %p149 = scmp.eq.s32.totalorder %s22, 3
    %p150 = por %p148, %p149
    %p152 = scmp.ne.s32.totalorder %s137, %s151
    %p153 = scmp.eq.s32.totalorder %s22, 0
    %p154 = por %p152, %p153
    %s156 = sadd.s32 %s155, 1
    %p159 = scmp.eq.s32.totalorder %s16, 3
    %p160 = scmp.ne.s32.totalorder %s155, %s157
    %p161 = scmp.eq.s32.totalorder %s16, 0
    %p162 = por %p160, %p161
    %p163 = scmp.ne.s32.totalorder %s155, %s157
    %p164 = scmp.eq.s32.totalorder %s21, 3
    %p165 = por %p163, %p164
    %p166 = scmp.ne.s32.totalorder %s157, %s158
    %p167 = scmp.eq.s32.totalorder %s21, 0
    %p168 = por %p166, %p167
    %p169 = scmp.ne.s32.totalorder %s157, %s158
    %p170 = scmp.eq.s32.totalorder %s22, 3
    %p171 = por %p169, %p170
    %p173 = scmp.ne.s32.totalorder %s158, %s172
    %p174 = scmp.eq.s32.totalorder %s22, 0
    %p175 = por %p173, %p174
    %s177 = sadd.s32 %s176, 1
    %p180 = scmp.eq.s32.totalorder %s16, 3
    %p181 = scmp.ne.s32.totalorder %s176, %s178
    %p182 = scmp.eq.s32.totalorder %s16, 0
    %p183 = por %p181, %p182
    %p184 = scmp.ne.s32.totalorder %s176, %s178
    %p185 = scmp.eq.s32.totalorder %s21, 3
    %p186 = por %p184, %p185
    %p187 = scmp.ne.s32.totalorder %s178, %s179
    %p188 = scmp.eq.s32.totalorder %s21, 0
    %p189 = por %p187, %p188
    %p190 = scmp.ne.s32.totalorder %s178, %s179
    %p191 = scmp.eq.s32.totalorder %s22, 3
    %p192 = por %p190, %p191
    %p194 = scmp.ne.s32.totalorder %s179, %s193
    %p195 = scmp.eq.s32.totalorder %s22, 0
    %p196 = por %p194, %p195
    %s198 = sadd.s32 %s197, 1
    %p201 = scmp.eq.s32.totalorder %s16, 3
    %p202 = scmp.ne.s32.totalorder %s197, %s199
    %p203 = scmp.eq.s32.totalorder %s16, 0
    %p204 = por %p202, %p203
    %p205 = scmp.ne.s32.totalorder %s197, %s199
    %p206 = scmp.eq.s32.totalorder %s21, 3
    %p207 = por %p205, %p206
    %p208 = scmp.ne.s32.totalorder %s199, %s200
    %p209 = scmp.eq.s32.totalorder %s21, 0
    %p210 = por %p208, %p209
    %p211 = scmp.ne.s32.totalorder %s199, %s200
    %p212 = scmp.eq.s32.totalorder %s22, 3
    %p213 = por %p211, %p212
    %p215 = scmp.ne.s32.totalorder %s200, %s214
    %p216 = scmp.eq.s32.totalorder %s22, 0
    %p217 = por %p215, %p216
    %s219 = sadd.s32 %s218, 1
    %p222 = scmp.eq.s32.totalorder %s16, 3
    %p223 = scmp.ne.s32.totalorder %s218, %s220
    %p224 = scmp.eq.s32.totalorder %s16, 0
    %p225 = por %p223, %p224
    %p226 = scmp.ne.s32.totalorder %s218, %s220
    %p227 = scmp.eq.s32.totalorder %s21, 3
    %p228 = por %p226, %p227
    %p229 = scmp.ne.s32.totalorder %s220, %s221
    %p230 = scmp.eq.s32.totalorder %s21, 0
    %p231 = por %p229, %p230
    %p232 = scmp.ne.s32.totalorder %s220, %s221
    %p233 = scmp.eq.s32.totalorder %s22, 3
    %p234 = por %p232, %p233
    %p236 = scmp.ne.s32.totalorder %s221, %s235
    %p237 = scmp.eq.s32.totalorder %s22, 0
    %p238 = por %p236, %p237
    %s240 = sadd.s32 %s239, 1
    %p243 = scmp.eq.s32.totalorder %s16, 3
    %p244 = scmp.ne.s32.totalorder %s239, %s241
    %p245 = scmp.eq.s32.totalorder %s16, 0
    %p246 = por %p244, %p245
    %p247 = scmp.ne.s32.totalorder %s239, %s241
    %p248 = scmp.eq.s32.totalorder %s21, 3
    %p249 = por %p247, %p248
    %p250 = scmp.ne.s32.totalorder %s241, %s242
    %p251 = scmp.eq.s32.totalorder %s21, 0
    %p252 = por %p250, %p251
    %p253 = scmp.ne.s32.totalorder %s241, %s242
    %p254 = scmp.eq.s32.totalorder %s22, 3
    %p255 = por %p253, %p254
    %p257 = scmp.ne.s32.totalorder %s242, %s256
    %p258 = scmp.eq.s32.totalorder %s22, 0
    %p259 = por %p257, %p258
    %s260 = ssub.s32 %s23, %s35
    %s261 = ssub.s32 %s24, %s31
    %s262 = sor.u32 %s260, %s261
    %p263 = scmp.eq.s32.totalorder %s262, 0
    %s265 = sadd.s32 %s264, 1
    %s266 = scalar_select %p263, %s264, %s265
    %p269 = pneg %p263
    %p270 = scmp.eq.s32.totalorder %s16, 3
    %p271 = por %p269, %p270
    %p272 = scmp.ne.s32.totalorder %s264, %s267
    %p273 = scmp.eq.s32.totalorder %s16, 0
    %p274 = por %p272, %p273
    %p275 = scmp.ne.s32.totalorder %s264, %s267
    %p276 = scmp.eq.s32.totalorder %s21, 3
    %p277 = por %p275, %p276
    %p278 = scmp.ne.s32.totalorder %s267, %s268
    %p279 = scmp.eq.s32.totalorder %s21, 0
    %p280 = por %p278, %p279
    %p281 = scmp.ne.s32.totalorder %s267, %s268
    %p282 = scmp.eq.s32.totalorder %s22, 3
    %p283 = por %p281, %p282
    %p285 = scmp.ne.s32.totalorder %s268, %s284
    %p286 = scmp.eq.s32.totalorder %s22, 0
    %p287 = por %p285, %p286
    %p288 = scmp.le.s32.totalorder 1, %s16
    %p289 = scmp.lt.s32.totalorder %s16, 5
    %p290 = pnand %p288, %p289
    %p291 = pneg %p290
    // Predicated region
    $region9: #{deconv_block_forward.3} parent=5 // pred_check
      _
    $region10: #{deconv_block_forward.3} parent=5 // pred_check_branch
      %293 = sbr.rel (%p290) target = $region12
    $region11: #{deconv_block_forward.3} parent=5 // pred_region
      %s294 = ssub.s32 %s16, 1
      // Predicated region
      $region13: #{deconv_block_forward.3} parent=11 // pred_check
        %p295 = pneg %p105
      $region14: #{deconv_block_forward.3} parent=11 // pred_check_branch
        %297 = sbr.rel (%p295) target = $region16
      $region15: #{deconv_block_forward.3} parent=11 // pred_region
        _
      $region16: #{deconv_block_forward.3} parent=11 // pred_fallthru
        _
      // Predicated region
      $region17: #{deconv_block_forward.3} parent=11 // pred_check
        %p298 = pneg %p126
      $region18: #{deconv_block_forward.3} parent=11 // pred_check_branch
        %300 = sbr.rel (%p298) target = $region20
      $region19: #{deconv_block_forward.3} parent=11 // pred_region
        _
      $region20: #{deconv_block_forward.3} parent=11 // pred_fallthru
        _
      // Predicated region
      $region21: #{deconv_block_forward.3} parent=11 // pred_check
        %p301 = pneg %p147
      $region22: #{deconv_block_forward.3} parent=11 // pred_check_branch
        %303 = sbr.rel (%p301) target = $region24
      $region23: #{deconv_block_forward.3} parent=11 // pred_region
        _
      $region24: #{deconv_block_forward.3} parent=11 // pred_fallthru
        _
      // Predicated region
      $region25: #{deconv_block_forward.3} parent=11 // pred_check
        %p304 = pneg %p168
      $region26: #{deconv_block_forward.3} parent=11 // pred_check_branch
        %306 = sbr.rel (%p304) target = $region28
      $region27: #{deconv_block_forward.3} parent=11 // pred_region
        _
      $region28: #{deconv_block_forward.3} parent=11 // pred_fallthru
        _
      // Predicated region
      $region29: #{deconv_block_forward.3} parent=11 // pred_check
        %p307 = pneg %p189
      $region30: #{deconv_block_forward.3} parent=11 // pred_check_branch
        %309 = sbr.rel (%p307) target = $region32
      $region31: #{deconv_block_forward.3} parent=11 // pred_region
        _
      $region32: #{deconv_block_forward.3} parent=11 // pred_fallthru
        _
      // Predicated region
      $region33: #{deconv_block_forward.3} parent=11 // pred_check
        %p310 = pneg %p210
      $region34: #{deconv_block_forward.3} parent=11 // pred_check_branch
        %312 = sbr.rel (%p310) target = $region36
      $region35: #{deconv_block_forward.3} parent=11 // pred_region
        _
      $region36: #{deconv_block_forward.3} parent=11 // pred_fallthru
        _
      // Predicated region
      $region37: #{deconv_block_forward.3} parent=11 // pred_check
        %p313 = pneg %p231
      $region38: #{deconv_block_forward.3} parent=11 // pred_check_branch
        %315 = sbr.rel (%p313) target = $region40
      $region39: #{deconv_block_forward.3} parent=11 // pred_region
        _
      $region40: #{deconv_block_forward.3} parent=11 // pred_fallthru
        _
      // Predicated region
      $region41: #{deconv_block_forward.3} parent=11 // pred_check
        %p316 = pneg %p252
      $region42: #{deconv_block_forward.3} parent=11 // pred_check_branch
        %318 = sbr.rel (%p316) target = $region44
      $region43: #{deconv_block_forward.3} parent=11 // pred_region
        _
      $region44: #{deconv_block_forward.3} parent=11 // pred_fallthru
        _
    $region12: #{deconv_block_forward.3} parent=5 // pred_fallthru
      _
    %p319 = scmp.lt.s32.totalorder %s16, 4
    // Predicated region
    $region45: #{deconv_block_forward.3} parent=5 // pred_check
      %p320 = pneg %p319
    $region46: #{deconv_block_forward.3} parent=5 // pred_check_branch
      %322 = sbr.rel (%p320) target = $region48
    $region47: #{deconv_block_forward.3} parent=5 // pred_region
      // Predicated region
      $region49: #{deconv_block_forward.3} parent=47 // pred_check
        %p323 = pneg %p50
      $region50: #{deconv_block_forward.3} parent=47 // pred_check_branch
        %325 = sbr.rel (%p323) target = $region52
      $region51: #{deconv_block_forward.3} parent=47 // pred_region
        %s326 = smul.u32 4, %s24
        %p327 = scmp.lt.s32.totalorder %s23, 1
        %s328 = scalar_select %p327, %s23, 1
        %p329 = scmp.lt.s32.totalorder %s326, 7
        %s330 = scalar_select %p329, %s326, 7
        %s331 = smul.addr %s328, 8
        %s332 = sadd.s32 %s330, %s331
        %s333 = smul.addr %s332, 8
        %s334 = scalar_lea.vmem %s0, %s333
        %s335 = smul.u32 4, %s24
      $region52: #{deconv_block_forward.3} parent=47 // pred_fallthru
        _
      // Predicated region
      $region53: #{deconv_block_forward.3} parent=47 // pred_check
        %p336 = pneg %p78
      $region54: #{deconv_block_forward.3} parent=47 // pred_check_branch
        %338 = sbr.rel (%p336) target = $region56
      $region55: #{deconv_block_forward.3} parent=47 // pred_region
        %s339 = smul.u32 4, %s24
        %p340 = scmp.lt.s32.totalorder %s23, 1
        %s341 = scalar_select %p340, %s23, 1
        %p342 = scmp.lt.s32.totalorder %s339, 7
        %s343 = scalar_select %p342, %s339, 7
        %s344 = smul.addr %s343, 2
        %s345 = smul.addr %s341, 16
        %s346 = sadd.s32 %s344, %s345
        %s347 = smul.addr %s346, 8
        %s348 = scalar_lea.vmem %s1, %s347
        %s349 = smul.u32 4, %s24
      $region56: #{deconv_block_forward.3} parent=47 // pred_fallthru
        _
    $region48: #{deconv_block_forward.3} parent=5 // pred_fallthru
      _
    %p350 = scmp.le.s32.totalorder 1, %s16
    %p351 = scmp.lt.s32.totalorder %s16, 5
    %p352 = pnand %p350, %p351
    %p353 = pneg %p352
    // Predicated region
    $region57: #{deconv_block_forward.3} parent=5 // pred_check
      _
    $region58: #{deconv_block_forward.3} parent=5 // pred_check_branch
      %355 = sbr.rel (%p352) target = $region60
    $region59: #{deconv_block_forward.3} parent=5 // pred_region
      %s356 = ssub.s32 %s16, 1
      %s357 = smul.u32 4, %s26
      %p358 = scmp.lt.s32.totalorder %s25, 1
      %s359 = scalar_select %p358, %s25, 1
      %p360 = scmp.lt.s32.totalorder %s357, 7
      %s361 = scalar_select %p360, %s357, 7
      %s362 = smul.addr %s359, 8
      %s363 = sadd.s32 %s361, %s362
      %s364 = smul.addr %s363, 8
      %s365 = scalar_lea.vmem %s0, %s364
      %p366 = pneg %p56
      %p367 = pneg %p53
      %s368 = smul.u32 4, %s26
      %p369 = scmp.lt.s32.totalorder %s25, 1
      %s370 = scalar_select %p369, %s25, 1
      %p371 = scmp.lt.s32.totalorder %s368, 7
      %s372 = scalar_select %p371, %s368, 7
      %s373 = smul.addr %s372, 2
      %s374 = smul.addr %s370, 16
      %s375 = sadd.s32 %s373, %s374
      %s376 = smul.addr %s375, 8
      %s377 = scalar_lea.vmem %s1, %s376
      %p378 = pneg %p84
      %p379 = pneg %p81
      %p380 = pneg %p105
      %p381 = pneg %p102
      %p382 = pneg %p126
      %p383 = pneg %p123
      %p384 = pneg %p147
      %p385 = pneg %p144
      %p386 = pneg %p168
      %p387 = pneg %p165
      %p388 = pneg %p189
      %p389 = pneg %p186
      %p390 = pneg %p210
      %p391 = pneg %p207
      %p392 = pneg %p231
      %p393 = pneg %p228
      %p394 = pneg %p252
      %p395 = pneg %p249
      %p396 = pneg %p280
      %p397 = pneg %p277
      %s398 = smul.u32 4, %s26
      %p399 = scmp.lt.s32.totalorder %s25, 1
      %s400 = scalar_select %p399, %s25, 1
      %p401 = scmp.lt.s32.totalorder %s398, 7
      %s402 = scalar_select %p401, %s398, 7
      %s403 = smul.addr %s402, 2
      %s404 = smul.addr %s400, 16
      %s405 = sadd.s32 %s403, %s404
      %s406 = smul.addr %s405, 8
      %s407 = scalar_lea.vmem %s10, %s406
      %s408 = smul.u32 4, %s26
      %p409 = scmp.lt.s32.totalorder %s25, 1
      %s410 = scalar_select %p409, %s25, 1
      %p411 = scmp.lt.s32.totalorder %s408, 7
      %s412 = scalar_select %p411, %s408, 7
      %s413 = smul.addr %s410, 8
      %s414 = sadd.s32 %s412, %s413
      %s415 = smul.addr %s414, 8
      %s416 = scalar_lea.vmem %s0, %s415
      %s417 = smul.u32 4, %s26
      %s418 = smul.u32 4, %s26
      %p419 = scmp.lt.s32.totalorder %s25, 1
      %s420 = scalar_select %p419, %s25, 1
      %p421 = scmp.lt.s32.totalorder %s418, 7
      %s422 = scalar_select %p421, %s418, 7
      %s423 = smul.addr %s422, 2
      %s424 = smul.addr %s420, 16
      %s425 = sadd.s32 %s423, %s424
      %s426 = smul.addr %s425, 8
      %s427 = scalar_lea.vmem %s1, %s426
      %s428 = smul.u32 4, %s26
      %s429 = smul.u32 4, %s26
      %p430 = scmp.lt.s32.totalorder %s25, 1
      %s431 = scalar_select %p430, %s25, 1
      %p432 = scmp.lt.s32.totalorder %s429, 7
      %s433 = scalar_select %p432, %s429, 7
      %s434 = smul.addr %s433, 2
      %s435 = smul.addr %s431, 16
      %s436 = sadd.s32 %s434, %s435
      %s437 = smul.addr %s436, 8
      %s438 = scalar_lea.vmem %s10, %s437
      %s439 = smul.u32 4, %s26
      %v440 = vld [vmem:[%s416] sm:$0xff]
      %v441 = vld [vmem:[%s416 + $0x8] sm:$0xff]
      %v442 = vld [vmem:[%s416 + $0x10] sm:$0xff]
      %v443 = vld [vmem:[%s416 + $0x18] sm:$0xff]
      %v444 = vld [vmem:[%s6] sm:$0xff]
      %v445 = vld [vmem:[%s3] sm:$0x1]
      %v446 = vld [vmem:[%s4] sm:$0x1]
      %v447 = vld [vmem:[%s5] sm:$0x1]
      %v448 = vld [vmem:[%s7] sm:$0x1]
      %v449 = vld [vmem:[%s8] sm:$0x1]
      %v450 = vld [vmem:[%s9] sm:$0x1]
      %v451 = vld [vmem:[%s2] sm:$0xff]
      %v453 = vlaneseq
      %v454 = vshrl.u32 %v453, 7
      %v455 = vsub.s32 0, %v454
      %v456 = vrot.slane %v445, %v455
      %vm458 = vcmask 64512
      %v460 = vsel %vm458, %v440, 0
      %v463 = vsel %vm458, %v441, 0
      %v466 = vsel %vm458, %v442, 0
      %v469 = vsel %vm458, %v443, 0
      %471 = vmatprep.subr.mxu0 0.0
      %472 = vmatpush1.msra.mxu0 %v451
      %473 = vmatprep.subr.mxu0 0.0
      %474 = vmatpush1.msra.mxu0 0.0
      %475 = vmatprep.subr.mxu0 0.0
      %476 = vmatpush1.msra.mxu0 0.0
      %477 = vmatprep.subr.mxu0 0.0
      %478 = vmatpush1.msra.mxu0 0.0
      %479 = vmatprep.subr.mxu0 0.0
      %480 = vmatpush1.msra.mxu0 0.0
      %481 = vmatprep.subr.mxu0 0.0
      %482 = vmatpush1.msra.mxu0 0.0
      %483 = vmatprep.subr.mxu0 0.0
      %484 = vmatpush1.msra.mxu0 0.0
      %485 = vmatprep.subr.mxu0 0.0
      %486 = vmatpush1.msra.mxu0 0.0
      %487 = vmatprep.subr.mxu0 0.0
      %488 = vmatpush1.msra.mxu0 0.0
      %489 = vmatprep.subr.mxu0 0.0
      %490 = vmatpush1.msra.mxu0 0.0
      %491 = vmatprep.subr.mxu0 0.0
      %492 = vmatpush1.msra.mxu0 0.0
      %493 = vmatprep.subr.mxu0 0.0
      %494 = vmatpush1.msra.mxu0 0.0
      %495 = vmatprep.subr.mxu0 0.0
      %496 = vmatpush1.msra.mxu0 0.0
      %497 = vmatprep.subr.mxu0 0.0
      %498 = vmatpush1.msra.mxu0 0.0
      %499 = vmatprep.subr.mxu0 0.0
      %500 = vmatpush1.msra.mxu0 0.0
      %501 = vmatprep.subr.mxu0 0.0
      %502 = vmatpush1.msra.mxu0 0.0
      %503 = vmatprep.subr.mxu0 0.0
      %504 = vmatpush1.msra.mxu0 0.0
      %505 = vmatprep.subr.mxu0 0.0
      %506 = vmatpush1.msra.mxu0 0.0
      %507 = vmatprep.subr.mxu0 0.0
      %508 = vmatpush1.msra.mxu0 0.0
      %509 = vmatprep.subr.mxu0 0.0
      %510 = vmatpush1.msra.mxu0 0.0
      %511 = vmatprep.subr.mxu0 0.0
      %512 = vmatpush1.msra.mxu0 0.0
      %513 = vmatprep.subr.mxu0 0.0
      %514 = vmatpush1.msra.mxu0 0.0
      %515 = vmatprep.subr.mxu0 0.0
      %516 = vmatpush1.msra.mxu0 0.0
      %517 = vmatprep.subr.mxu0 0.0
      %518 = vmatpush1.msra.mxu0 0.0
      %519 = vmatprep.subr.mxu0 0.0
      %520 = vmatpush1.msra.mxu0 0.0
      %521 = vmatprep.subr.mxu0 0.0
      %522 = vmatpush1.msra.mxu0 0.0
      %523 = vmatprep.subr.mxu0 0.0
      %524 = vmatpush1.msra.mxu0 0.0
      %525 = vmatprep.subr.mxu0 0.0
      %526 = vmatpush1.msra.mxu0 0.0
      %527 = vmatprep.subr.mxu0 0.0
      %528 = vmatpush1.msra.mxu0 0.0
      %529 = vmatprep.subr.mxu0 0.0
      %530 = vmatpush1.msra.mxu0 0.0
      %531 = vmatprep.subr.mxu0 0.0
      %532 = vmatpush1.msra.mxu0 0.0
      %533 = vmatprep.subr.mxu0 0.0
      %534 = vmatpush1.msra.mxu0 0.0
      %535 = vmatprep.mubr.f32.mxu0 0.0
      %536 = vmatmul.mubr.f32.gmra.mrb[0].mxu0 %v460
      %v537 = vpop.f32.mrb[0].mxu0
      %v538 = vadd.f32 %v456, %v537
      %v539 = vpop.f32.mrb[0].mxu0
      %540 = vmatprep.mubr.f32.mxu0 0.0
      %541 = vmatmul.mubr.f32.gmra.mrb[0].mxu0 %v463
      %v542 = vpop.f32.mrb[0].mxu0
      %v543 = vadd.f32 %v456, %v542
      %v544 = vpop.f32.mrb[0].mxu0
      %545 = vmatprep.mubr.f32.mxu0 0.0
      %546 = vmatmul.mubr.f32.gmra.mrb[0].mxu0 %v466
      %v547 = vpop.f32.mrb[0].mxu0
      %v548 = vadd.f32 %v456, %v547
      %v549 = vpop.f32.mrb[0].mxu0
      %550 = vmatprep.mubr.f32.mxu0 0.0
      %551 = vmatmul.mubr.f32.gmra.mrb[0].mxu0 %v469
      %v552 = vpop.f32.mrb[0].mxu0
      %v553 = vadd.f32 %v456, %v552
      %v554 = vpop.f32.mrb[0].mxu0
      %555 = vdwg.mxu0
      %vm556 = vcmp.gt.f32.partialorder %v538, 0.0
      %vm557 = vcmp.gt.f32.partialorder %v543, 0.0
      %vm558 = vcmp.gt.f32.partialorder %v548, 0.0
      %vm559 = vcmp.gt.f32.partialorder %v553, 0.0
      %v560 = vmul.f32 %v538, 1.442695
      %v561 = vpow.pop %v560
      %v562 = vmul.f32 %v543, 1.442695
      %v563 = vpow.pop %v562
      %v564 = vmul.f32 %v548, 1.442695
      %v565 = vpow.pop %v564
      %v566 = vmul.f32 %v553, 1.442695
      %v567 = vpow.pop %v566
      %v568 = vsub.f32 %v561, 1.0
      %v569 = vsub.f32 %v563, 1.0
      %v570 = vsub.f32 %v565, 1.0
      %v571 = vsub.f32 %v567, 1.0
      %v572 = vmul.f32 %v568, 1.6732632
      %v573 = vmul.f32 %v569, 1.6732632
      %v574 = vmul.f32 %v570, 1.6732632
      %v575 = vmul.f32 %v571, 1.6732632
      %v576 = vsel %vm556, %v538, %v572
      %v577 = vsel %vm557, %v543, %v573
      %v578 = vsel %vm558, %v548, %v574
      %v579 = vsel %vm559, %v553, %v575
      %v580 = vmul.f32 %v576, 1.050701
      %v581 = vmul.f32 %v577, 1.050701
      %v582 = vmul.f32 %v578, 1.050701
      %v583 = vmul.f32 %v579, 1.050701
      %v585 = vlaneseq
      %v586 = vshrl.u32 %v585, 7
      %v587 = vsub.s32 0, %v586
      %v588 = vrot.slane %v446, %v587
      %v590 = vmul.f32 %v580, %v588
      %v591 = vmul.f32 %v581, %v588
      %v592 = vmul.f32 %v582, %v588
      %v593 = vmul.f32 %v583, %v588
      %v595 = vlaneseq
      %v596 = vshrl.u32 %v595, 7
      %v597 = vsub.s32 0, %v596
      %v598 = vrot.slane %v447, %v597
      %v600 = vadd.f32 %v590, %v598
      %v601 = vadd.f32 %v591, %v598
      %v602 = vadd.f32 %v592, %v598
      %v603 = vadd.f32 %v593, %v598
      %v604 = vld [vmem:[%s427] sm:$0xff]
      %v605 = vld [vmem:[%s427 + $0x10] sm:$0xff]
      %v606 = vld [vmem:[%s427 + $0x20] sm:$0xff]
      %v607 = vld [vmem:[%s427 + $0x30] sm:$0xff]
      %v609 = vlaneseq
      %v610 = vshrl.u32 %v609, 7
      %v611 = vsub.s32 0, %v610
      %v612 = vrot.slane %v448, %v611
      %v615 = vsel %vm458, %v604, 0
      %v618 = vsel %vm458, %v605, 0
      %v621 = vsel %vm458, %v606, 0
      %v624 = vsel %vm458, %v607, 0
      %626 = vmatprep.subr.mxu0 0.0
      %627 = vmatpush1.msra.mxu0 %v444
      %628 = vmatprep.subr.mxu0 0.0
      %629 = vmatpush1.msra.mxu0 0.0
      %630 = vmatprep.subr.mxu0 0.0
      %631 = vmatpush1.msra.mxu0 0.0
      %632 = vmatprep.subr.mxu0 0.0
      %633 = vmatpush1.msra.mxu0 0.0
      %634 = vmatprep.subr.mxu0 0.0
      %635 = vmatpush1.msra.mxu0 0.0
      %636 = vmatprep.subr.mxu0 0.0
      %637 = vmatpush1.msra.mxu0 0.0
      %638 = vmatprep.subr.mxu0 0.0
      %639 = vmatpush1.msra.mxu0 0.0
      %640 = vmatprep.subr.mxu0 0.0
      %641 = vmatpush1.msra.mxu0 0.0
      %642 = vmatprep.subr.mxu0 0.0
      %643 = vmatpush1.msra.mxu0 0.0
      %644 = vmatprep.subr.mxu0 0.0
      %645 = vmatpush1.msra.mxu0 0.0
      %646 = vmatprep.subr.mxu0 0.0
      %647 = vmatpush1.msra.mxu0 0.0
      %648 = vmatprep.subr.mxu0 0.0
      %649 = vmatpush1.msra.mxu0 0.0
      %650 = vmatprep.subr.mxu0 0.0
      %651 = vmatpush1.msra.mxu0 0.0
      %652 = vmatprep.subr.mxu0 0.0
      %653 = vmatpush1.msra.mxu0 0.0
      %654 = vmatprep.subr.mxu0 0.0
      %655 = vmatpush1.msra.mxu0 0.0
      %656 = vmatprep.subr.mxu0 0.0
      %657 = vmatpush1.msra.mxu0 0.0
      %658 = vmatprep.subr.mxu0 0.0
      %659 = vmatpush1.msra.mxu0 0.0
      %660 = vmatprep.subr.mxu0 0.0
      %661 = vmatpush1.msra.mxu0 0.0
      %662 = vmatprep.subr.mxu0 0.0
      %663 = vmatpush1.msra.mxu0 0.0
      %664 = vmatprep.subr.mxu0 0.0
      %665 = vmatpush1.msra.mxu0 0.0
      %666 = vmatprep.subr.mxu0 0.0
      %667 = vmatpush1.msra.mxu0 0.0
      %668 = vmatprep.subr.mxu0 0.0
      %669 = vmatpush1.msra.mxu0 0.0
      %670 = vmatprep.subr.mxu0 0.0
      %671 = vmatpush1.msra.mxu0 0.0
      %672 = vmatprep.subr.mxu0 0.0
      %673 = vmatpush1.msra.mxu0 0.0
      %674 = vmatprep.subr.mxu0 0.0
      %675 = vmatpush1.msra.mxu0 0.0
      %676 = vmatprep.subr.mxu0 0.0
      %677 = vmatpush1.msra.mxu0 0.0
      %678 = vmatprep.subr.mxu0 0.0
      %679 = vmatpush1.msra.mxu0 0.0
      %680 = vmatprep.subr.mxu0 0.0
      %681 = vmatpush1.msra.mxu0 0.0
      %682 = vmatprep.subr.mxu0 0.0
      %683 = vmatpush1.msra.mxu0 0.0
      %684 = vmatprep.subr.mxu0 0.0
      %685 = vmatpush1.msra.mxu0 0.0
      %686 = vmatprep.subr.mxu0 0.0
      %687 = vmatpush1.msra.mxu0 0.0
      %688 = vmatprep.subr.mxu0 0.0
      %689 = vmatpush1.msra.mxu0 0.0
      %690 = vmatprep.mubr.f32.mxu0 0.0
      %691 = vmatmul.mubr.f32.gmra.mrb[0].mxu0 %v615
      %v692 = vpop.f32.mrb[0].mxu0
      %v693 = vadd.f32 %v612, %v692
      %v694 = vpop.f32.mrb[0].mxu0
      %695 = vmatprep.mubr.f32.mxu0 0.0
      %696 = vmatmul.mubr.f32.gmra.mrb[0].mxu0 %v618
      %v697 = vpop.f32.mrb[0].mxu0
      %v698 = vadd.f32 %v612, %v697
      %v699 = vpop.f32.mrb[0].mxu0
      %700 = vmatprep.mubr.f32.mxu0 0.0
      %701 = vmatmul.mubr.f32.gmra.mrb[0].mxu0 %v621
      %v702 = vpop.f32.mrb[0].mxu0
      %v703 = vadd.f32 %v612, %v702
      %v704 = vpop.f32.mrb[0].mxu0
      %705 = vmatprep.mubr.f32.mxu0 0.0
      %706 = vmatmul.mubr.f32.gmra.mrb[0].mxu0 %v624
      %v707 = vpop.f32.mrb[0].mxu0
      %v708 = vadd.f32 %v612, %v707
      %v709 = vpop.f32.mrb[0].mxu0
      %710 = vdwg.mxu0
      %vm711 = vcmp.gt.f32.partialorder %v693, 0.0
      %vm712 = vcmp.gt.f32.partialorder %v698, 0.0
      %vm713 = vcmp.gt.f32.partialorder %v703, 0.0
      %vm714 = vcmp.gt.f32.partialorder %v708, 0.0
      %v715 = vmul.f32 %v693, 1.442695
      %v716 = vpow.pop %v715
      %v717 = vmul.f32 %v698, 1.442695
      %v718 = vpow.pop %v717
      %v719 = vmul.f32 %v703, 1.442695
      %v720 = vpow.pop %v719
      %v721 = vmul.f32 %v708, 1.442695
      %v722 = vpow.pop %v721
      %v723 = vsub.f32 %v716, 1.0
      %v724 = vsub.f32 %v718, 1.0
      %v725 = vsub.f32 %v720, 1.0
      %v726 = vsub.f32 %v722, 1.0
      %v727 = vmul.f32 %v723, 1.6732632
      %v728 = vmul.f32 %v724, 1.6732632
      %v729 = vmul.f32 %v725, 1.6732632
      %v730 = vmul.f32 %v726, 1.6732632
      %v731 = vsel %vm711, %v693, %v727
      %v732 = vsel %vm712, %v698, %v728
      %v733 = vsel %vm713, %v703, %v729
      %v734 = vsel %vm714, %v708, %v730
      %v735 = vmul.f32 %v731, 1.050701
      %v736 = vmul.f32 %v732, 1.050701
      %v737 = vmul.f32 %v733, 1.050701
      %v738 = vmul.f32 %v734, 1.050701
      %v740 = vlaneseq
      %v741 = vshrl.u32 %v740, 7
      %v742 = vsub.s32 0, %v741
      %v743 = vrot.slane %v449, %v742
      %v745 = vmul.f32 %v735, %v743
      %v746 = vmul.f32 %v736, %v743
      %v747 = vmul.f32 %v737, %v743
      %v748 = vmul.f32 %v738, %v743
      %v750 = vlaneseq
      %v751 = vshrl.u32 %v750, 7
      %v752 = vsub.s32 0, %v751
      %v753 = vrot.slane %v450, %v752
      %v755 = vadd.f32 %v745, %v753
      %v756 = vadd.f32 %v746, %v753
      %v757 = vadd.f32 %v747, %v753
      %v758 = vadd.f32 %v748, %v753
      %v759 = vadd.f32 %v600, %v755
      %v760 = vadd.f32 %v601, %v756
      %v761 = vadd.f32 %v602, %v757
      %v762 = vadd.f32 %v603, %v758
      %vm763 = vcmask 130048
      %764 = vst.msk [vmem:[%s438] sm:$0xff] %vm763, %v759
      %765 = vst.msk [vmem:[%s438 + $0x10] sm:$0xff] %vm763, %v760
      %766 = vst.msk [vmem:[%s438 + $0x20] sm:$0xff] %vm763, %v761
      %767 = vst.msk [vmem:[%s438 + $0x30] sm:$0xff] %vm763, %v762
      %s768 = scalar_lea.vmem %s2, 8
      %v769 = vld [vmem:[%s768] sm:$0xff]
      %770 = vmatprep.subr.mxu0 0.0
      %771 = vmatpush1.msra.mxu0 %v769
      %772 = vmatprep.subr.mxu0 0.0
      %773 = vmatpush1.msra.mxu0 0.0
      %774 = vmatprep.subr.mxu0 0.0
      %775 = vmatpush1.msra.mxu0 0.0
      %776 = vmatprep.subr.mxu0 0.0
      %777 = vmatpush1.msra.mxu0 0.0
      %778 = vmatprep.subr.mxu0 0.0
      %779 = vmatpush1.msra.mxu0 0.0
      %780 = vmatprep.subr.mxu0 0.0
      %781 = vmatpush1.msra.mxu0 0.0
      %782 = vmatprep.subr.mxu0 0.0
      %783 = vmatpush1.msra.mxu0 0.0
      %784 = vmatprep.subr.mxu0 0.0
      %785 = vmatpush1.msra.mxu0 0.0
      %786 = vmatprep.subr.mxu0 0.0
      %787 = vmatpush1.msra.mxu0 0.0
      %788 = vmatprep.subr.mxu0 0.0
      %789 = vmatpush1.msra.mxu0 0.0
      %790 = vmatprep.subr.mxu0 0.0
      %791 = vmatpush1.msra.mxu0 0.0
      %792 = vmatprep.subr.mxu0 0.0
      %793 = vmatpush1.msra.mxu0 0.0
      %794 = vmatprep.subr.mxu0 0.0
      %795 = vmatpush1.msra.mxu0 0.0
      %796 = vmatprep.subr.mxu0 0.0
      %797 = vmatpush1.msra.mxu0 0.0
      %798 = vmatprep.subr.mxu0 0.0
      %799 = vmatpush1.msra.mxu0 0.0
      %800 = vmatprep.subr.mxu0 0.0
      %801 = vmatpush1.msra.mxu0 0.0
      %802 = vmatprep.subr.mxu0 0.0
      %803 = vmatpush1.msra.mxu0 0.0
      %804 = vmatprep.subr.mxu0 0.0
      %805 = vmatpush1.msra.mxu0 0.0
      %806 = vmatprep.subr.mxu0 0.0
      %807 = vmatpush1.msra.mxu0 0.0
      %808 = vmatprep.subr.mxu0 0.0
      %809 = vmatpush1.msra.mxu0 0.0
      %810 = vmatprep.subr.mxu0 0.0
      %811 = vmatpush1.msra.mxu0 0.0
      %812 = vmatprep.subr.mxu0 0.0
      %813 = vmatpush1.msra.mxu0 0.0
      %814 = vmatprep.subr.mxu0 0.0
      %815 = vmatpush1.msra.mxu0 0.0
      %816 = vmatprep.subr.mxu0 0.0
      %817 = vmatpush1.msra.mxu0 0.0
      %818 = vmatprep.subr.mxu0 0.0
      %819 = vmatpush1.msra.mxu0 0.0
      %820 = vmatprep.subr.mxu0 0.0
      %821 = vmatpush1.msra.mxu0 0.0
      %822 = vmatprep.subr.mxu0 0.0
      %823 = vmatpush1.msra.mxu0 0.0
      %824 = vmatprep.subr.mxu0 0.0
      %825 = vmatpush1.msra.mxu0 0.0
      %826 = vmatprep.subr.mxu0 0.0
      %827 = vmatpush1.msra.mxu0 0.0
      %828 = vmatprep.subr.mxu0 0.0
      %829 = vmatpush1.msra.mxu0 0.0
      %830 = vmatprep.subr.mxu0 0.0
      %831 = vmatpush1.msra.mxu0 0.0
      %832 = vmatprep.subr.mxu0 0.0
      %833 = vmatpush1.msra.mxu0 0.0
      %834 = vmatprep.mubr.f32.mxu0 0.0
      %835 = vmatmul.mubr.f32.gmra.mrb[0].mxu0 %v460
      %v836 = vpop.f32.mrb[0].mxu0
      %v837 = vadd.f32 %v456, %v836
      %v838 = vpop.f32.mrb[0].mxu0
      %839 = vmatprep.mubr.f32.mxu0 0.0
      %840 = vmatmul.mubr.f32.gmra.mrb[0].mxu0 %v463
      %v841 = vpop.f32.mrb[0].mxu0
      %v842 = vadd.f32 %v456, %v841
      %v843 = vpop.f32.mrb[0].mxu0
      %844 = vmatprep.mubr.f32.mxu0 0.0
      %845 = vmatmul.mubr.f32.gmra.mrb[0].mxu0 %v466
      %v846 = vpop.f32.mrb[0].mxu0
      %v847 = vadd.f32 %v456, %v846
      %v848 = vpop.f32.mrb[0].mxu0
      %849 = vmatprep.mubr.f32.mxu0 0.0
      %850 = vmatmul.mubr.f32.gmra.mrb[0].mxu0 %v469
      %v851 = vpop.f32.mrb[0].mxu0
      %v852 = vadd.f32 %v456, %v851
      %v853 = vpop.f32.mrb[0].mxu0
      %854 = vdwg.mxu0
      %vm855 = vcmp.gt.f32.partialorder %v837, 0.0
      %vm856 = vcmp.gt.f32.partialorder %v842, 0.0
      %vm857 = vcmp.gt.f32.partialorder %v847, 0.0
      %vm858 = vcmp.gt.f32.partialorder %v852, 0.0
      %v859 = vmul.f32 %v837, 1.442695
      %v860 = vpow.pop %v859
      %v861 = vmul.f32 %v842, 1.442695
      %v862 = vpow.pop %v861
      %v863 = vmul.f32 %v847, 1.442695
      %v864 = vpow.pop %v863
      %v865 = vmul.f32 %v852, 1.442695
      %v866 = vpow.pop %v865
      %v867 = vsub.f32 %v860, 1.0
      %v868 = vsub.f32 %v862, 1.0
      %v869 = vsub.f32 %v864, 1.0
      %v870 = vsub.f32 %v866, 1.0
      %v871 = vmul.f32 %v867, 1.6732632
      %v872 = vmul.f32 %v868, 1.6732632
      %v873 = vmul.f32 %v869, 1.6732632
      %v874 = vmul.f32 %v870, 1.6732632
      %v875 = vsel %vm855, %v837, %v871
      %v876 = vsel %vm856, %v842, %v872
      %v877 = vsel %vm857, %v847, %v873
      %v878 = vsel %vm858, %v852, %v874
      %v879 = vmul.f32 %v875, 1.050701
      %v880 = vmul.f32 %v876, 1.050701
      %v881 = vmul.f32 %v877, 1.050701
      %v882 = vmul.f32 %v878, 1.050701
      %v883 = vmul.f32 %v879, %v588
      %v884 = vmul.f32 %v880, %v588
      %v885 = vmul.f32 %v881, %v588
      %v886 = vmul.f32 %v882, %v588
      %v887 = vadd.f32 %v883, %v598
      %v888 = vadd.f32 %v884, %v598
      %v889 = vadd.f32 %v885, %v598
      %v890 = vadd.f32 %v886, %v598
      %s891 = scalar_lea.vmem %s427, 8
      %v892 = vld [vmem:[%s891] sm:$0xff]
      %v893 = vld [vmem:[%s891 + $0x10] sm:$0xff]
      %v894 = vld [vmem:[%s891 + $0x20] sm:$0xff]
      %v895 = vld [vmem:[%s891 + $0x30] sm:$0xff]
      %v897 = vsel %vm458, %v892, 0
      %v900 = vsel %vm458, %v893, 0
      %v903 = vsel %vm458, %v894, 0
      %v906 = vsel %vm458, %v895, 0
      %908 = vmatprep.subr.mxu0 0.0
      %909 = vmatpush1.msra.mxu0 %v444
      %910 = vmatprep.subr.mxu0 0.0
      %911 = vmatpush1.msra.mxu0 0.0
      %912 = vmatprep.subr.mxu0 0.0
      %913 = vmatpush1.msra.mxu0 0.0
      %914 = vmatprep.subr.mxu0 0.0
      %915 = vmatpush1.msra.mxu0 0.0
      %916 = vmatprep.subr.mxu0 0.0
      %917 = vmatpush1.msra.mxu0 0.0
      %918 = vmatprep.subr.mxu0 0.0
      %919 = vmatpush1.msra.mxu0 0.0
      %920 = vmatprep.subr.mxu0 0.0
      %921 = vmatpush1.msra.mxu0 0.0
      %922 = vmatprep.subr.mxu0 0.0
      %923 = vmatpush1.msra.mxu0 0.0
      %924 = vmatprep.subr.mxu0 0.0
      %925 = vmatpush1.msra.mxu0 0.0
      %926 = vmatprep.subr.mxu0 0.0
      %927 = vmatpush1.msra.mxu0 0.0
      %928 = vmatprep.subr.mxu0 0.0
      %929 = vmatpush1.msra.mxu0 0.0
      %930 = vmatprep.subr.mxu0 0.0
      %931 = vmatpush1.msra.mxu0 0.0
      %932 = vmatprep.subr.mxu0 0.0
      %933 = vmatpush1.msra.mxu0 0.0
      %934 = vmatprep.subr.mxu0 0.0
      %935 = vmatpush1.msra.mxu0 0.0
      %936 = vmatprep.subr.mxu0 0.0
      %937 = vmatpush1.msra.mxu0 0.0
      %938 = vmatprep.subr.mxu0 0.0
      %939 = vmatpush1.msra.mxu0 0.0
      %940 = vmatprep.subr.mxu0 0.0
      %941 = vmatpush1.msra.mxu0 0.0
      %942 = vmatprep.subr.mxu0 0.0
      %943 = vmatpush1.msra.mxu0 0.0
      %944 = vmatprep.subr.mxu0 0.0
      %945 = vmatpush1.msra.mxu0 0.0
      %946 = vmatprep.subr.mxu0 0.0
      %947 = vmatpush1.msra.mxu0 0.0
      %948 = vmatprep.subr.mxu0 0.0
      %949 = vmatpush1.msra.mxu0 0.0
      %950 = vmatprep.subr.mxu0 0.0
      %951 = vmatpush1.msra.mxu0 0.0
      %952 = vmatprep.subr.mxu0 0.0
      %953 = vmatpush1.msra.mxu0 0.0
      %954 = vmatprep.subr.mxu0 0.0
      %955 = vmatpush1.msra.mxu0 0.0
      %956 = vmatprep.subr.mxu0 0.0
      %957 = vmatpush1.msra.mxu0 0.0
      %958 = vmatprep.subr.mxu0 0.0
      %959 = vmatpush1.msra.mxu0 0.0
      %960 = vmatprep.subr.mxu0 0.0
      %961 = vmatpush1.msra.mxu0 0.0
      %962 = vmatprep.subr.mxu0 0.0
      %963 = vmatpush1.msra.mxu0 0.0
      %964 = vmatprep.subr.mxu0 0.0
      %965 = vmatpush1.msra.mxu0 0.0
      %966 = vmatprep.subr.mxu0 0.0
      %967 = vmatpush1.msra.mxu0 0.0
      %968 = vmatprep.subr.mxu0 0.0
      %969 = vmatpush1.msra.mxu0 0.0
      %970 = vmatprep.subr.mxu0 0.0
      %971 = vmatpush1.msra.mxu0 0.0
      %972 = vmatprep.mubr.f32.mxu0 0.0
      %973 = vmatmul.mubr.f32.gmra.mrb[0].mxu0 %v897
      %v974 = vpop.f32.mrb[0].mxu0
      %v975 = vadd.f32 %v612, %v974
      %v976 = vpop.f32.mrb[0].mxu0
      %977 = vmatprep.mubr.f32.mxu0 0.0
      %978 = vmatmul.mubr.f32.gmra.mrb[0].mxu0 %v900
      %v979 = vpop.f32.mrb[0].mxu0
      %v980 = vadd.f32 %v612, %v979
      %v981 = vpop.f32.mrb[0].mxu0
      %982 = vmatprep.mubr.f32.mxu0 0.0
      %983 = vmatmul.mubr.f32.gmra.mrb[0].mxu0 %v903
      %v984 = vpop.f32.mrb[0].mxu0
      %v985 = vadd.f32 %v612, %v984
      %v986 = vpop.f32.mrb[0].mxu0
      %987 = vmatprep.mubr.f32.mxu0 0.0
      %988 = vmatmul.mubr.f32.gmra.mrb[0].mxu0 %v906
      %v989 = vpop.f32.mrb[0].mxu0
      %v990 = vadd.f32 %v612, %v989
      %v991 = vpop.f32.mrb[0].mxu0
      %992 = vdwg.mxu0
      %vm993 = vcmp.gt.f32.partialorder %v975, 0.0
      %vm994 = vcmp.gt.f32.partialorder %v980, 0.0
      %vm995 = vcmp.gt.f32.partialorder %v985, 0.0
      %vm996 = vcmp.gt.f32.partialorder %v990, 0.0
      %v997 = vmul.f32 %v975, 1.442695
      %v998 = vpow.pop %v997
      %v999 = vmul.f32 %v980, 1.442695
      %v1000 = vpow.pop %v999
      %v1001 = vmul.f32 %v985, 1.442695
      %v1002 = vpow.pop %v1001
      %v1003 = vmul.f32 %v990, 1.442695
      %v1004 = vpow.pop %v1003
      %v1005 = vsub.f32 %v998, 1.0
      %v1006 = vsub.f32 %v1000, 1.0
      %v1007 = vsub.f32 %v1002, 1.0
      %v1008 = vsub.f32 %v1004, 1.0
      %v1009 = vmul.f32 %v1005, 1.6732632
      %v1010 = vmul.f32 %v1006, 1.6732632
      %v1011 = vmul.f32 %v1007, 1.6732632
      %v1012 = vmul.f32 %v1008, 1.6732632
      %v1013 = vsel %vm993, %v975, %v1009
      %v1014 = vsel %vm994, %v980, %v1010
      %v1015 = vsel %vm995, %v985, %v1011
      %v1016 = vsel %vm996, %v990, %v1012
      %v1017 = vmul.f32 %v1013, 1.050701
      %v1018 = vmul.f32 %v1014, 1.050701
      %v1019 = vmul.f32 %v1015, 1.050701
      %v1020 = vmul.f32 %v1016, 1.050701
      %v1021 = vmul.f32 %v1017, %v743
      %v1022 = vmul.f32 %v1018, %v743
      %v1023 = vmul.f32 %v1019, %v743
      %v1024 = vmul.f32 %v1020, %v743
      %v1025 = vadd.f32 %v1021, %v753
      %v1026 = vadd.f32 %v1022, %v753
      %v1027 = vadd.f32 %v1023, %v753
      %v1028 = vadd.f32 %v1024, %v753
      %v1029 = vadd.f32 %v887, %v1025
      %v1030 = vadd.f32 %v888, %v1026
      %v1031 = vadd.f32 %v889, %v1027
      %v1032 = vadd.f32 %v890, %v1028
      %s1033 = scalar_lea.vmem %s438, 8
      %1034 = vst.msk [vmem:[%s1033] sm:$0xff] %vm763, %v1029
      %1035 = vst.msk [vmem:[%s1033 + $0x10] sm:$0xff] %vm763, %v1030
      %1036 = vst.msk [vmem:[%s1033 + $0x20] sm:$0xff] %vm763, %v1031
      %1037 = vst.msk [vmem:[%s1033 + $0x30] sm:$0xff] %vm763, %v1032
      %s1038 = smul.u32 4, %s26
      %p1039 = scmp.lt.s32.totalorder %s25, 1
      %s1040 = scalar_select %p1039, %s25, 1
      %p1041 = scmp.lt.s32.totalorder %s1038, 7
      %s1042 = scalar_select %p1041, %s1038, 7
      %s1043 = smul.addr %s1042, 2
      %s1044 = smul.addr %s1040, 16
      %s1045 = sadd.s32 %s1043, %s1044
      %s1046 = smul.addr %s1045, 8
      %s1047 = scalar_lea.vmem %s10, %s1046
      // Predicated region
      $region61: #{deconv_block_forward.3} parent=59 // pred_check
        %p1048 = pneg %p277
      $region62: #{deconv_block_forward.3} parent=59 // pred_check_branch
        %1050 = sbr.rel (%p1048) target = $region64
      $region63: #{deconv_block_forward.3} parent=59 // pred_region
        %s1051 = smul.u32 4, %s26
      $region64: #{deconv_block_forward.3} parent=59 // pred_fallthru
        _
    $region60: #{deconv_block_forward.3} parent=5 // pred_fallthru
      _
    %p1052 = scmp.le.s32.totalorder 2, %s16
    // Predicated region
    $region65: #{deconv_block_forward.3} parent=5 // pred_check
      %p1053 = pneg %p1052
    $region66: #{deconv_block_forward.3} parent=5 // pred_check_branch
      %1055 = sbr.rel (%p1053) target = $region68
    $region67: #{deconv_block_forward.3} parent=5 // pred_region
      %s1056 = ssub.s32 %s16, 2
      // Predicated region
      $region69: #{deconv_block_forward.3} parent=67 // pred_check
        %p1057 = pneg %p283
      $region70: #{deconv_block_forward.3} parent=67 // pred_check_branch
        %1059 = sbr.rel (%p1057) target = $region72
      $region71: #{deconv_block_forward.3} parent=67 // pred_region
        %s1060 = smul.u32 4, %s28
        %p1061 = scmp.lt.s32.totalorder %s27, 1
        %s1062 = scalar_select %p1061, %s27, 1
        %p1063 = scmp.lt.s32.totalorder %s1060, 7
        %s1064 = scalar_select %p1063, %s1060, 7
        %s1065 = smul.addr %s1064, 2
        %s1066 = smul.addr %s1062, 16
        %s1067 = sadd.s32 %s1065, %s1066
        %s1068 = smul.addr %s1067, 8
        %s1069 = scalar_lea.vmem %s10, %s1068
      $region72: #{deconv_block_forward.3} parent=67 // pred_fallthru
        _
    $region68: #{deconv_block_forward.3} parent=5 // pred_fallthru
      _
  $region6: #{deconv_block_forward.3} parent=0 // loop_footer
    %s20 = sadd.s32 1, %s16
  $region7: #{deconv_block_forward.3} parent=0 // loop_footer_branch
    %15 = sbr.rel target = $region3
  $region8: #{deconv_block_forward.3} parent=0 // loop_exit
    _

// kernel: deconv_block_forward.4
$region0: #{deconv_block_forward.4}
  #allocation0 [shape = 'u32[]', space=smem, size = 0x4, offset = 0x4, fixed_abs, tag = 'smem constant byte address 0x4 - core index']
  #allocation1 [shape = 'u32[144,128]{1,0:T(1,128)}', space=vmem, size = 0x12000, scoped, tag = 'internal scratch']
  #allocation2 [shape = 'f32[1,12,20,8]{3,2,1,0:T(8,128)}', space=vmem, size = 0x24000, scoped, tag = 'scratch operand']
  %s0 = inlined_call_operand.vmem [shape: f32[2,16,16,8], index: 0, kind: input, shape index: {}, may-alias: {0,1,2}]
  %s1 = inlined_call_operand.vmem [shape: f32[2,16,16,8], index: 1, kind: input, shape index: {}, may-alias: {0,1,2}]
  %s2 = inlined_call_operand.vmem [shape: f32[2,16,16,8], index: 2, kind: input, shape index: {}, may-alias: {0,1,2}]
  %s3 = inlined_call_operand.vmem [shape: f32[3,3,8,8], index: 3, kind: input, shape index: {}]
  %s4 = inlined_call_operand.vmem [shape: f32[1,8], index: 4, kind: input, shape index: {}]
  %s5 = inlined_call_operand.vmem [shape: f32[1,8], index: 5, kind: input, shape index: {}]
  %s6 = inlined_call_operand.vmem [shape: f32[1,8], index: 6, kind: input, shape index: {}]
  %s7 = inlined_call_operand.vmem [shape: f32[2,16,16,8], index: 7, kind: output, shape index: {}]
  %s8 = sld [smem:[#allocation0]]
  $region61: #{deconv_block_forward.4} parent=0
    _
  %s10 = ssub.s32 1, %s8
  %s11 = scalar_select 0, %s10, %s8
  loop: start=0, step=1, limit=6
  $region2: #{deconv_block_forward.4} parent=0 // loop_pre_header
    _
  $region3: #{deconv_block_forward.4} parent=0 // loop_header
    %s13 = sphi 0, %s17
    %p14 = scmp.ge.s32.totalorder %s13, 6
    %s20 = sphi 0, %s32
    %s21 = sphi 0, %s28
    %s22 = sphi 0, %s20
    %s23 = sphi 0, %s21
    %s24 = sphi 0, %s22
    %s25 = sphi 0, %s23
    %s37 = sphi 0, %s39
    %s40 = sphi 0, %s37
    %s41 = sphi 0, %s40
    %s57 = sphi 0, %s41
    %s73 = sphi 0, %s75
    %s76 = sphi 0, %s73
    %s77 = sphi 0, %s76
    %s93 = sphi 0, %s77
    %s109 = sphi 0, %s111
    %s112 = sphi 0, %s109
    %s113 = sphi 0, %s112
    %s129 = sphi 0, %s113
    %s133 = sphi 0, %s133
    %s135 = sphi 0, %s133
    %s136 = sphi 0, %s135
    %s150 = sphi 0, %s136
    %s154 = sphi 0, %s154
    %s156 = sphi 0, %s154
    %s157 = sphi 0, %s156
    %s171 = sphi 0, %s157
    %s175 = sphi 0, %s175
    %s177 = sphi 0, %s175
    %s178 = sphi 0, %s177
    %s192 = sphi 0, %s178
    %s196 = sphi 0, %s196
    %s198 = sphi 0, %s196
    %s199 = sphi 0, %s198
    %s213 = sphi 0, %s199
    %s221 = sphi 0, %s223
    %s224 = sphi 0, %s221
    %s225 = sphi 0, %s224
    %s241 = sphi 0, %s225
  $region4: #{deconv_block_forward.4} parent=0 // loop_header_branch
    %16 = sbr.rel (%p14) target = $region8
  $region5: #{deconv_block_forward.4} parent=0 // loop_body
    %s18 = ssub.s32 %s13, 1
    %s19 = ssub.s32 %s13, 2
    %s26 = sadd.s32 1, %s21
    %p27 = scmp.ge.s32.totalorder %s26, 2
    %s28 = scalar_select %p27, 0, %s26
    %s29 = sadd.s32 1, %s20
    %s30 = scalar_select %p27, %s29, %s20
    %p31 = scmp.ge.s32.totalorder %s30, 2
    %s32 = scalar_select %p31, 0, %s30
    %s33 = ssub.s32 %s20, %s32
    %s34 = ssub.s32 %s21, %s28
    %s35 = sor.u32 %s33, %s34
    %p36 = scmp.eq.s32.totalorder %s35, 0
    %s38 = sadd.s32 %s37, 1
    %s39 = scalar_select %p36, %s37, %s38
    %p42 = pneg %p36
    %p43 = scmp.eq.s32.totalorder %s13, 3
    %p44 = por %p42, %p43
    %p45 = scmp.ne.s32.totalorder %s37, %s40
    %p46 = scmp.eq.s32.totalorder %s13, 0
    %p47 = por %p45, %p46
    %p48 = scmp.ne.s32.totalorder %s37, %s40
    %p49 = scmp.eq.s32.totalorder %s18, 3
    %p50 = por %p48, %p49
    %p51 = scmp.ne.s32.totalorder %s40, %s41
    %p52 = scmp.eq.s32.totalorder %s18, 0
    %p53 = por %p51, %p52
    %p54 = scmp.ne.s32.totalorder %s40, %s41
    %p55 = scmp.eq.s32.totalorder %s19, 3
    %p56 = por %p54, %p55
    %p58 = scmp.ne.s32.totalorder %s41, %s57
    %p59 = scmp.eq.s32.totalorder %s19, 0
    %p60 = por %p58, %p59
    %s61 = smul.u32 %s21, 4
    %s62 = ssub.s32 %s61, 1
    %p63 = scmp.gt.s32.totalorder %s62, 0
    %s64 = scalar_select %p63, %s62, 0
    %s65 = smul.u32 %s28, 4
    %s66 = ssub.s32 %s65, 1
    %p67 = scmp.gt.s32.totalorder %s66, 0
    %s68 = scalar_select %p67, %s66, 0
    %s69 = ssub.s32 %s20, %s32
    %s70 = ssub.s32 %s64, %s68
    %s71 = sor.u32 %s69, %s70
    %p72 = scmp.eq.s32.totalorder %s71, 0
    %s74 = sadd.s32 %s73, 1
    %s75 = scalar_select %p72, %s73, %s74
    %p78 = pneg %p72
    %p79 = scmp.eq.s32.totalorder %s13, 3
    %p80 = por %p78, %p79
    %p81 = scmp.ne.s32.totalorder %s73, %s76
    %p82 = scmp.eq.s32.totalorder %s13, 0
    %p83 = por %p81, %p82
    %p84 = scmp.ne.s32.totalorder %s73, %s76
    %p85 = scmp.eq.s32.totalorder %s18, 3
    %p86 = por %p84, %p85
    %p87 = scmp.ne.s32.totalorder %s76, %s77
    %p88 = scmp.eq.s32.totalorder %s18, 0
    %p89 = por %p87, %p88
    %p90 = scmp.ne.s32.totalorder %s76, %s77
    %p91 = scmp.eq.s32.totalorder %s19, 3
    %p92 = por %p90, %p91
    %p94 = scmp.ne.s32.totalorder %s77, %s93
    %p95 = scmp.eq.s32.totalorder %s19, 0
    %p96 = por %p94, %p95
    %s97 = smul.u32 %s21, 4
    %s98 = sadd.s32 %s97, 4
    %p99 = scmp.lt.s32.totalorder %s98, 7
    %s100 = scalar_select %p99, %s98, 7
    %s101 = smul.u32 %s28, 4
    %s102 = sadd.s32 %s101, 4
    %p103 = scmp.lt.s32.totalorder %s102, 7
    %s104 = scalar_select %p103, %s102, 7
    %s105 = ssub.s32 %s20, %s32
    %s106 = ssub.s32 %s100, %s104
    %s107 = sor.u32 %s105, %s106
    %p108 = scmp.eq.s32.totalorder %s107, 0
    %s110 = sadd.s32 %s109, 1
    %s111 = scalar_select %p108, %s109, %s110
    %p114 = pneg %p108
    %p115 = scmp.eq.s32.totalorder %s13, 3
    %p116 = por %p114, %p115
    %p117 = scmp.ne.s32.totalorder %s109, %s112
    %p118 = scmp.eq.s32.totalorder %s13, 0
    %p119 = por %p117, %p118
    %p120 = scmp.ne.s32.totalorder %s109, %s112
    %p121 = scmp.eq.s32.totalorder %s18, 3
    %p122 = por %p120, %p121
    %p123 = scmp.ne.s32.totalorder %s112, %s113
    %p124 = scmp.eq.s32.totalorder %s18, 0
    %p125 = por %p123, %p124
    %p126 = scmp.ne.s32.totalorder %s112, %s113
    %p127 = scmp.eq.s32.totalorder %s19, 3
    %p128 = por %p126, %p127
    %p130 = scmp.ne.s32.totalorder %s113, %s129
    %p131 = scmp.eq.s32.totalorder %s19, 0
    %p132 = por %p130, %p131
    %s134 = sadd.s32 %s133, 1
    %p137 = scmp.eq.s32.totalorder %s13, 3
    %p138 = scmp.ne.s32.totalorder %s133, %s135
    %p139 = scmp.eq.s32.totalorder %s13, 0
    %p140 = por %p138, %p139
    %p141 = scmp.ne.s32.totalorder %s133, %s135
    %p142 = scmp.eq.s32.totalorder %s18, 3
    %p143 = por %p141, %p142
    %p144 = scmp.ne.s32.totalorder %s135, %s136
    %p145 = scmp.eq.s32.totalorder %s18, 0
    %p146 = por %p144, %p145
    %p147 = scmp.ne.s32.totalorder %s135, %s136
    %p148 = scmp.eq.s32.totalorder %s19, 3
    %p149 = por %p147, %p148
    %p151 = scmp.ne.s32.totalorder %s136, %s150
    %p152 = scmp.eq.s32.totalorder %s19, 0
    %p153 = por %p151, %p152
    %s155 = sadd.s32 %s154, 1
    %p158 = scmp.eq.s32.totalorder %s13, 3
    %p159 = scmp.ne.s32.totalorder %s154, %s156
    %p160 = scmp.eq.s32.totalorder %s13, 0
    %p161 = por %p159, %p160
    %p162 = scmp.ne.s32.totalorder %s154, %s156
    %p163 = scmp.eq.s32.totalorder %s18, 3
    %p164 = por %p162, %p163
    %p165 = scmp.ne.s32.totalorder %s156, %s157
    %p166 = scmp.eq.s32.totalorder %s18, 0
    %p167 = por %p165, %p166
    %p168 = scmp.ne.s32.totalorder %s156, %s157
    %p169 = scmp.eq.s32.totalorder %s19, 3
    %p170 = por %p168, %p169
    %p172 = scmp.ne.s32.totalorder %s157, %s171
    %p173 = scmp.eq.s32.totalorder %s19, 0
    %p174 = por %p172, %p173
    %s176 = sadd.s32 %s175, 1
    %p179 = scmp.eq.s32.totalorder %s13, 3
    %p180 = scmp.ne.s32.totalorder %s175, %s177
    %p181 = scmp.eq.s32.totalorder %s13, 0
    %p182 = por %p180, %p181
    %p183 = scmp.ne.s32.totalorder %s175, %s177
    %p184 = scmp.eq.s32.totalorder %s18, 3
    %p185 = por %p183, %p184
    %p186 = scmp.ne.s32.totalorder %s177, %s178
    %p187 = scmp.eq.s32.totalorder %s18, 0
    %p188 = por %p186, %p187
    %p189 = scmp.ne.s32.totalorder %s177, %s178
    %p190 = scmp.eq.s32.totalorder %s19, 3
    %p191 = por %p189, %p190
    %p193 = scmp.ne.s32.totalorder %s178, %s192
    %p194 = scmp.eq.s32.totalorder %s19, 0
    %p195 = por %p193, %p194
    %s197 = sadd.s32 %s196, 1
    %p200 = scmp.eq.s32.totalorder %s13, 3
    %p201 = scmp.ne.s32.totalorder %s196, %s198
    %p202 = scmp.eq.s32.totalorder %s13, 0
    %p203 = por %p201, %p202
    %p204 = scmp.ne.s32.totalorder %s196, %s198
    %p205 = scmp.eq.s32.totalorder %s18, 3
    %p206 = por %p204, %p205
    %p207 = scmp.ne.s32.totalorder %s198, %s199
    %p208 = scmp.eq.s32.totalorder %s18, 0
    %p209 = por %p207, %p208
    %p210 = scmp.ne.s32.totalorder %s198, %s199
    %p211 = scmp.eq.s32.totalorder %s19, 3
    %p212 = por %p210, %p211
    %p214 = scmp.ne.s32.totalorder %s199, %s213
    %p215 = scmp.eq.s32.totalorder %s19, 0
    %p216 = por %p214, %p215
    %s217 = ssub.s32 %s20, %s32
    %s218 = ssub.s32 %s21, %s28
    %s219 = sor.u32 %s217, %s218
    %p220 = scmp.eq.s32.totalorder %s219, 0
    %s222 = sadd.s32 %s221, 1
    %s223 = scalar_select %p220, %s221, %s222
    %p226 = pneg %p220
    %p227 = scmp.eq.s32.totalorder %s13, 3
    %p228 = por %p226, %p227
    %p229 = scmp.ne.s32.totalorder %s221, %s224
    %p230 = scmp.eq.s32.totalorder %s13, 0
    %p231 = por %p229, %p230
    %p232 = scmp.ne.s32.totalorder %s221, %s224
    %p233 = scmp.eq.s32.totalorder %s18, 3
    %p234 = por %p232, %p233
    %p235 = scmp.ne.s32.totalorder %s224, %s225
    %p236 = scmp.eq.s32.totalorder %s18, 0
    %p237 = por %p235, %p236
    %p238 = scmp.ne.s32.totalorder %s224, %s225
    %p239 = scmp.eq.s32.totalorder %s19, 3
    %p240 = por %p238, %p239
    %p242 = scmp.ne.s32.totalorder %s225, %s241
    %p243 = scmp.eq.s32.totalorder %s19, 0
    %p244 = por %p242, %p243
    %p245 = scmp.le.s32.totalorder 1, %s13
    %p246 = scmp.lt.s32.totalorder %s13, 5
    %p247 = pnand %p245, %p246
    %p248 = pneg %p247
    // Predicated region
    $region9: #{deconv_block_forward.4} parent=5 // pred_check
      _
    $region10: #{deconv_block_forward.4} parent=5 // pred_check_branch
      %250 = sbr.rel (%p247) target = $region12
    $region11: #{deconv_block_forward.4} parent=5 // pred_region
      %s251 = ssub.s32 %s13, 1
      // Predicated region
      $region13: #{deconv_block_forward.4} parent=11 // pred_check
        %p252 = pneg %p146
      $region14: #{deconv_block_forward.4} parent=11 // pred_check_branch
        %254 = sbr.rel (%p252) target = $region16
      $region15: #{deconv_block_forward.4} parent=11 // pred_region
        _
      $region16: #{deconv_block_forward.4} parent=11 // pred_fallthru
        _
      // Predicated region
      $region17: #{deconv_block_forward.4} parent=11 // pred_check
        %p255 = pneg %p167
      $region18: #{deconv_block_forward.4} parent=11 // pred_check_branch
        %257 = sbr.rel (%p255) target = $region20
      $region19: #{deconv_block_forward.4} parent=11 // pred_region
        _
      $region20: #{deconv_block_forward.4} parent=11 // pred_fallthru
        _
      // Predicated region
      $region21: #{deconv_block_forward.4} parent=11 // pred_check
        %p258 = pneg %p188
      $region22: #{deconv_block_forward.4} parent=11 // pred_check_branch
        %260 = sbr.rel (%p258) target = $region24
      $region23: #{deconv_block_forward.4} parent=11 // pred_region
        _
      $region24: #{deconv_block_forward.4} parent=11 // pred_fallthru
        _
      // Predicated region
      $region25: #{deconv_block_forward.4} parent=11 // pred_check
        %p261 = pneg %p209
      $region26: #{deconv_block_forward.4} parent=11 // pred_check_branch
        %263 = sbr.rel (%p261) target = $region28
      $region27: #{deconv_block_forward.4} parent=11 // pred_region
        _
      $region28: #{deconv_block_forward.4} parent=11 // pred_fallthru
        _
    $region12: #{deconv_block_forward.4} parent=5 // pred_fallthru
      _
    %p264 = scmp.lt.s32.totalorder %s13, 4
    // Predicated region
    $region29: #{deconv_block_forward.4} parent=5 // pred_check
      %p265 = pneg %p264
    $region30: #{deconv_block_forward.4} parent=5 // pred_check_branch
      %267 = sbr.rel (%p265) target = $region32
    $region31: #{deconv_block_forward.4} parent=5 // pred_region
      // Predicated region
      $region33: #{deconv_block_forward.4} parent=31 // pred_check
        %p268 = pneg %p47
      $region34: #{deconv_block_forward.4} parent=31 // pred_check_branch
        %270 = sbr.rel (%p268) target = $region36
      $region35: #{deconv_block_forward.4} parent=31 // pred_region
        %s271 = smul.u32 8, %s21
        %p272 = scmp.lt.s32.totalorder %s20, 1
        %s273 = scalar_select %p272, %s20, 1
        %p274 = scmp.lt.s32.totalorder %s271, 15
        %s275 = scalar_select %p274, %s271, 15
        %s276 = smul.addr %s275, 2
        %s277 = smul.addr %s273, 32
        %s278 = sadd.s32 %s276, %s277
        %s279 = smul.addr %s278, 8
        %s280 = scalar_lea.vmem %s0, %s279
        %s281 = smul.u32 8, %s21
      $region36: #{deconv_block_forward.4} parent=31 // pred_fallthru
        _
      // Predicated region
      $region37: #{deconv_block_forward.4} parent=31 // pred_check
        %p282 = pneg %p83
      $region38: #{deconv_block_forward.4} parent=31 // pred_check_branch
        %284 = sbr.rel (%p282) target = $region40
      $region39: #{deconv_block_forward.4} parent=31 // pred_region
        %s285 = smul.u32 %s21, 4
        %s286 = ssub.s32 %s285, 1
        %p287 = scmp.gt.s32.totalorder %s286, 0
        %s288 = scalar_select %p287, %s286, 0
        %s289 = smul.u32 2, %s288
        %p290 = scmp.lt.s32.totalorder %s20, 1
        %s291 = scalar_select %p290, %s20, 1
        %p292 = scmp.lt.s32.totalorder %s289, 15
        %s293 = scalar_select %p292, %s289, 15
        %s294 = smul.addr %s293, 2
        %s295 = smul.addr %s291, 32
        %s296 = sadd.s32 %s294, %s295
        %s297 = smul.addr %s296, 8
        %s298 = scalar_lea.vmem %s1, %s297
        %s299 = smul.u32 %s21, 4
        %s300 = ssub.s32 %s299, 1
        %p301 = scmp.gt.s32.totalorder %s300, 0
        %s302 = scalar_select %p301, %s300, 0
        %s303 = smul.u32 2, %s302
      $region40: #{deconv_block_forward.4} parent=31 // pred_fallthru
        _
      // Predicated region
      $region41: #{deconv_block_forward.4} parent=31 // pred_check
        %p304 = pneg %p119
      $region42: #{deconv_block_forward.4} parent=31 // pred_check_branch
        %306 = sbr.rel (%p304) target = $region44
      $region43: #{deconv_block_forward.4} parent=31 // pred_region
        %s307 = smul.u32 %s21, 4
        %s308 = sadd.s32 %s307, 4
        %p309 = scmp.lt.s32.totalorder %s308, 7
        %s310 = scalar_select %p309, %s308, 7
        %s311 = smul.u32 2, %s310
        %p312 = scmp.lt.s32.totalorder %s20, 1
        %s313 = scalar_select %p312, %s20, 1
        %p314 = scmp.lt.s32.totalorder %s311, 15
        %s315 = scalar_select %p314, %s311, 15
        %s316 = smul.addr %s315, 2
        %s317 = smul.addr %s313, 32
        %s318 = sadd.s32 %s316, %s317
        %s319 = smul.addr %s318, 8
        %s320 = scalar_lea.vmem %s2, %s319
        %s321 = smul.u32 %s21, 4
        %s322 = sadd.s32 %s321, 4
        %p323 = scmp.lt.s32.totalorder %s322, 7
        %s324 = scalar_select %p323, %s322, 7
        %s325 = smul.u32 2, %s324
      $region44: #{deconv_block_forward.4} parent=31 // pred_fallthru
        _
    $region32: #{deconv_block_forward.4} parent=5 // pred_fallthru
      _
    %p326 = scmp.le.s32.totalorder 1, %s13
    %p327 = scmp.lt.s32.totalorder %s13, 5
    %p328 = pnand %p326, %p327
    %p329 = pneg %p328
    // Predicated region
    $region45: #{deconv_block_forward.4} parent=5 // pred_check
      _
    $region46: #{deconv_block_forward.4} parent=5 // pred_check_branch
      %331 = sbr.rel (%p328) target = $region48
    $region47: #{deconv_block_forward.4} parent=5 // pred_region
      %s332 = ssub.s32 %s13, 1
      %s333 = smul.u32 8, %s23
      %p334 = scmp.lt.s32.totalorder %s22, 1
      %s335 = scalar_select %p334, %s22, 1
      %p336 = scmp.lt.s32.totalorder %s333, 15
      %s337 = scalar_select %p336, %s333, 15
      %s338 = smul.addr %s337, 2
      %s339 = smul.addr %s335, 32
      %s340 = sadd.s32 %s338, %s339
      %s341 = smul.addr %s340, 8
      %s342 = scalar_lea.vmem %s0, %s341
      %p343 = pneg %p53
      %p344 = pneg %p50
      %s345 = smul.u32 %s23, 4
      %s346 = ssub.s32 %s345, 1
      %p347 = scmp.gt.s32.totalorder %s346, 0
      %s348 = scalar_select %p347, %s346, 0
      %s349 = smul.u32 2, %s348
      %p350 = scmp.lt.s32.totalorder %s22, 1
      %s351 = scalar_select %p350, %s22, 1
      %p352 = scmp.lt.s32.totalorder %s349, 15
      %s353 = scalar_select %p352, %s349, 15
      %s354 = smul.addr %s353, 2
      %s355 = smul.addr %s351, 32
      %s356 = sadd.s32 %s354, %s355
      %s357 = smul.addr %s356, 8
      %s358 = scalar_lea.vmem %s1, %s357
      %p359 = pneg %p89
      %p360 = pneg %p86
      %s361 = smul.u32 %s23, 4
      %s362 = sadd.s32 %s361, 4
      %p363 = scmp.lt.s32.totalorder %s362, 7
      %s364 = scalar_select %p363, %s362, 7
      %s365 = smul.u32 2, %s364
      %p366 = scmp.lt.s32.totalorder %s22, 1
      %s367 = scalar_select %p366, %s22, 1
      %p368 = scmp.lt.s32.totalorder %s365, 15
      %s369 = scalar_select %p368, %s365, 15
      %s370 = smul.addr %s369, 2
      %s371 = smul.addr %s367, 32
      %s372 = sadd.s32 %s370, %s371
      %s373 = smul.addr %s372, 8
      %s374 = scalar_lea.vmem %s2, %s373
      %p375 = pneg %p125
      %p376 = pneg %p122
      %p377 = pneg %p146
      %p378 = pneg %p143
      %p379 = pneg %p167
      %p380 = pneg %p164
      %p381 = pneg %p188
      %p382 = pneg %p185
      %p383 = pneg %p209
      %p384 = pneg %p206
      %p385 = pneg %p237
      %p386 = pneg %p234
      %s387 = smul.u32 8, %s23
      %p388 = scmp.lt.s32.totalorder %s22, 1
      %s389 = scalar_select %p388, %s22, 1
      %p390 = scmp.lt.s32.totalorder %s387, 15
      %s391 = scalar_select %p390, %s387, 15
      %s392 = smul.addr %s391, 2
      %s393 = smul.addr %s389, 32
      %s394 = sadd.s32 %s392, %s393
      %s395 = smul.addr %s394, 8
      %s396 = scalar_lea.vmem %s7, %s395
      %s397 = smul.u32 8, %s23
      %p398 = scmp.lt.s32.totalorder %s22, 1
      %s399 = scalar_select %p398, %s22, 1
      %p400 = scmp.lt.s32.totalorder %s397, 15
      %s401 = scalar_select %p400, %s397, 15
      %s402 = smul.addr %s401, 2
      %s403 = smul.addr %s399, 32
      %s404 = sadd.s32 %s402, %s403
      %s405 = smul.addr %s404, 8
      %s406 = scalar_lea.vmem %s0, %s405
      %s407 = smul.u32 8, %s23
      %s408 = smul.u32 %s23, 4
      %s409 = ssub.s32 %s408, 1
      %p410 = scmp.gt.s32.totalorder %s409, 0
      %s411 = scalar_select %p410, %s409, 0
      %s412 = smul.u32 2, %s411
      %p413 = scmp.lt.s32.totalorder %s22, 1
      %s414 = scalar_select %p413, %s22, 1
      %p415 = scmp.lt.s32.totalorder %s412, 15
      %s416 = scalar_select %p415, %s412, 15
      %s417 = smul.addr %s416, 2
      %s418 = smul.addr %s414, 32
      %s419 = sadd.s32 %s417, %s418
      %s420 = smul.addr %s419, 8
      %s421 = scalar_lea.vmem %s1, %s420
      %s422 = smul.u32 %s23, 4
      %s423 = ssub.s32 %s422, 1
      %p424 = scmp.gt.s32.totalorder %s423, 0
      %s425 = scalar_select %p424, %s423, 0
      %s426 = smul.u32 2, %s425
      %s427 = smul.u32 %s23, 4
      %s428 = sadd.s32 %s427, 4
      %p429 = scmp.lt.s32.totalorder %s428, 7
      %s430 = scalar_select %p429, %s428, 7
      %s431 = smul.u32 2, %s430
      %p432 = scmp.lt.s32.totalorder %s22, 1
      %s433 = scalar_select %p432, %s22, 1
      %p434 = scmp.lt.s32.totalorder %s431, 15
      %s435 = scalar_select %p434, %s431, 15
      %s436 = smul.addr %s435, 2
      %s437 = smul.addr %s433, 32
      %s438 = sadd.s32 %s436, %s437
      %s439 = smul.addr %s438, 8
      %s440 = scalar_lea.vmem %s2, %s439
      %s441 = smul.u32 %s23, 4
      %s442 = sadd.s32 %s441, 4
      %p443 = scmp.lt.s32.totalorder %s442, 7
      %s444 = scalar_select %p443, %s442, 7
      %s445 = smul.u32 2, %s444
      %s446 = smul.u32 8, %s23
      %p447 = scmp.lt.s32.totalorder %s22, 1
      %s448 = scalar_select %p447, %s22, 1
      %p449 = scmp.lt.s32.totalorder %s446, 15
      %s450 = scalar_select %p449, %s446, 15
      %s451 = smul.addr %s450, 2
      %s452 = smul.addr %s448, 32
      %s453 = sadd.s32 %s451, %s452
      %s454 = smul.addr %s453, 8
      %s455 = scalar_lea.vmem %s7, %s454
      %s456 = smul.u32 8, %s23
      %vm457 = vcmask 58368
      %458 = vst.msk [vmem:[#allocation2] sm:$0x3] %vm457, 0.0
      %459 = vst.msk [vmem:[#allocation2 + $0x18] sm:$0x3] %vm457, 0.0
      %460 = vst.msk [vmem:[#allocation2 + $0x30] sm:$0x3] %vm457, 0.0
      %461 = vst.msk [vmem:[#allocation2 + $0x48] sm:$0x3] %vm457, 0.0
      %462 = vst.msk [vmem:[#allocation2 + $0x60] sm:$0x3] %vm457, 0.0
      %463 = vst.msk [vmem:[#allocation2 + $0x78] sm:$0x3] %vm457, 0.0
      %464 = vst.msk [vmem:[#allocation2 + $0x90] sm:$0x3] %vm457, 0.0
      %465 = vst.msk [vmem:[#allocation2 + $0xa8] sm:$0x3] %vm457, 0.0
      %466 = vst.msk [vmem:[#allocation2 + $0xc0] sm:$0x3] %vm457, 0.0
      %467 = vst.msk [vmem:[#allocation2 + $0xd8] sm:$0x3] %vm457, 0.0
      %468 = vst.msk [vmem:[#allocation2 + $0xf0] sm:$0x3] %vm457, 0.0
      %469 = vst.msk [vmem:[#allocation2 + $0x108] sm:$0x3] %vm457, 0.0
      %470 = vst.msk [vmem:[#allocation2 + $0x12] sm:$0x3] %vm457, 0.0
      %471 = vst.msk [vmem:[#allocation2 + $0x2a] sm:$0x3] %vm457, 0.0
      %472 = vst.msk [vmem:[#allocation2 + $0x42] sm:$0x3] %vm457, 0.0
      %473 = vst.msk [vmem:[#allocation2 + $0x5a] sm:$0x3] %vm457, 0.0
      %474 = vst.msk [vmem:[#allocation2 + $0x72] sm:$0x3] %vm457, 0.0
      %475 = vst.msk [vmem:[#allocation2 + $0x8a] sm:$0x3] %vm457, 0.0
      %476 = vst.msk [vmem:[#allocation2 + $0xa2] sm:$0x3] %vm457, 0.0
      %477 = vst.msk [vmem:[#allocation2 + $0xba] sm:$0x3] %vm457, 0.0
      %478 = vst.msk [vmem:[#allocation2 + $0xd2] sm:$0x3] %vm457, 0.0
      %479 = vst.msk [vmem:[#allocation2 + $0xea] sm:$0x3] %vm457, 0.0
      %480 = vst.msk [vmem:[#allocation2 + $0x102] sm:$0x3] %vm457, 0.0
      %481 = vst.msk [vmem:[#allocation2 + $0x11a] sm:$0x3] %vm457, 0.0
      %p482 = scmp.gt.s32.totalorder %s23, 0
      %v483 = vld [vmem:[%s421] sm:$0xff]
      %v484 = vld [vmem:[%s421 + $0x8] sm:$0xff]
      %v485 = vld [vmem:[%s421 + $0x10] sm:$0xff]
      %v486 = vld [vmem:[%s421 + $0x18] sm:$0xff]
      %s487 = scalar_select %p482, 1, 0
      %v488 = vstv %s487
      %vm489 = vcmp.eq.s32.totalorder %v488, 1
      %v490 = vsel %vm489, %v483, 0.0
      %v491 = vsel %vm489, %v484, 0.0
      %v492 = vsel %vm489, %v485, 0.0
      %v493 = vsel %vm489, %v486, 0.0
      %vm494 = vcmask 64512
      %495 = vst.msk [vmem:[#allocation2 + $0x2] sm:$0xff] %vm494, %v490
      %496 = vst.msk [vmem:[#allocation2 + $0xa] sm:$0xff] %vm494, %v491
      %497 = vst.msk [vmem:[#allocation2 + $0x1a] sm:$0xff] %vm494, %v492
      %498 = vst.msk [vmem:[#allocation2 + $0x22] sm:$0xff] %vm494, %v493
      %v499 = vld [vmem:[%s406] sm:$0xff]
      %v500 = vld [vmem:[%s406 + $0x8] sm:$0xff]
      %v501 = vld [vmem:[%s406 + $0x10] sm:$0xff]
      %v502 = vld [vmem:[%s406 + $0x18] sm:$0xff]
      %v503 = vld [vmem:[%s406 + $0x20] sm:$0xff]
      %v504 = vld [vmem:[%s406 + $0x28] sm:$0xff]
      %v505 = vld [vmem:[%s406 + $0x30] sm:$0xff]
      %v506 = vld [vmem:[%s406 + $0x38] sm:$0xff]
      %v507 = vld [vmem:[%s406 + $0x40] sm:$0xff]
      %v508 = vld [vmem:[%s406 + $0x48] sm:$0xff]
      %v509 = vld [vmem:[%s406 + $0x50] sm:$0xff]
      %v510 = vld [vmem:[%s406 + $0x58] sm:$0xff]
      %v511 = vld [vmem:[%s406 + $0x60] sm:$0xff]
      %v512 = vld [vmem:[%s406 + $0x68] sm:$0xff]
      %v513 = vld [vmem:[%s406 + $0x70] sm:$0xff]
      %v514 = vld [vmem:[%s406 + $0x78] sm:$0xff]
      %s515 = scalar_lea.vmem [#allocation2], 48
      %516 = vst.msk [vmem:[%s515 + $0x2] sm:$0xff] %vm494, %v499
      %517 = vst.msk [vmem:[%s515 + $0xa] sm:$0xff] %vm494, %v500
      %518 = vst.msk [vmem:[%s515 + $0x1a] sm:$0xff] %vm494, %v501
      %519 = vst.msk [vmem:[%s515 + $0x22] sm:$0xff] %vm494, %v502
      %520 = vst.msk [vmem:[%s515 + $0x32] sm:$0xff] %vm494, %v503
      %521 = vst.msk [vmem:[%s515 + $0x3a] sm:$0xff] %vm494, %v504
      %522 = vst.msk [vmem:[%s515 + $0x4a] sm:$0xff] %vm494, %v505
      %523 = vst.msk [vmem:[%s515 + $0x52] sm:$0xff] %vm494, %v506
      %524 = vst.msk [vmem:[%s515 + $0x62] sm:$0xff] %vm494, %v507
      %525 = vst.msk [vmem:[%s515 + $0x6a] sm:$0xff] %vm494, %v508
      %526 = vst.msk [vmem:[%s515 + $0x7a] sm:$0xff] %vm494, %v509
      %527 = vst.msk [vmem:[%s515 + $0x82] sm:$0xff] %vm494, %v510
      %528 = vst.msk [vmem:[%s515 + $0x92] sm:$0xff] %vm494, %v511
      %529 = vst.msk [vmem:[%s515 + $0x9a] sm:$0xff] %vm494, %v512
      %530 = vst.msk [vmem:[%s515 + $0xaa] sm:$0xff] %vm494, %v513
      %531 = vst.msk [vmem:[%s515 + $0xb2] sm:$0xff] %vm494, %v514
      %p532 = scmp.lt.s32.totalorder %s23, 1
      %v533 = vld [vmem:[%s440] sm:$0xff]
      %v534 = vld [vmem:[%s440 + $0x8] sm:$0xff]
      %v535 = vld [vmem:[%s440 + $0x10] sm:$0xff]
      %v536 = vld [vmem:[%s440 + $0x18] sm:$0xff]
      %s537 = scalar_select %p532, 1, 0
      %v538 = vstv %s537
      %vm539 = vcmp.eq.s32.totalorder %v538, 1
      %v540 = vsel %vm539, %v533, 0.0
      %v541 = vsel %vm539, %v534, 0.0
      %v542 = vsel %vm539, %v535, 0.0
      %v543 = vsel %vm539, %v536, 0.0
      %s544 = scalar_lea.vmem [#allocation2], 240
      %545 = vst.msk [vmem:[%s544 + $0x2] sm:$0xff] %vm494, %v540
      %546 = vst.msk [vmem:[%s544 + $0xa] sm:$0xff] %vm494, %v541
      %547 = vst.msk [vmem:[%s544 + $0x1a] sm:$0xff] %vm494, %v542
      %548 = vst.msk [vmem:[%s544 + $0x22] sm:$0xff] %vm494, %v543
      %v549 = vld [vmem:[#allocation2] sm:$0xff]
      %v550 = vld [vmem:[#allocation2 + $0x8] sm:$0xff]
      %v551 = vld [vmem:[#allocation2 + $0x18] sm:$0xff]
      %v552 = vld [vmem:[#allocation2 + $0x20] sm:$0xff]
      %v553 = vld [vmem:[#allocation2 + $0x30] sm:$0xff]
      %v554 = vld [vmem:[#allocation2 + $0x38] sm:$0xff]
      %v555 = vld [vmem:[#allocation2 + $0x48] sm:$0xff]
      %v556 = vld [vmem:[#allocation2 + $0x50] sm:$0xff]
      %v557 = vld [vmem:[#allocation2 + $0x60] sm:$0xff]
      %v558 = vld [vmem:[#allocation2 + $0x68] sm:$0xff]
      %v559 = vld [vmem:[#allocation2 + $0x78] sm:$0xff]
      %v560 = vld [vmem:[#allocation2 + $0x80] sm:$0xff]
      %v561 = vld [vmem:[#allocation2 + $0x90] sm:$0xff]
      %v562 = vld [vmem:[#allocation2 + $0x98] sm:$0xff]
      %v563 = vld [vmem:[#allocation2 + $0xa8] sm:$0xff]
      %v564 = vld [vmem:[#allocation2 + $0xb0] sm:$0xff]
      %v565 = vld [vmem:[%s3] sm:$0xff]
      %v566 = vld [vmem:[#allocation2 + $0x2] sm:$0xff]
      %v567 = vld [vmem:[#allocation2 + $0xa] sm:$0xff]
      %v568 = vld [vmem:[#allocation2 + $0x1a] sm:$0xff]
      %v569 = vld [vmem:[#allocation2 + $0x22] sm:$0xff]
      %v570 = vld [vmem:[#allocation2 + $0x32] sm:$0xff]
      %v571 = vld [vmem:[#allocation2 + $0x3a] sm:$0xff]
      %v572 = vld [vmem:[#allocation2 + $0x4a] sm:$0xff]
      %v573 = vld [vmem:[#allocation2 + $0x52] sm:$0xff]
      %v574 = vld [vmem:[#allocation2 + $0x62] sm:$0xff]
      %v575 = vld [vmem:[#allocation2 + $0x6a] sm:$0xff]
      %v576 = vld [vmem:[#allocation2 + $0x7a] sm:$0xff]
      %v577 = vld [vmem:[#allocation2 + $0x82] sm:$0xff]
      %v578 = vld [vmem:[#allocation2 + $0x92] sm:$0xff]
      %v579 = vld [vmem:[#allocation2 + $0x9a] sm:$0xff]
      %v580 = vld [vmem:[#allocation2 + $0xaa] sm:$0xff]
      %v581 = vld [vmem:[#allocation2 + $0xb2] sm:$0xff]
      %s582 = scalar_lea.vmem %s3, 8
      %v583 = vld [vmem:[%s582] sm:$0xff]
      %v585 = vsel %vm494, %v566, 0
      %v588 = vsel %vm494, %v567, 0
      %v591 = vsel %vm494, %v568, 0
      %v594 = vsel %vm494, %v569, 0
      %v597 = vsel %vm494, %v570, 0
      %v600 = vsel %vm494, %v571, 0
      %v603 = vsel %vm494, %v572, 0
      %v606 = vsel %vm494, %v573, 0
      %v609 = vsel %vm494, %v574, 0
      %v612 = vsel %vm494, %v575, 0
      %v615 = vsel %vm494, %v576, 0
      %v618 = vsel %vm494, %v577, 0
      %v621 = vsel %vm494, %v578, 0
      %v624 = vsel %vm494, %v579, 0
      %v627 = vsel %vm494, %v580, 0
      %v630 = vsel %vm494, %v581, 0
      %632 = vmatprep.subr.mxu0 0.0
      %633 = vmatpush1.msra.mxu0 %v583
      %634 = vmatprep.subr.mxu0 0.0
      %635 = vmatpush1.msra.mxu0 0.0
      %636 = vmatprep.subr.mxu0 0.0
      %637 = vmatpush1.msra.mxu0 0.0
      %638 = vmatprep.subr.mxu0 0.0
      %639 = vmatpush1.msra.mxu0 0.0
      %640 = vmatprep.subr.mxu0 0.0
      %641 = vmatpush1.msra.mxu0 0.0
      %642 = vmatprep.subr.mxu0 0.0
      %643 = vmatpush1.msra.mxu0 0.0
      %644 = vmatprep.subr.mxu0 0.0
      %645 = vmatpush1.msra.mxu0 0.0
      %646 = vmatprep.subr.mxu0 0.0
      %647 = vmatpush1.msra.mxu0 0.0
      %648 = vmatprep.subr.mxu0 0.0
      %649 = vmatpush1.msra.mxu0 0.0
      %650 = vmatprep.subr.mxu0 0.0
      %651 = vmatpush1.msra.mxu0 0.0
      %652 = vmatprep.subr.mxu0 0.0
      %653 = vmatpush1.msra.mxu0 0.0
      %654 = vmatprep.subr.mxu0 0.0
      %655 = vmatpush1.msra.mxu0 0.0
      %656 = vmatprep.subr.mxu0 0.0
      %657 = vmatpush1.msra.mxu0 0.0
      %658 = vmatprep.subr.mxu0 0.0
      %659 = vmatpush1.msra.mxu0 0.0
      %660 = vmatprep.subr.mxu0 0.0
      %661 = vmatpush1.msra.mxu0 0.0
      %662 = vmatprep.subr.mxu0 0.0
      %663 = vmatpush1.msra.mxu0 0.0
      %664 = vmatprep.subr.mxu0 0.0
      %665 = vmatpush1.msra.mxu0 0.0
      %666 = vmatprep.subr.mxu0 0.0
      %667 = vmatpush1.msra.mxu0 0.0
      %668 = vmatprep.subr.mxu0 0.0
      %669 = vmatpush1.msra.mxu0 0.0
      %670 = vmatprep.subr.mxu0 0.0
      %671 = vmatpush1.msra.mxu0 0.0
      %672 = vmatprep.subr.mxu0 0.0
      %673 = vmatpush1.msra.mxu0 0.0
      %674 = vmatprep.subr.mxu0 0.0
      %675 = vmatpush1.msra.mxu0 0.0
      %676 = vmatprep.subr.mxu0 0.0
      %677 = vmatpush1.msra.mxu0 0.0
      %678 = vmatprep.subr.mxu0 0.0
      %679 = vmatpush1.msra.mxu0 0.0
      %680 = vmatprep.subr.mxu0 0.0
      %681 = vmatpush1.msra.mxu0 0.0
      %682 = vmatprep.subr.mxu0 0.0
      %683 = vmatpush1.msra.mxu0 0.0
      %684 = vmatprep.subr.mxu0 0.0
      %685 = vmatpush1.msra.mxu0 0.0
      %686 = vmatprep.subr.mxu0 0.0
      %687 = vmatpush1.msra.mxu0 0.0
      %688 = vmatprep.subr.mxu0 0.0
      %689 = vmatpush1.msra.mxu0 0.0
      %690 = vmatprep.subr.mxu0 0.0
      %691 = vmatpush1.msra.mxu0 0.0
      %692 = vmatprep.subr.mxu0 0.0
      %693 = vmatpush1.msra.mxu0 0.0
      %694 = vmatprep.subr.mxu0 0.0
      %695 = vmatpush1.msra.mxu0 0.0
      %696 = vmatprep.mubr.f32.mxu0 0.0
      %697 = vmatmul.mubr.f32.gmra.mrb[0].mxu0 %v585
      %v698 = vpop.f32.mrb[0].mxu0
      %v699 = vadd.f32 0.0, %v698
      %v700 = vpop.f32.mrb[0].mxu0
      %701 = vmatprep.mubr.f32.mxu0 0.0
      %702 = vmatmul.mubr.f32.gmra.mrb[0].mxu0 %v588
      %v703 = vpop.f32.mrb[0].mxu0
      %v704 = vadd.f32 0.0, %v703
      %v705 = vpop.f32.mrb[0].mxu0
      %706 = vmatprep.mubr.f32.mxu0 0.0
      %707 = vmatmul.mubr.f32.gmra.mrb[0].mxu0 %v591
      %v708 = vpop.f32.mrb[0].mxu0
      %v709 = vadd.f32 0.0, %v708
      %v710 = vpop.f32.mrb[0].mxu0
      %711 = vmatprep.mubr.f32.mxu0 0.0
      %712 = vmatmul.mubr.f32.gmra.mrb[0].mxu0 %v594
      %v713 = vpop.f32.mrb[0].mxu0
      %v714 = vadd.f32 0.0, %v713
      %v715 = vpop.f32.mrb[0].mxu0
      %716 = vmatprep.mubr.f32.mxu0 0.0
      %717 = vmatmul.mubr.f32.gmra.mrb[0].mxu0 %v597
      %v718 = vpop.f32.mrb[0].mxu0
      %v719 = vadd.f32 0.0, %v718
      %v720 = vpop.f32.mrb[0].mxu0
      %721 = vmatprep.mubr.f32.mxu0 0.0
      %722 = vmatmul.mubr.f32.gmra.mrb[0].mxu0 %v600
      %v723 = vpop.f32.mrb[0].mxu0
      %v724 = vadd.f32 0.0, %v723
      %v725 = vpop.f32.mrb[0].mxu0
      %726 = vmatprep.mubr.f32.mxu0 0.0
      %727 = vmatmul.mubr.f32.gmra.mrb[0].mxu0 %v603
      %v728 = vpop.f32.mrb[0].mxu0
      %v729 = vadd.f32 0.0, %v728
      %v730 = vpop.f32.mrb[0].mxu0
      %731 = vmatprep.mubr.f32.mxu0 0.0
      %732 = vmatmul.mubr.f32.gmra.mrb[0].mxu0 %v606
      %v733 = vpop.f32.mrb[0].mxu0
      %v734 = vadd.f32 0.0, %v733
      %v735 = vpop.f32.mrb[0].mxu0
      %736 = vmatprep.mubr.f32.mxu0 0.0
      %737 = vmatmul.mubr.f32.gmra.mrb[0].mxu0 %v609
      %v738 = vpop.f32.mrb[0].mxu0
      %v739 = vadd.f32 0.0, %v738
      %v740 = vpop.f32.mrb[0].mxu0
      %741 = vmatprep.mubr.f32.mxu0 0.0
      %742 = vmatmul.mubr.f32.gmra.mrb[0].mxu0 %v612
      %v743 = vpop.f32.mrb[0].mxu0
      %v744 = vadd.f32 0.0, %v743
      %v745 = vpop.f32.mrb[0].mxu0
      %746 = vmatprep.mubr.f32.mxu0 0.0
      %747 = vmatmul.mubr.f32.gmra.mrb[0].mxu0 %v615
      %v748 = vpop.f32.mrb[0].mxu0
      %v749 = vadd.f32 0.0, %v748
      %v750 = vpop.f32.mrb[0].mxu0
      %751 = vmatprep.mubr.f32.mxu0 0.0
      %752 = vmatmul.mubr.f32.gmra.mrb[0].mxu0 %v618
      %v753 = vpop.f32.mrb[0].mxu0
      %v754 = vadd.f32 0.0, %v753
      %v755 = vpop.f32.mrb[0].mxu0
      %756 = vmatprep.mubr.f32.mxu0 0.0
      %757 = vmatmul.mubr.f32.gmra.mrb[0].mxu0 %v621
      %v758 = vpop.f32.mrb[0].mxu0
      %v759 = vadd.f32 0.0, %v758
      %v760 = vpop.f32.mrb[0].mxu0
      %761 = vmatprep.mubr.f32.mxu0 0.0
      %762 = vmatmul.mubr.f32.gmra.mrb[0].mxu0 %v624
      %v763 = vpop.f32.mrb[0].mxu0
      %v764 = vadd.f32 0.0, %v763
      %v765 = vpop.f32.mrb[0].mxu0
      %766 = vmatprep.mubr.f32.mxu0 0.0
      %767 = vmatmul.mubr.f32.gmra.mrb[0].mxu0 %v627
      %v768 = vpop.f32.mrb[0].mxu0
      %v769 = vadd.f32 0.0, %v768
      %v770 = vpop.f32.mrb[0].mxu0
      %771 = vmatprep.mubr.f32.mxu0 0.0
      %772 = vmatmul.mubr.f32.gmra.mrb[0].mxu0 %v630
      %v773 = vpop.f32.mrb[0].mxu0
      %v774 = vadd.f32 0.0, %v773
      %v775 = vpop.f32.mrb[0].mxu0
      %776 = vdwg.mxu0
      %v778 = vsel %vm494, %v549, 0
      %v781 = vsel %vm494, %v550, 0
      %v784 = vsel %vm494, %v551, 0
      %v787 = vsel %vm494, %v552, 0
      %v790 = vsel %vm494, %v553, 0
      %v793 = vsel %vm494, %v554, 0
      %v796 = vsel %vm494, %v555, 0
      %v799 = vsel %vm494, %v556, 0
      %v802 = vsel %vm494, %v557, 0
      %v805 = vsel %vm494, %v558, 0
      %v808 = vsel %vm494, %v559, 0
      %v811 = vsel %vm494, %v560, 0
      %v814 = vsel %vm494, %v561, 0
      %v817 = vsel %vm494, %v562, 0
      %v820 = vsel %vm494, %v563, 0
      %v823 = vsel %vm494, %v564, 0
      %825 = vmatprep.subr.mxu0 0.0
      %826 = vmatpush1.msra.mxu0 %v565
      %827 = vmatprep.subr.mxu0 0.0
      %828 = vmatpush1.msra.mxu0 0.0
      %829 = vmatprep.subr.mxu0 0.0
      %830 = vmatpush1.msra.mxu0 0.0
      %831 = vmatprep.subr.mxu0 0.0
      %832 = vmatpush1.msra.mxu0 0.0
      %833 = vmatprep.subr.mxu0 0.0
      %834 = vmatpush1.msra.mxu0 0.0
      %835 = vmatprep.subr.mxu0 0.0
      %836 = vmatpush1.msra.mxu0 0.0
      %837 = vmatprep.subr.mxu0 0.0
      %838 = vmatpush1.msra.mxu0 0.0
      %839 = vmatprep.subr.mxu0 0.0
      %840 = vmatpush1.msra.mxu0 0.0
      %841 = vmatprep.subr.mxu0 0.0
      %842 = vmatpush1.msra.mxu0 0.0
      %843 = vmatprep.subr.mxu0 0.0
      %844 = vmatpush1.msra.mxu0 0.0
      %845 = vmatprep.subr.mxu0 0.0
      %846 = vmatpush1.msra.mxu0 0.0
      %847 = vmatprep.subr.mxu0 0.0
      %848 = vmatpush1.msra.mxu0 0.0
      %849 = vmatprep.subr.mxu0 0.0
      %850 = vmatpush1.msra.mxu0 0.0
      %851 = vmatprep.subr.mxu0 0.0
      %852 = vmatpush1.msra.mxu0 0.0
      %853 = vmatprep.subr.mxu0 0.0
      %854 = vmatpush1.msra.mxu0 0.0
      %855 = vmatprep.subr.mxu0 0.0
      %856 = vmatpush1.msra.mxu0 0.0
      %857 = vmatprep.subr.mxu0 0.0
      %858 = vmatpush1.msra.mxu0 0.0
      %859 = vmatprep.subr.mxu0 0.0
      %860 = vmatpush1.msra.mxu0 0.0
      %861 = vmatprep.subr.mxu0 0.0
      %862 = vmatpush1.msra.mxu0 0.0
      %863 = vmatprep.subr.mxu0 0.0
      %864 = vmatpush1.msra.mxu0 0.0
      %865 = vmatprep.subr.mxu0 0.0
      %866 = vmatpush1.msra.mxu0 0.0
      %867 = vmatprep.subr.mxu0 0.0
      %868 = vmatpush1.msra.mxu0 0.0
      %869 = vmatprep.subr.mxu0 0.0
      %870 = vmatpush1.msra.mxu0 0.0
      %871 = vmatprep.subr.mxu0 0.0
      %872 = vmatpush1.msra.mxu0 0.0
      %873 = vmatprep.subr.mxu0 0.0
      %874 = vmatpush1.msra.mxu0 0.0
      %875 = vmatprep.subr.mxu0 0.0
      %876 = vmatpush1.msra.mxu0 0.0
      %877 = vmatprep.subr.mxu0 0.0
      %878 = vmatpush1.msra.mxu0 0.0
      %879 = vmatprep.subr.mxu0 0.0
      %880 = vmatpush1.msra.mxu0 0.0
      %881 = vmatprep.subr.mxu0 0.0
      %882 = vmatpush1.msra.mxu0 0.0
      %883 = vmatprep.subr.mxu0 0.0
      %884 = vmatpush1.msra.mxu0 0.0
      %885 = vmatprep.subr.mxu0 0.0
      %886 = vmatpush1.msra.mxu0 0.0
      %887 = vmatprep.subr.mxu0 0.0
      %888 = vmatpush1.msra.mxu0 0.0
      %889 = vmatprep.mubr.f32.mxu0 0.0
      %890 = vmatmul.mubr.f32.gmra.mrb[0].mxu0 %v778
      %v891 = vpop.f32.mrb[0].mxu0
      %v892 = vadd.f32 %v699, %v891
      %v893 = vpop.f32.mrb[0].mxu0
      %894 = vmatprep.mubr.f32.mxu0 0.0
      %895 = vmatmul.mubr.f32.gmra.mrb[0].mxu0 %v781
      %v896 = vpop.f32.mrb[0].mxu0
      %v897 = vadd.f32 %v704, %v896
      %v898 = vpop.f32.mrb[0].mxu0
      %899 = vmatprep.mubr.f32.mxu0 0.0
      %900 = vmatmul.mubr.f32.gmra.mrb[0].mxu0 %v784
      %v901 = vpop.f32.mrb[0].mxu0
      %v902 = vadd.f32 %v709, %v901
      %v903 = vpop.f32.mrb[0].mxu0
      %904 = vmatprep.mubr.f32.mxu0 0.0
      %905 = vmatmul.mubr.f32.gmra.mrb[0].mxu0 %v787
      %v906 = vpop.f32.mrb[0].mxu0
      %v907 = vadd.f32 %v714, %v906
      %v908 = vpop.f32.mrb[0].mxu0
      %909 = vmatprep.mubr.f32.mxu0 0.0
      %910 = vmatmul.mubr.f32.gmra.mrb[0].mxu0 %v790
      %v911 = vpop.f32.mrb[0].mxu0
      %v912 = vadd.f32 %v719, %v911
      %v913 = vpop.f32.mrb[0].mxu0
      %914 = vmatprep.mubr.f32.mxu0 0.0
      %915 = vmatmul.mubr.f32.gmra.mrb[0].mxu0 %v793
      %v916 = vpop.f32.mrb[0].mxu0
      %v917 = vadd.f32 %v724, %v916
      %v918 = vpop.f32.mrb[0].mxu0
      %919 = vmatprep.mubr.f32.mxu0 0.0
      %920 = vmatmul.mubr.f32.gmra.mrb[0].mxu0 %v796
      %v921 = vpop.f32.mrb[0].mxu0
      %v922 = vadd.f32 %v729, %v921
      %v923 = vpop.f32.mrb[0].mxu0
      %924 = vmatprep.mubr.f32.mxu0 0.0
      %925 = vmatmul.mubr.f32.gmra.mrb[0].mxu0 %v799
      %v926 = vpop.f32.mrb[0].mxu0
      %v927 = vadd.f32 %v734, %v926
      %v928 = vpop.f32.mrb[0].mxu0
      %929 = vmatprep.mubr.f32.mxu0 0.0
      %930 = vmatmul.mubr.f32.gmra.mrb[0].mxu0 %v802
      %v931 = vpop.f32.mrb[0].mxu0
      %v932 = vadd.f32 %v739, %v931
      %v933 = vpop.f32.mrb[0].mxu0
      %934 = vmatprep.mubr.f32.mxu0 0.0
      %935 = vmatmul.mubr.f32.gmra.mrb[0].mxu0 %v805
      %v936 = vpop.f32.mrb[0].mxu0
      %v937 = vadd.f32 %v744, %v936
      %v938 = vpop.f32.mrb[0].mxu0
      %939 = vmatprep.mubr.f32.mxu0 0.0
      %940 = vmatmul.mubr.f32.gmra.mrb[0].mxu0 %v808
      %v941 = vpop.f32.mrb[0].mxu0
      %v942 = vadd.f32 %v749, %v941
      %v943 = vpop.f32.mrb[0].mxu0
      %944 = vmatprep.mubr.f32.mxu0 0.0
      %945 = vmatmul.mubr.f32.gmra.mrb[0].mxu0 %v811
      %v946 = vpop.f32.mrb[0].mxu0
      %v947 = vadd.f32 %v754, %v946
      %v948 = vpop.f32.mrb[0].mxu0
      %949 = vmatprep.mubr.f32.mxu0 0.0
      %950 = vmatmul.mubr.f32.gmra.mrb[0].mxu0 %v814
      %v951 = vpop.f32.mrb[0].mxu0
      %v952 = vadd.f32 %v759, %v951
      %v953 = vpop.f32.mrb[0].mxu0
      %954 = vmatprep.mubr.f32.mxu0 0.0
      %955 = vmatmul.mubr.f32.gmra.mrb[0].mxu0 %v817
      %v956 = vpop.f32.mrb[0].mxu0
      %v957 = vadd.f32 %v764, %v956
      %v958 = vpop.f32.mrb[0].mxu0
      %959 = vmatprep.mubr.f32.mxu0 0.0
      %960 = vmatmul.mubr.f32.gmra.mrb[0].mxu0 %v820
      %v961 = vpop.f32.mrb[0].mxu0
      %v962 = vadd.f32 %v769, %v961
      %v963 = vpop.f32.mrb[0].mxu0
      %964 = vmatprep.mubr.f32.mxu0 0.0
      %965 = vmatmul.mubr.f32.gmra.mrb[0].mxu0 %v823
      %v966 = vpop.f32.mrb[0].mxu0
      %v967 = vadd.f32 %v774, %v966
      %v968 = vpop.f32.mrb[0].mxu0
      %969 = vdwg.mxu0
      %v970 = vld [vmem:[#allocation2 + $0x4] sm:$0xff]
      %v971 = vld [vmem:[#allocation2 + $0xc] sm:$0xff]
      %v972 = vld [vmem:[#allocation2 + $0x1c] sm:$0xff]
      %v973 = vld [vmem:[#allocation2 + $0x24] sm:$0xff]
      %v974 = vld [vmem:[#allocation2 + $0x34] sm:$0xff]
      %v975 = vld [vmem:[#allocation2 + $0x3c] sm:$0xff]
      %v976 = vld [vmem:[#allocation2 + $0x4c] sm:$0xff]
      %v977 = vld [vmem:[#allocation2 + $0x54] sm:$0xff]
      %v978 = vld [vmem:[#allocation2 + $0x64] sm:$0xff]
      %v979 = vld [vmem:[#allocation2 + $0x6c] sm:$0xff]
      %v980 = vld [vmem:[#allocation2 + $0x7c] sm:$0xff]
      %v981 = vld [vmem:[#allocation2 + $0x84] sm:$0xff]
      %v982 = vld [vmem:[#allocation2 + $0x94] sm:$0xff]
      %v983 = vld [vmem:[#allocation2 + $0x9c] sm:$0xff]
      %v984 = vld [vmem:[#allocation2 + $0xac] sm:$0xff]
      %v985 = vld [vmem:[#allocation2 + $0xb4] sm:$0xff]
      %s986 = scalar_lea.vmem %s3, 16
      %v987 = vld [vmem:[%s986] sm:$0xff]
      %v989 = vsel %vm494, %v970, 0
      %v992 = vsel %vm494, %v971, 0
      %v995 = vsel %vm494, %v972, 0
      %v998 = vsel %vm494, %v973, 0
      %v1001 = vsel %vm494, %v974, 0
      %v1004 = vsel %vm494, %v975, 0
      %v1007 = vsel %vm494, %v976, 0
      %v1010 = vsel %vm494, %v977, 0
      %v1013 = vsel %vm494, %v978, 0
      %v1016 = vsel %vm494, %v979, 0
      %v1019 = vsel %vm494, %v980, 0
      %v1022 = vsel %vm494, %v981, 0
      %v1025 = vsel %vm494, %v982, 0
      %v1028 = vsel %vm494, %v983, 0
      %v1031 = vsel %vm494, %v984, 0
      %v1034 = vsel %vm494, %v985, 0
      %1036 = vmatprep.subr.mxu0 0.0
      %1037 = vmatpush1.msra.mxu0 %v987
      %1038 = vmatprep.subr.mxu0 0.0
      %1039 = vmatpush1.msra.mxu0 0.0
      %1040 = vmatprep.subr.mxu0 0.0
      %1041 = vmatpush1.msra.mxu0 0.0
      %1042 = vmatprep.subr.mxu0 0.0
      %1043 = vmatpush1.msra.mxu0 0.0
      %1044 = vmatprep.subr.mxu0 0.0
      %1045 = vmatpush1.msra.mxu0 0.0
      %1046 = vmatprep.subr.mxu0 0.0
      %1047 = vmatpush1.msra.mxu0 0.0
      %1048 = vmatprep.subr.mxu0 0.0
      %1049 = vmatpush1.msra.mxu0 0.0
      %1050 = vmatprep.subr.mxu0 0.0
      %1051 = vmatpush1.msra.mxu0 0.0
      %1052 = vmatprep.subr.mxu0 0.0
      %1053 = vmatpush1.msra.mxu0 0.0
      %1054 = vmatprep.subr.mxu0 0.0
      %1055 = vmatpush1.msra.mxu0 0.0
      %1056 = vmatprep.subr.mxu0 0.0
      %1057 = vmatpush1.msra.mxu0 0.0
      %1058 = vmatprep.subr.mxu0 0.0
      %1059 = vmatpush1.msra.mxu0 0.0
      %1060 = vmatprep.subr.mxu0 0.0
      %1061 = vmatpush1.msra.mxu0 0.0
      %1062 = vmatprep.subr.mxu0 0.0
      %1063 = vmatpush1.msra.mxu0 0.0
      %1064 = vmatprep.subr.mxu0 0.0
      %1065 = vmatpush1.msra.mxu0 0.0
      %1066 = vmatprep.subr.mxu0 0.0
      %1067 = vmatpush1.msra.mxu0 0.0
      %1068 = vmatprep.subr.mxu0 0.0
      %1069 = vmatpush1.msra.mxu0 0.0
      %1070 = vmatprep.subr.mxu0 0.0
      %1071 = vmatpush1.msra.mxu0 0.0
      %1072 = vmatprep.subr.mxu0 0.0
      %1073 = vmatpush1.msra.mxu0 0.0
      %1074 = vmatprep.subr.mxu0 0.0
      %1075 = vmatpush1.msra.mxu0 0.0
      %1076 = vmatprep.subr.mxu0 0.0
      %1077 = vmatpush1.msra.mxu0 0.0
      %1078 = vmatprep.subr.mxu0 0.0
      %1079 = vmatpush1.msra.mxu0 0.0
      %1080 = vmatprep.subr.mxu0 0.0
      %1081 = vmatpush1.msra.mxu0 0.0
      %1082 = vmatprep.subr.mxu0 0.0
      %1083 = vmatpush1.msra.mxu0 0.0
      %1084 = vmatprep.subr.mxu0 0.0
      %1085 = vmatpush1.msra.mxu0 0.0
      %1086 = vmatprep.subr.mxu0 0.0
      %1087 = vmatpush1.msra.mxu0 0.0
      %1088 = vmatprep.subr.mxu0 0.0
      %1089 = vmatpush1.msra.mxu0 0.0
      %1090 = vmatprep.subr.mxu0 0.0
      %1091 = vmatpush1.msra.mxu0 0.0
      %1092 = vmatprep.subr.mxu0 0.0
      %1093 = vmatpush1.msra.mxu0 0.0
      %1094 = vmatprep.subr.mxu0 0.0
      %1095 = vmatpush1.msra.mxu0 0.0
      %1096 = vmatprep.subr.mxu0 0.0
      %1097 = vmatpush1.msra.mxu0 0.0
      %1098 = vmatprep.subr.mxu0 0.0
      %1099 = vmatpush1.msra.mxu0 0.0
      %1100 = vmatprep.mubr.f32.mxu0 0.0
      %1101 = vmatmul.mubr.f32.gmra.mrb[0].mxu0 %v989
      %v1102 = vpop.f32.mrb[0].mxu0
      %v1103 = vadd.f32 0.0, %v1102
      %v1104 = vpop.f32.mrb[0].mxu0
      %1105 = vmatprep.mubr.f32.mxu0 0.0
      %1106 = vmatmul.mubr.f32.gmra.mrb[0].mxu0 %v992
      %v1107 = vpop.f32.mrb[0].mxu0
      %v1108 = vadd.f32 0.0, %v1107
      %v1109 = vpop.f32.mrb[0].mxu0
      %1110 = vmatprep.mubr.f32.mxu0 0.0
      %1111 = vmatmul.mubr.f32.gmra.mrb[0].mxu0 %v995
      %v1112 = vpop.f32.mrb[0].mxu0
      %v1113 = vadd.f32 0.0, %v1112
      %v1114 = vpop.f32.mrb[0].mxu0
      %1115 = vmatprep.mubr.f32.mxu0 0.0
      %1116 = vmatmul.mubr.f32.gmra.mrb[0].mxu0 %v998
      %v1117 = vpop.f32.mrb[0].mxu0
      %v1118 = vadd.f32 0.0, %v1117
      %v1119 = vpop.f32.mrb[0].mxu0
      %1120 = vmatprep.mubr.f32.mxu0 0.0
      %1121 = vmatmul.mubr.f32.gmra.mrb[0].mxu0 %v1001
      %v1122 = vpop.f32.mrb[0].mxu0
      %v1123 = vadd.f32 0.0, %v1122
      %v1124 = vpop.f32.mrb[0].mxu0
      %1125 = vmatprep.mubr.f32.mxu0 0.0
      %1126 = vmatmul.mubr.f32.gmra.mrb[0].mxu0 %v1004
      %v1127 = vpop.f32.mrb[0].mxu0
      %v1128 = vadd.f32 0.0, %v1127
      %v1129 = vpop.f32.mrb[0].mxu0
      %1130 = vmatprep.mubr.f32.mxu0 0.0
      %1131 = vmatmul.mubr.f32.gmra.mrb[0].mxu0 %v1007
      %v1132 = vpop.f32.mrb[0].mxu0
      %v1133 = vadd.f32 0.0, %v1132
      %v1134 = vpop.f32.mrb[0].mxu0
      %1135 = vmatprep.mubr.f32.mxu0 0.0
      %1136 = vmatmul.mubr.f32.gmra.mrb[0].mxu0 %v1010
      %v1137 = vpop.f32.mrb[0].mxu0
      %v1138 = vadd.f32 0.0, %v1137
      %v1139 = vpop.f32.mrb[0].mxu0
      %1140 = vmatprep.mubr.f32.mxu0 0.0
      %1141 = vmatmul.mubr.f32.gmra.mrb[0].mxu0 %v1013
      %v1142 = vpop.f32.mrb[0].mxu0
      %v1143 = vadd.f32 0.0, %v1142
      %v1144 = vpop.f32.mrb[0].mxu0
      %1145 = vmatprep.mubr.f32.mxu0 0.0
      %1146 = vmatmul.mubr.f32.gmra.mrb[0].mxu0 %v1016
      %v1147 = vpop.f32.mrb[0].mxu0
      %v1148 = vadd.f32 0.0, %v1147
      %v1149 = vpop.f32.mrb[0].mxu0
      %1150 = vmatprep.mubr.f32.mxu0 0.0
      %1151 = vmatmul.mubr.f32.gmra.mrb[0].mxu0 %v1019
      %v1152 = vpop.f32.mrb[0].mxu0
      %v1153 = vadd.f32 0.0, %v1152
      %v1154 = vpop.f32.mrb[0].mxu0
      %1155 = vmatprep.mubr.f32.mxu0 0.0
      %1156 = vmatmul.mubr.f32.gmra.mrb[0].mxu0 %v1022
      %v1157 = vpop.f32.mrb[0].mxu0
      %v1158 = vadd.f32 0.0, %v1157
      %v1159 = vpop.f32.mrb[0].mxu0
      %1160 = vmatprep.mubr.f32.mxu0 0.0
      %1161 = vmatmul.mubr.f32.gmra.mrb[0].mxu0 %v1025
      %v1162 = vpop.f32.mrb[0].mxu0
      %v1163 = vadd.f32 0.0, %v1162
      %v1164 = vpop.f32.mrb[0].mxu0
      %1165 = vmatprep.mubr.f32.mxu0 0.0
      %1166 = vmatmul.mubr.f32.gmra.mrb[0].mxu0 %v1028
      %v1167 = vpop.f32.mrb[0].mxu0
      %v1168 = vadd.f32 0.0, %v1167
      %v1169 = vpop.f32.mrb[0].mxu0
      %1170 = vmatprep.mubr.f32.mxu0 0.0
      %1171 = vmatmul.mubr.f32.gmra.mrb[0].mxu0 %v1031
      %v1172 = vpop.f32.mrb[0].mxu0
      %v1173 = vadd.f32 0.0, %v1172
      %v1174 = vpop.f32.mrb[0].mxu0
      %1175 = vmatprep.mubr.f32.mxu0 0.0
      %1176 = vmatmul.mubr.f32.gmra.mrb[0].mxu0 %v1034
      %v1177 = vpop.f32.mrb[0].mxu0
      %v1178 = vadd.f32 0.0, %v1177
      %v1179 = vpop.f32.mrb[0].mxu0
      %1180 = vdwg.mxu0
      %v1181 = vadd.f32 %v892, %v1103
      %v1182 = vadd.f32 %v897, %v1108
      %v1183 = vadd.f32 %v902, %v1113
      %v1184 = vadd.f32 %v907, %v1118
      %v1185 = vadd.f32 %v912, %v1123
      %v1186 = vadd.f32 %v917, %v1128
      %v1187 = vadd.f32 %v922, %v1133
      %v1188 = vadd.f32 %v927, %v1138
      %v1189 = vadd.f32 %v932, %v1143
      %v1190 = vadd.f32 %v937, %v1148
      %v1191 = vadd.f32 %v942, %v1153
      %v1192 = vadd.f32 %v947, %v1158
      %v1193 = vadd.f32 %v952, %v1163
      %v1194 = vadd.f32 %v957, %v1168
      %v1195 = vadd.f32 %v962, %v1173
      %v1196 = vadd.f32 %v967, %v1178
      %v1197 = vld [vmem:[%s515] sm:$0xff]
      %v1198 = vld [vmem:[%s515 + $0x8] sm:$0xff]
      %v1199 = vld [vmem:[%s515 + $0x18] sm:$0xff]
      %v1200 = vld [vmem:[%s515 + $0x20] sm:$0xff]
      %v1201 = vld [vmem:[%s515 + $0x30] sm:$0xff]
      %v1202 = vld [vmem:[%s515 + $0x38] sm:$0xff]
      %v1203 = vld [vmem:[%s515 + $0x48] sm:$0xff]
      %v1204 = vld [vmem:[%s515 + $0x50] sm:$0xff]
      %v1205 = vld [vmem:[%s515 + $0x60] sm:$0xff]
      %v1206 = vld [vmem:[%s515 + $0x68] sm:$0xff]
      %v1207 = vld [vmem:[%s515 + $0x78] sm:$0xff]
      %v1208 = vld [vmem:[%s515 + $0x80] sm:$0xff]
      %v1209 = vld [vmem:[%s515 + $0x90] sm:$0xff]
      %v1210 = vld [vmem:[%s515 + $0x98] sm:$0xff]
      %v1211 = vld [vmem:[%s515 + $0xa8] sm:$0xff]
      %v1212 = vld [vmem:[%s515 + $0xb0] sm:$0xff]
      %s1213 = scalar_lea.vmem %s3, 24
      %v1214 = vld [vmem:[%s1213] sm:$0xff]
      %v1216 = vsel %vm494, %v1197, 0
      %v1219 = vsel %vm494, %v1198, 0
      %v1222 = vsel %vm494, %v1199, 0
      %v1225 = vsel %vm494, %v1200, 0
      %v1228 = vsel %vm494, %v1201, 0
      %v1231 = vsel %vm494, %v1202, 0
      %v1234 = vsel %vm494, %v1203, 0
      %v1237 = vsel %vm494, %v1204, 0
      %v1240 = vsel %vm494, %v1205, 0
      %v1243 = vsel %vm494, %v1206, 0
      %v1246 = vsel %vm494, %v1207, 0
      %v1249 = vsel %vm494, %v1208, 0
      %v1252 = vsel %vm494, %v1209, 0
      %v1255 = vsel %vm494, %v1210, 0
      %v1258 = vsel %vm494, %v1211, 0
      %v1261 = vsel %vm494, %v1212, 0
      %1263 = vmatprep.subr.mxu0 0.0
      %1264 = vmatpush1.msra.mxu0 %v1214
      %1265 = vmatprep.subr.mxu0 0.0
      %1266 = vmatpush1.msra.mxu0 0.0
      %1267 = vmatprep.subr.mxu0 0.0
      %1268 = vmatpush1.msra.mxu0 0.0
      %1269 = vmatprep.subr.mxu0 0.0
      %1270 = vmatpush1.msra.mxu0 0.0
      %1271 = vmatprep.subr.mxu0 0.0
      %1272 = vmatpush1.msra.mxu0 0.0
      %1273 = vmatprep.subr.mxu0 0.0
      %1274 = vmatpush1.msra.mxu0 0.0
      %1275 = vmatprep.subr.mxu0 0.0
      %1276 = vmatpush1.msra.mxu0 0.0
      %1277 = vmatprep.subr.mxu0 0.0
      %1278 = vmatpush1.msra.mxu0 0.0
      %1279 = vmatprep.subr.mxu0 0.0
      %1280 = vmatpush1.msra.mxu0 0.0
      %1281 = vmatprep.subr.mxu0 0.0
      %1282 = vmatpush1.msra.mxu0 0.0
      %1283 = vmatprep.subr.mxu0 0.0
      %1284 = vmatpush1.msra.mxu0 0.0
      %1285 = vmatprep.subr.mxu0 0.0
      %1286 = vmatpush1.msra.mxu0 0.0
      %1287 = vmatprep.subr.mxu0 0.0
      %1288 = vmatpush1.msra.mxu0 0.0
      %1289 = vmatprep.subr.mxu0 0.0
      %1290 = vmatpush1.msra.mxu0 0.0
      %1291 = vmatprep.subr.mxu0 0.0
      %1292 = vmatpush1.msra.mxu0 0.0
      %1293 = vmatprep.subr.mxu0 0.0
      %1294 = vmatpush1.msra.mxu0 0.0
      %1295 = vmatprep.subr.mxu0 0.0
      %1296 = vmatpush1.msra.mxu0 0.0
      %1297 = vmatprep.subr.mxu0 0.0
      %1298 = vmatpush1.msra.mxu0 0.0
      %1299 = vmatprep.subr.mxu0 0.0
      %1300 = vmatpush1.msra.mxu0 0.0
      %1301 = vmatprep.subr.mxu0 0.0
      %1302 = vmatpush1.msra.mxu0 0.0
      %1303 = vmatprep.subr.mxu0 0.0
      %1304 = vmatpush1.msra.mxu0 0.0
      %1305 = vmatprep.subr.mxu0 0.0
      %1306 = vmatpush1.msra.mxu0 0.0
      %1307 = vmatprep.subr.mxu0 0.0
      %1308 = vmatpush1.msra.mxu0 0.0
      %1309 = vmatprep.subr.mxu0 0.0
      %1310 = vmatpush1.msra.mxu0 0.0
      %1311 = vmatprep.subr.mxu0 0.0
      %1312 = vmatpush1.msra.mxu0 0.0
      %1313 = vmatprep.subr.mxu0 0.0
      %1314 = vmatpush1.msra.mxu0 0.0
      %1315 = vmatprep.subr.mxu0 0.0
      %1316 = vmatpush1.msra.mxu0 0.0
      %1317 = vmatprep.subr.mxu0 0.0
      %1318 = vmatpush1.msra.mxu0 0.0
      %1319 = vmatprep.subr.mxu0 0.0
      %1320 = vmatpush1.msra.mxu0 0.0
      %1321 = vmatprep.subr.mxu0 0.0
      %1322 = vmatpush1.msra.mxu0 0.0
      %1323 = vmatprep.subr.mxu0 0.0
      %1324 = vmatpush1.msra.mxu0 0.0
      %1325 = vmatprep.subr.mxu0 0.0
      %1326 = vmatpush1.msra.mxu0 0.0
      %1327 = vmatprep.mubr.f32.mxu0 0.0
      %1328 = vmatmul.mubr.f32.gmra.mrb[0].mxu0 %v1216
      %v1329 = vpop.f32.mrb[0].mxu0
      %v1330 = vadd.f32 0.0, %v1329
      %v1331 = vpop.f32.mrb[0].mxu0
      %1332 = vmatprep.mubr.f32.mxu0 0.0
      %1333 = vmatmul.mubr.f32.gmra.mrb[0].mxu0 %v1219
      %v1334 = vpop.f32.mrb[0].mxu0
      %v1335 = vadd.f32 0.0, %v1334
      %v1336 = vpop.f32.mrb[0].mxu0
      %1337 = vmatprep.mubr.f32.mxu0 0.0
      %1338 = vmatmul.mubr.f32.gmra.mrb[0].mxu0 %v1222
      %v1339 = vpop.f32.mrb[0].mxu0
      %v1340 = vadd.f32 0.0, %v1339
      %v1341 = vpop.f32.mrb[0].mxu0
      %1342 = vmatprep.mubr.f32.mxu0 0.0
      %1343 = vmatmul.mubr.f32.gmra.mrb[0].mxu0 %v1225
      %v1344 = vpop.f32.mrb[0].mxu0
      %v1345 = vadd.f32 0.0, %v1344
      %v1346 = vpop.f32.mrb[0].mxu0
      %1347 = vmatprep.mubr.f32.mxu0 0.0
      %1348 = vmatmul.mubr.f32.gmra.mrb[0].mxu0 %v1228
      %v1349 = vpop.f32.mrb[0].mxu0
      %v1350 = vadd.f32 0.0, %v1349
      %v1351 = vpop.f32.mrb[0].mxu0
      %1352 = vmatprep.mubr.f32.mxu0 0.0
      %1353 = vmatmul.mubr.f32.gmra.mrb[0].mxu0 %v1231
      %v1354 = vpop.f32.mrb[0].mxu0
      %v1355 = vadd.f32 0.0, %v1354
      %v1356 = vpop.f32.mrb[0].mxu0
      %1357 = vmatprep.mubr.f32.mxu0 0.0
      %1358 = vmatmul.mubr.f32.gmra.mrb[0].mxu0 %v1234
      %v1359 = vpop.f32.mrb[0].mxu0
      %v1360 = vadd.f32 0.0, %v1359
      %v1361 = vpop.f32.mrb[0].mxu0
      %1362 = vmatprep.mubr.f32.mxu0 0.0
      %1363 = vmatmul.mubr.f32.gmra.mrb[0].mxu0 %v1237
      %v1364 = vpop.f32.mrb[0].mxu0
      %v1365 = vadd.f32 0.0, %v1364
      %v1366 = vpop.f32.mrb[0].mxu0
      %1367 = vmatprep.mubr.f32.mxu0 0.0
      %1368 = vmatmul.mubr.f32.gmra.mrb[0].mxu0 %v1240
      %v1369 = vpop.f32.mrb[0].mxu0
      %v1370 = vadd.f32 0.0, %v1369
      %v1371 = vpop.f32.mrb[0].mxu0
      %1372 = vmatprep.mubr.f32.mxu0 0.0
      %1373 = vmatmul.mubr.f32.gmra.mrb[0].mxu0 %v1243
      %v1374 = vpop.f32.mrb[0].mxu0
      %v1375 = vadd.f32 0.0, %v1374
      %v1376 = vpop.f32.mrb[0].mxu0
      %1377 = vmatprep.mubr.f32.mxu0 0.0
      %1378 = vmatmul.mubr.f32.gmra.mrb[0].mxu0 %v1246
      %v1379 = vpop.f32.mrb[0].mxu0
      %v1380 = vadd.f32 0.0, %v1379
      %v1381 = vpop.f32.mrb[0].mxu0
      %1382 = vmatprep.mubr.f32.mxu0 0.0
      %1383 = vmatmul.mubr.f32.gmra.mrb[0].mxu0 %v1249
      %v1384 = vpop.f32.mrb[0].mxu0
      %v1385 = vadd.f32 0.0, %v1384
      %v1386 = vpop.f32.mrb[0].mxu0
      %1387 = vmatprep.mubr.f32.mxu0 0.0
      %1388 = vmatmul.mubr.f32.gmra.mrb[0].mxu0 %v1252
      %v1389 = vpop.f32.mrb[0].mxu0
      %v1390 = vadd.f32 0.0, %v1389
      %v1391 = vpop.f32.mrb[0].mxu0
      %1392 = vmatprep.mubr.f32.mxu0 0.0
      %1393 = vmatmul.mubr.f32.gmra.mrb[0].mxu0 %v1255
      %v1394 = vpop.f32.mrb[0].mxu0
      %v1395 = vadd.f32 0.0, %v1394
      %v1396 = vpop.f32.mrb[0].mxu0
      %1397 = vmatprep.mubr.f32.mxu0 0.0
      %1398 = vmatmul.mubr.f32.gmra.mrb[0].mxu0 %v1258
      %v1399 = vpop.f32.mrb[0].mxu0
      %v1400 = vadd.f32 0.0, %v1399
      %v1401 = vpop.f32.mrb[0].mxu0
      %1402 = vmatprep.mubr.f32.mxu0 0.0
      %1403 = vmatmul.mubr.f32.gmra.mrb[0].mxu0 %v1261
      %v1404 = vpop.f32.mrb[0].mxu0
      %v1405 = vadd.f32 0.0, %v1404
      %v1406 = vpop.f32.mrb[0].mxu0
      %1407 = vdwg.mxu0
      %v1408 = vadd.f32 %v1181, %v1330
      %v1409 = vadd.f32 %v1182, %v1335
      %v1410 = vadd.f32 %v1183, %v1340
      %v1411 = vadd.f32 %v1184, %v1345
      %v1412 = vadd.f32 %v1185, %v1350
      %v1413 = vadd.f32 %v1186, %v1355
      %v1414 = vadd.f32 %v1187, %v1360
      %v1415 = vadd.f32 %v1188, %v1365
      %v1416 = vadd.f32 %v1189, %v1370
      %v1417 = vadd.f32 %v1190, %v1375
      %v1418 = vadd.f32 %v1191, %v1380
      %v1419 = vadd.f32 %v1192, %v1385
      %v1420 = vadd.f32 %v1193, %v1390
      %v1421 = vadd.f32 %v1194, %v1395
      %v1422 = vadd.f32 %v1195, %v1400
      %v1423 = vadd.f32 %v1196, %v1405
      %v1424 = vld [vmem:[%s515 + $0x2] sm:$0xff]
      %v1425 = vld [vmem:[%s515 + $0xa] sm:$0xff]
      %v1426 = vld [vmem:[%s515 + $0x1a] sm:$0xff]
      %v1427 = vld [vmem:[%s515 + $0x22] sm:$0xff]
      %v1428 = vld [vmem:[%s515 + $0x32] sm:$0xff]
      %v1429 = vld [vmem:[%s515 + $0x3a] sm:$0xff]
      %v1430 = vld [vmem:[%s515 + $0x4a] sm:$0xff]
      %v1431 = vld [vmem:[%s515 + $0x52] sm:$0xff]
      %v1432 = vld [vmem:[%s515 + $0x62] sm:$0xff]
      %v1433 = vld [vmem:[%s515 + $0x6a] sm:$0xff]
      %v1434 = vld [vmem:[%s515 + $0x7a] sm:$0xff]
      %v1435 = vld [vmem:[%s515 + $0x82] sm:$0xff]
      %v1436 = vld [vmem:[%s515 + $0x92] sm:$0xff]
      %v1437 = vld [vmem:[%s515 + $0x9a] sm:$0xff]
      %v1438 = vld [vmem:[%s515 + $0xaa] sm:$0xff]
      %v1439 = vld [vmem:[%s515 + $0xb2] sm:$0xff]
      %s1440 = scalar_lea.vmem %s3, 32
      %v1441 = vld [vmem:[%s1440] sm:$0xff]
      %v1443 = vsel %vm494, %v1424, 0
      %v1446 = vsel %vm494, %v1425, 0
      %v1449 = vsel %vm494, %v1426, 0
      %v1452 = vsel %vm494, %v1427, 0
      %v1455 = vsel %vm494, %v1428, 0
      %v1458 = vsel %vm494, %v1429, 0
      %v1461 = vsel %vm494, %v1430, 0
      %v1464 = vsel %vm494, %v1431, 0
      %v1467 = vsel %vm494, %v1432, 0
      %v1470 = vsel %vm494, %v1433, 0
      %v1473 = vsel %vm494, %v1434, 0
      %v1476 = vsel %vm494, %v1435, 0
      %v1479 = vsel %vm494, %v1436, 0
      %v1482 = vsel %vm494, %v1437, 0
      %v1485 = vsel %vm494, %v1438, 0
      %v1488 = vsel %vm494, %v1439, 0
      %1490 = vmatprep.subr.mxu0 0.0
      %1491 = vmatpush1.msra.mxu0 %v1441
      %1492 = vmatprep.subr.mxu0 0.0
      %1493 = vmatpush1.msra.mxu0 0.0
      %1494 = vmatprep.subr.mxu0 0.0
      %1495 = vmatpush1.msra.mxu0 0.0
      %1496 = vmatprep.subr.mxu0 0.0
      %1497 = vmatpush1.msra.mxu0 0.0
      %1498 = vmatprep.subr.mxu0 0.0
      %1499 = vmatpush1.msra.mxu0 0.0
      %1500 = vmatprep.subr.mxu0 0.0
      %1501 = vmatpush1.msra.mxu0 0.0
      %1502 = vmatprep.subr.mxu0 0.0
      %1503 = vmatpush1.msra.mxu0 0.0
      %1504 = vmatprep.subr.mxu0 0.0
      %1505 = vmatpush1.msra.mxu0 0.0
      %1506 = vmatprep.subr.mxu0 0.0
      %1507 = vmatpush1.msra.mxu0 0.0
      %1508 = vmatprep.subr.mxu0 0.0
      %1509 = vmatpush1.msra.mxu0 0.0
      %1510 = vmatprep.subr.mxu0 0.0
      %1511 = vmatpush1.msra.mxu0 0.0
      %1512 = vmatprep.subr.mxu0 0.0
      %1513 = vmatpush1.msra.mxu0 0.0
      %1514 = vmatprep.subr.mxu0 0.0
      %1515 = vmatpush1.msra.mxu0 0.0
      %1516 = vmatprep.subr.mxu0 0.0
      %1517 = vmatpush1.msra.mxu0 0.0
      %1518 = vmatprep.subr.mxu0 0.0
      %1519 = vmatpush1.msra.mxu0 0.0
      %1520 = vmatprep.subr.mxu0 0.0
      %1521 = vmatpush1.msra.mxu0 0.0
      %1522 = vmatprep.subr.mxu0 0.0
      %1523 = vmatpush1.msra.mxu0 0.0
      %1524 = vmatprep.subr.mxu0 0.0
      %1525 = vmatpush1.msra.mxu0 0.0
      %1526 = vmatprep.subr.mxu0 0.0
      %1527 = vmatpush1.msra.mxu0 0.0
      %1528 = vmatprep.subr.mxu0 0.0
      %1529 = vmatpush1.msra.mxu0 0.0
      %1530 = vmatprep.subr.mxu0 0.0
      %1531 = vmatpush1.msra.mxu0 0.0
      %1532 = vmatprep.subr.mxu0 0.0
      %1533 = vmatpush1.msra.mxu0 0.0
      %1534 = vmatprep.subr.mxu0 0.0
      %1535 = vmatpush1.msra.mxu0 0.0
      %1536 = vmatprep.subr.mxu0 0.0
      %1537 = vmatpush1.msra.mxu0 0.0
      %1538 = vmatprep.subr.mxu0 0.0
      %1539 = vmatpush1.msra.mxu0 0.0
      %1540 = vmatprep.subr.mxu0 0.0
      %1541 = vmatpush1.msra.mxu0 0.0
      %1542 = vmatprep.subr.mxu0 0.0
      %1543 = vmatpush1.msra.mxu0 0.0
      %1544 = vmatprep.subr.mxu0 0.0
      %1545 = vmatpush1.msra.mxu0 0.0
      %1546 = vmatprep.subr.mxu0 0.0
      %1547 = vmatpush1.msra.mxu0 0.0
      %1548 = vmatprep.subr.mxu0 0.0
      %1549 = vmatpush1.msra.mxu0 0.0
      %1550 = vmatprep.subr.mxu0 0.0
      %1551 = vmatpush1.msra.mxu0 0.0
      %1552 = vmatprep.subr.mxu0 0.0
      %1553 = vmatpush1.msra.mxu0 0.0
      %1554 = vmatprep.mubr.f32.mxu0 0.0
      %1555 = vmatmul.mubr.f32.gmra.mrb[0].mxu0 %v1443
      %v1556 = vpop.f32.mrb[0].mxu0
      %v1557 = vadd.f32 0.0, %v1556
      %v1558 = vpop.f32.mrb[0].mxu0
      %1559 = vmatprep.mubr.f32.mxu0 0.0
      %1560 = vmatmul.mubr.f32.gmra.mrb[0].mxu0 %v1446
      %v1561 = vpop.f32.mrb[0].mxu0
      %v1562 = vadd.f32 0.0, %v1561
      %v1563 = vpop.f32.mrb[0].mxu0
      %1564 = vmatprep.mubr.f32.mxu0 0.0
      %1565 = vmatmul.mubr.f32.gmra.mrb[0].mxu0 %v1449
      %v1566 = vpop.f32.mrb[0].mxu0
      %v1567 = vadd.f32 0.0, %v1566
      %v1568 = vpop.f32.mrb[0].mxu0
      %1569 = vmatprep.mubr.f32.mxu0 0.0
      %1570 = vmatmul.mubr.f32.gmra.mrb[0].mxu0 %v1452
      %v1571 = vpop.f32.mrb[0].mxu0
      %v1572 = vadd.f32 0.0, %v1571
      %v1573 = vpop.f32.mrb[0].mxu0
      %1574 = vmatprep.mubr.f32.mxu0 0.0
      %1575 = vmatmul.mubr.f32.gmra.mrb[0].mxu0 %v1455
      %v1576 = vpop.f32.mrb[0].mxu0
      %v1577 = vadd.f32 0.0, %v1576
      %v1578 = vpop.f32.mrb[0].mxu0
      %1579 = vmatprep.mubr.f32.mxu0 0.0
      %1580 = vmatmul.mubr.f32.gmra.mrb[0].mxu0 %v1458
      %v1581 = vpop.f32.mrb[0].mxu0
      %v1582 = vadd.f32 0.0, %v1581
      %v1583 = vpop.f32.mrb[0].mxu0
      %1584 = vmatprep.mubr.f32.mxu0 0.0
      %1585 = vmatmul.mubr.f32.gmra.mrb[0].mxu0 %v1461
      %v1586 = vpop.f32.mrb[0].mxu0
      %v1587 = vadd.f32 0.0, %v1586
      %v1588 = vpop.f32.mrb[0].mxu0
      %1589 = vmatprep.mubr.f32.mxu0 0.0
      %1590 = vmatmul.mubr.f32.gmra.mrb[0].mxu0 %v1464
      %v1591 = vpop.f32.mrb[0].mxu0
      %v1592 = vadd.f32 0.0, %v1591
      %v1593 = vpop.f32.mrb[0].mxu0
      %1594 = vmatprep.mubr.f32.mxu0 0.0
      %1595 = vmatmul.mubr.f32.gmra.mrb[0].mxu0 %v1467
      %v1596 = vpop.f32.mrb[0].mxu0
      %v1597 = vadd.f32 0.0, %v1596
      %v1598 = vpop.f32.mrb[0].mxu0
      %1599 = vmatprep.mubr.f32.mxu0 0.0
      %1600 = vmatmul.mubr.f32.gmra.mrb[0].mxu0 %v1470
      %v1601 = vpop.f32.mrb[0].mxu0
      %v1602 = vadd.f32 0.0, %v1601
      %v1603 = vpop.f32.mrb[0].mxu0
      %1604 = vmatprep.mubr.f32.mxu0 0.0
      %1605 = vmatmul.mubr.f32.gmra.mrb[0].mxu0 %v1473
      %v1606 = vpop.f32.mrb[0].mxu0
      %v1607 = vadd.f32 0.0, %v1606
      %v1608 = vpop.f32.mrb[0].mxu0
      %1609 = vmatprep.mubr.f32.mxu0 0.0
      %1610 = vmatmul.mubr.f32.gmra.mrb[0].mxu0 %v1476
      %v1611 = vpop.f32.mrb[0].mxu0
      %v1612 = vadd.f32 0.0, %v1611
      %v1613 = vpop.f32.mrb[0].mxu0
      %1614 = vmatprep.mubr.f32.mxu0 0.0
      %1615 = vmatmul.mubr.f32.gmra.mrb[0].mxu0 %v1479
      %v1616 = vpop.f32.mrb[0].mxu0
      %v1617 = vadd.f32 0.0, %v1616
      %v1618 = vpop.f32.mrb[0].mxu0
      %1619 = vmatprep.mubr.f32.mxu0 0.0
      %1620 = vmatmul.mubr.f32.gmra.mrb[0].mxu0 %v1482
      %v1621 = vpop.f32.mrb[0].mxu0
      %v1622 = vadd.f32 0.0, %v1621
      %v1623 = vpop.f32.mrb[0].mxu0
      %1624 = vmatprep.mubr.f32.mxu0 0.0
      %1625 = vmatmul.mubr.f32.gmra.mrb[0].mxu0 %v1485
      %v1626 = vpop.f32.mrb[0].mxu0
      %v1627 = vadd.f32 0.0, %v1626
      %v1628 = vpop.f32.mrb[0].mxu0
      %1629 = vmatprep.mubr.f32.mxu0 0.0
      %1630 = vmatmul.mubr.f32.gmra.mrb[0].mxu0 %v1488
      %v1631 = vpop.f32.mrb[0].mxu0
      %v1632 = vadd.f32 0.0, %v1631
      %v1633 = vpop.f32.mrb[0].mxu0
      %1634 = vdwg.mxu0
      %v1635 = vadd.f32 %v1408, %v1557
      %v1636 = vadd.f32 %v1409, %v1562
      %v1637 = vadd.f32 %v1410, %v1567
      %v1638 = vadd.f32 %v1411, %v1572
      %v1639 = vadd.f32 %v1412, %v1577
      %v1640 = vadd.f32 %v1413, %v1582
      %v1641 = vadd.f32 %v1414, %v1587
      %v1642 = vadd.f32 %v1415, %v1592
      %v1643 = vadd.f32 %v1416, %v1597
      %v1644 = vadd.f32 %v1417, %v1602
      %v1645 = vadd.f32 %v1418, %v1607
      %v1646 = vadd.f32 %v1419, %v1612
      %v1647 = vadd.f32 %v1420, %v1617
      %v1648 = vadd.f32 %v1421, %v1622
      %v1649 = vadd.f32 %v1422, %v1627
      %v1650 = vadd.f32 %v1423, %v1632
      %v1651 = vld [vmem:[%s515 + $0x4] sm:$0xff]
      %v1652 = vld [vmem:[%s515 + $0xc] sm:$0xff]
      %v1653 = vld [vmem:[%s515 + $0x1c] sm:$0xff]
      %v1654 = vld [vmem:[%s515 + $0x24] sm:$0xff]
      %v1655 = vld [vmem:[%s515 + $0x34] sm:$0xff]
      %v1656 = vld [vmem:[%s515 + $0x3c] sm:$0xff]
      %v1657 = vld [vmem:[%s515 + $0x4c] sm:$0xff]
      %v1658 = vld [vmem:[%s515 + $0x54] sm:$0xff]
      %v1659 = vld [vmem:[%s515 + $0x64] sm:$0xff]
      %v1660 = vld [vmem:[%s515 + $0x6c] sm:$0xff]
      %v1661 = vld [vmem:[%s515 + $0x7c] sm:$0xff]
      %v1662 = vld [vmem:[%s515 + $0x84] sm:$0xff]
      %v1663 = vld [vmem:[%s515 + $0x94] sm:$0xff]
      %v1664 = vld [vmem:[%s515 + $0x9c] sm:$0xff]
      %v1665 = vld [vmem:[%s515 + $0xac] sm:$0xff]
      %v1666 = vld [vmem:[%s515 + $0xb4] sm:$0xff]
      %s1667 = scalar_lea.vmem %s3, 40
      %v1668 = vld [vmem:[%s1667] sm:$0xff]
      %v1670 = vsel %vm494, %v1651, 0
      %v1673 = vsel %vm494, %v1652, 0
      %v1676 = vsel %vm494, %v1653, 0
      %v1679 = vsel %vm494, %v1654, 0
      %v1682 = vsel %vm494, %v1655, 0
      %v1685 = vsel %vm494, %v1656, 0
      %v1688 = vsel %vm494, %v1657, 0
      %v1691 = vsel %vm494, %v1658, 0
      %v1694 = vsel %vm494, %v1659, 0
      %v1697 = vsel %vm494, %v1660, 0
      %v1700 = vsel %vm494, %v1661, 0
      %v1703 = vsel %vm494, %v1662, 0
      %v1706 = vsel %vm494, %v1663, 0
      %v1709 = vsel %vm494, %v1664, 0
      %v1712 = vsel %vm494, %v1665, 0
      %v1715 = vsel %vm494, %v1666, 0
      %1717 = vmatprep.subr.mxu0 0.0
      %1718 = vmatpush1.msra.mxu0 %v1668
      %1719 = vmatprep.subr.mxu0 0.0
      %1720 = vmatpush1.msra.mxu0 0.0
      %1721 = vmatprep.subr.mxu0 0.0
      %1722 = vmatpush1.msra.mxu0 0.0
      %1723 = vmatprep.subr.mxu0 0.0
      %1724 = vmatpush1.msra.mxu0 0.0
      %1725 = vmatprep.subr.mxu0 0.0
      %1726 = vmatpush1.msra.mxu0 0.0
      %1727 = vmatprep.subr.mxu0 0.0
      %1728 = vmatpush1.msra.mxu0 0.0
      %1729 = vmatprep.subr.mxu0 0.0
      %1730 = vmatpush1.msra.mxu0 0.0
      %1731 = vmatprep.subr.mxu0 0.0
      %1732 = vmatpush1.msra.mxu0 0.0
      %1733 = vmatprep.subr.mxu0 0.0
      %1734 = vmatpush1.msra.mxu0 0.0
      %1735 = vmatprep.subr.mxu0 0.0
      %1736 = vmatpush1.msra.mxu0 0.0
      %1737 = vmatprep.subr.mxu0 0.0
      %1738 = vmatpush1.msra.mxu0 0.0
      %1739 = vmatprep.subr.mxu0 0.0
      %1740 = vmatpush1.msra.mxu0 0.0
      %1741 = vmatprep.subr.mxu0 0.0
      %1742 = vmatpush1.msra.mxu0 0.0
      %1743 = vmatprep.subr.mxu0 0.0
      %1744 = vmatpush1.msra.mxu0 0.0
      %1745 = vmatprep.subr.mxu0 0.0
      %1746 = vmatpush1.msra.mxu0 0.0
      %1747 = vmatprep.subr.mxu0 0.0
      %1748 = vmatpush1.msra.mxu0 0.0
      %1749 = vmatprep.subr.mxu0 0.0
      %1750 = vmatpush1.msra.mxu0 0.0
      %1751 = vmatprep.subr.mxu0 0.0
      %1752 = vmatpush1.msra.mxu0 0.0
      %1753 = vmatprep.subr.mxu0 0.0
      %1754 = vmatpush1.msra.mxu0 0.0
      %1755 = vmatprep.subr.mxu0 0.0
      %1756 = vmatpush1.msra.mxu0 0.0
      %1757 = vmatprep.subr.mxu0 0.0
      %1758 = vmatpush1.msra.mxu0 0.0
      %1759 = vmatprep.subr.mxu0 0.0
      %1760 = vmatpush1.msra.mxu0 0.0
      %1761 = vmatprep.subr.mxu0 0.0
      %1762 = vmatpush1.msra.mxu0 0.0
      %1763 = vmatprep.subr.mxu0 0.0
      %1764 = vmatpush1.msra.mxu0 0.0
      %1765 = vmatprep.subr.mxu0 0.0
      %1766 = vmatpush1.msra.mxu0 0.0
      %1767 = vmatprep.subr.mxu0 0.0
      %1768 = vmatpush1.msra.mxu0 0.0
      %1769 = vmatprep.subr.mxu0 0.0
      %1770 = vmatpush1.msra.mxu0 0.0
      %1771 = vmatprep.subr.mxu0 0.0
      %1772 = vmatpush1.msra.mxu0 0.0
      %1773 = vmatprep.subr.mxu0 0.0
      %1774 = vmatpush1.msra.mxu0 0.0
      %1775 = vmatprep.subr.mxu0 0.0
      %1776 = vmatpush1.msra.mxu0 0.0
      %1777 = vmatprep.subr.mxu0 0.0
      %1778 = vmatpush1.msra.mxu0 0.0
      %1779 = vmatprep.subr.mxu0 0.0
      %1780 = vmatpush1.msra.mxu0 0.0
      %1781 = vmatprep.mubr.f32.mxu0 0.0
      %1782 = vmatmul.mubr.f32.gmra.mrb[0].mxu0 %v1670
      %v1783 = vpop.f32.mrb[0].mxu0
      %v1784 = vadd.f32 0.0, %v1783
      %v1785 = vpop.f32.mrb[0].mxu0
      %1786 = vmatprep.mubr.f32.mxu0 0.0
      %1787 = vmatmul.mubr.f32.gmra.mrb[0].mxu0 %v1673
      %v1788 = vpop.f32.mrb[0].mxu0
      %v1789 = vadd.f32 0.0, %v1788
      %v1790 = vpop.f32.mrb[0].mxu0
      %1791 = vmatprep.mubr.f32.mxu0 0.0
      %1792 = vmatmul.mubr.f32.gmra.mrb[0].mxu0 %v1676
      %v1793 = vpop.f32.mrb[0].mxu0
      %v1794 = vadd.f32 0.0, %v1793
      %v1795 = vpop.f32.mrb[0].mxu0
      %1796 = vmatprep.mubr.f32.mxu0 0.0
      %1797 = vmatmul.mubr.f32.gmra.mrb[0].mxu0 %v1679
      %v1798 = vpop.f32.mrb[0].mxu0
      %v1799 = vadd.f32 0.0, %v1798
      %v1800 = vpop.f32.mrb[0].mxu0
      %1801 = vmatprep.mubr.f32.mxu0 0.0
      %1802 = vmatmul.mubr.f32.gmra.mrb[0].mxu0 %v1682
      %v1803 = vpop.f32.mrb[0].mxu0
      %v1804 = vadd.f32 0.0, %v1803
      %v1805 = vpop.f32.mrb[0].mxu0
      %1806 = vmatprep.mubr.f32.mxu0 0.0
      %1807 = vmatmul.mubr.f32.gmra.mrb[0].mxu0 %v1685
      %v1808 = vpop.f32.mrb[0].mxu0
      %v1809 = vadd.f32 0.0, %v1808
      %v1810 = vpop.f32.mrb[0].mxu0
      %1811 = vmatprep.mubr.f32.mxu0 0.0
      %1812 = vmatmul.mubr.f32.gmra.mrb[0].mxu0 %v1688
      %v1813 = vpop.f32.mrb[0].mxu0
      %v1814 = vadd.f32 0.0, %v1813
      %v1815 = vpop.f32.mrb[0].mxu0
      %1816 = vmatprep.mubr.f32.mxu0 0.0
      %1817 = vmatmul.mubr.f32.gmra.mrb[0].mxu0 %v1691
      %v1818 = vpop.f32.mrb[0].mxu0
      %v1819 = vadd.f32 0.0, %v1818
      %v1820 = vpop.f32.mrb[0].mxu0
      %1821 = vmatprep.mubr.f32.mxu0 0.0
      %1822 = vmatmul.mubr.f32.gmra.mrb[0].mxu0 %v1694
      %v1823 = vpop.f32.mrb[0].mxu0
      %v1824 = vadd.f32 0.0, %v1823
      %v1825 = vpop.f32.mrb[0].mxu0
      %1826 = vmatprep.mubr.f32.mxu0 0.0
      %1827 = vmatmul.mubr.f32.gmra.mrb[0].mxu0 %v1697
      %v1828 = vpop.f32.mrb[0].mxu0
      %v1829 = vadd.f32 0.0, %v1828
      %v1830 = vpop.f32.mrb[0].mxu0
      %1831 = vmatprep.mubr.f32.mxu0 0.0
      %1832 = vmatmul.mubr.f32.gmra.mrb[0].mxu0 %v1700
      %v1833 = vpop.f32.mrb[0].mxu0
      %v1834 = vadd.f32 0.0, %v1833
      %v1835 = vpop.f32.mrb[0].mxu0
      %1836 = vmatprep.mubr.f32.mxu0 0.0
      %1837 = vmatmul.mubr.f32.gmra.mrb[0].mxu0 %v1703
      %v1838 = vpop.f32.mrb[0].mxu0
      %v1839 = vadd.f32 0.0, %v1838
      %v1840 = vpop.f32.mrb[0].mxu0
      %1841 = vmatprep.mubr.f32.mxu0 0.0
      %1842 = vmatmul.mubr.f32.gmra.mrb[0].mxu0 %v1706
      %v1843 = vpop.f32.mrb[0].mxu0
      %v1844 = vadd.f32 0.0, %v1843
      %v1845 = vpop.f32.mrb[0].mxu0
      %1846 = vmatprep.mubr.f32.mxu0 0.0
      %1847 = vmatmul.mubr.f32.gmra.mrb[0].mxu0 %v1709
      %v1848 = vpop.f32.mrb[0].mxu0
      %v1849 = vadd.f32 0.0, %v1848
      %v1850 = vpop.f32.mrb[0].mxu0
      %1851 = vmatprep.mubr.f32.mxu0 0.0
      %1852 = vmatmul.mubr.f32.gmra.mrb[0].mxu0 %v1712
      %v1853 = vpop.f32.mrb[0].mxu0
      %v1854 = vadd.f32 0.0, %v1853
      %v1855 = vpop.f32.mrb[0].mxu0
      %1856 = vmatprep.mubr.f32.mxu0 0.0
      %1857 = vmatmul.mubr.f32.gmra.mrb[0].mxu0 %v1715
      %v1858 = vpop.f32.mrb[0].mxu0
      %v1859 = vadd.f32 0.0, %v1858
      %v1860 = vpop.f32.mrb[0].mxu0
      %1861 = vdwg.mxu0
      %v1862 = vadd.f32 %v1635, %v1784
      %v1863 = vadd.f32 %v1636, %v1789
      %v1864 = vadd.f32 %v1637, %v1794
      %v1865 = vadd.f32 %v1638, %v1799
      %v1866 = vadd.f32 %v1639, %v1804
      %v1867 = vadd.f32 %v1640, %v1809
      %v1868 = vadd.f32 %v1641, %v1814
      %v1869 = vadd.f32 %v1642, %v1819
      %v1870 = vadd.f32 %v1643, %v1824
      %v1871 = vadd.f32 %v1644, %v1829
      %v1872 = vadd.f32 %v1645, %v1834
      %v1873 = vadd.f32 %v1646, %v1839
      %v1874 = vadd.f32 %v1647, %v1844
      %v1875 = vadd.f32 %v1648, %v1849
      %v1876 = vadd.f32 %v1649, %v1854
      %v1877 = vadd.f32 %v1650, %v1859
      %s1878 = scalar_lea.vmem [#allocation2], 96
      %v1879 = vld [vmem:[%s1878] sm:$0xff]
      %v1880 = vld [vmem:[%s1878 + $0x8] sm:$0xff]
      %v1881 = vld [vmem:[%s1878 + $0x18] sm:$0xff]
      %v1882 = vld [vmem:[%s1878 + $0x20] sm:$0xff]
      %v1883 = vld [vmem:[%s1878 + $0x30] sm:$0xff]
      %v1884 = vld [vmem:[%s1878 + $0x38] sm:$0xff]
      %v1885 = vld [vmem:[%s1878 + $0x48] sm:$0xff]
      %v1886 = vld [vmem:[%s1878 + $0x50] sm:$0xff]
      %v1887 = vld [vmem:[%s1878 + $0x60] sm:$0xff]
      %v1888 = vld [vmem:[%s1878 + $0x68] sm:$0xff]
      %v1889 = vld [vmem:[%s1878 + $0x78] sm:$0xff]
      %v1890 = vld [vmem:[%s1878 + $0x80] sm:$0xff]
      %v1891 = vld [vmem:[%s1878 + $0x90] sm:$0xff]
      %v1892 = vld [vmem:[%s1878 + $0x98] sm:$0xff]
      %v1893 = vld [vmem:[%s1878 + $0xa8] sm:$0xff]
      %v1894 = vld [vmem:[%s1878 + $0xb0] sm:$0xff]
      %s1895 = scalar_lea.vmem %s3, 48
      %v1896 = vld [vmem:[%s1895] sm:$0xff]
      %v1898 = vsel %vm494, %v1879, 0
      %v1901 = vsel %vm494, %v1880, 0
      %v1904 = vsel %vm494, %v1881, 0
      %v1907 = vsel %vm494, %v1882, 0
      %v1910 = vsel %vm494, %v1883, 0
      %v1913 = vsel %vm494, %v1884, 0
      %v1916 = vsel %vm494, %v1885, 0
      %v1919 = vsel %vm494, %v1886, 0
      %v1922 = vsel %vm494, %v1887, 0
      %v1925 = vsel %vm494, %v1888, 0
      %v1928 = vsel %vm494, %v1889, 0
      %v1931 = vsel %vm494, %v1890, 0
      %v1934 = vsel %vm494, %v1891, 0
      %v1937 = vsel %vm494, %v1892, 0
      %v1940 = vsel %vm494, %v1893, 0
      %v1943 = vsel %vm494, %v1894, 0
      %1945 = vmatprep.subr.mxu0 0.0
      %1946 = vmatpush1.msra.mxu0 %v1896
      %1947 = vmatprep.subr.mxu0 0.0
      %1948 = vmatpush1.msra.mxu0 0.0
      %1949 = vmatprep.subr.mxu0 0.0
      %1950 = vmatpush1.msra.mxu0 0.0
      %1951 = vmatprep.subr.mxu0 0.0
      %1952 = vmatpush1.msra.mxu0 0.0
      %1953 = vmatprep.subr.mxu0 0.0
      %1954 = vmatpush1.msra.mxu0 0.0
      %1955 = vmatprep.subr.mxu0 0.0
      %1956 = vmatpush1.msra.mxu0 0.0
      %1957 = vmatprep.subr.mxu0 0.0
      %1958 = vmatpush1.msra.mxu0 0.0
      %1959 = vmatprep.subr.mxu0 0.0
      %1960 = vmatpush1.msra.mxu0 0.0
      %1961 = vmatprep.subr.mxu0 0.0
      %1962 = vmatpush1.msra.mxu0 0.0
      %1963 = vmatprep.subr.mxu0 0.0
      %1964 = vmatpush1.msra.mxu0 0.0
      %1965 = vmatprep.subr.mxu0 0.0
      %1966 = vmatpush1.msra.mxu0 0.0
      %1967 = vmatprep.subr.mxu0 0.0
      %1968 = vmatpush1.msra.mxu0 0.0
      %1969 = vmatprep.subr.mxu0 0.0
      %1970 = vmatpush1.msra.mxu0 0.0
      %1971 = vmatprep.subr.mxu0 0.0
      %1972 = vmatpush1.msra.mxu0 0.0
      %1973 = vmatprep.subr.mxu0 0.0
      %1974 = vmatpush1.msra.mxu0 0.0
      %1975 = vmatprep.subr.mxu0 0.0
      %1976 = vmatpush1.msra.mxu0 0.0
      %1977 = vmatprep.subr.mxu0 0.0
      %1978 = vmatpush1.msra.mxu0 0.0
      %1979 = vmatprep.subr.mxu0 0.0
      %1980 = vmatpush1.msra.mxu0 0.0
      %1981 = vmatprep.subr.mxu0 0.0
      %1982 = vmatpush1.msra.mxu0 0.0
      %1983 = vmatprep.subr.mxu0 0.0
      %1984 = vmatpush1.msra.mxu0 0.0
      %1985 = vmatprep.subr.mxu0 0.0
      %1986 = vmatpush1.msra.mxu0 0.0
      %1987 = vmatprep.subr.mxu0 0.0
      %1988 = vmatpush1.msra.mxu0 0.0
      %1989 = vmatprep.subr.mxu0 0.0
      %1990 = vmatpush1.msra.mxu0 0.0
      %1991 = vmatprep.subr.mxu0 0.0
      %1992 = vmatpush1.msra.mxu0 0.0
      %1993 = vmatprep.subr.mxu0 0.0
      %1994 = vmatpush1.msra.mxu0 0.0
      %1995 = vmatprep.subr.mxu0 0.0
      %1996 = vmatpush1.msra.mxu0 0.0
      %1997 = vmatprep.subr.mxu0 0.0
      %1998 = vmatpush1.msra.mxu0 0.0
      %1999 = vmatprep.subr.mxu0 0.0
      %2000 = vmatpush1.msra.mxu0 0.0
      %2001 = vmatprep.subr.mxu0 0.0
      %2002 = vmatpush1.msra.mxu0 0.0
      %2003 = vmatprep.subr.mxu0 0.0
      %2004 = vmatpush1.msra.mxu0 0.0
      %2005 = vmatprep.subr.mxu0 0.0
      %2006 = vmatpush1.msra.mxu0 0.0
      %2007 = vmatprep.subr.mxu0 0.0
      %2008 = vmatpush1.msra.mxu0 0.0
      %2009 = vmatprep.mubr.f32.mxu0 0.0
      %2010 = vmatmul.mubr.f32.gmra.mrb[0].mxu0 %v1898
      %v2011 = vpop.f32.mrb[0].mxu0
      %v2012 = vadd.f32 0.0, %v2011
      %v2013 = vpop.f32.mrb[0].mxu0
      %2014 = vmatprep.mubr.f32.mxu0 0.0
      %2015 = vmatmul.mubr.f32.gmra.mrb[0].mxu0 %v1901
      %v2016 = vpop.f32.mrb[0].mxu0
      %v2017 = vadd.f32 0.0, %v2016
      %v2018 = vpop.f32.mrb[0].mxu0
      %2019 = vmatprep.mubr.f32.mxu0 0.0
      %2020 = vmatmul.mubr.f32.gmra.mrb[0].mxu0 %v1904
      %v2021 = vpop.f32.mrb[0].mxu0
      %v2022 = vadd.f32 0.0, %v2021
      %v2023 = vpop.f32.mrb[0].mxu0
      %2024 = vmatprep.mubr.f32.mxu0 0.0
      %2025 = vmatmul.mubr.f32.gmra.mrb[0].mxu0 %v1907
      %v2026 = vpop.f32.mrb[0].mxu0
      %v2027 = vadd.f32 0.0, %v2026
      %v2028 = vpop.f32.mrb[0].mxu0
      %2029 = vmatprep.mubr.f32.mxu0 0.0
      %2030 = vmatmul.mubr.f32.gmra.mrb[0].mxu0 %v1910
      %v2031 = vpop.f32.mrb[0].mxu0
      %v2032 = vadd.f32 0.0, %v2031
      %v2033 = vpop.f32.mrb[0].mxu0
      %2034 = vmatprep.mubr.f32.mxu0 0.0
      %2035 = vmatmul.mubr.f32.gmra.mrb[0].mxu0 %v1913
      %v2036 = vpop.f32.mrb[0].mxu0
      %v2037 = vadd.f32 0.0, %v2036
      %v2038 = vpop.f32.mrb[0].mxu0
      %2039 = vmatprep.mubr.f32.mxu0 0.0
      %2040 = vmatmul.mubr.f32.gmra.mrb[0].mxu0 %v1916
      %v2041 = vpop.f32.mrb[0].mxu0
      %v2042 = vadd.f32 0.0, %v2041
      %v2043 = vpop.f32.mrb[0].mxu0
      %2044 = vmatprep.mubr.f32.mxu0 0.0
      %2045 = vmatmul.mubr.f32.gmra.mrb[0].mxu0 %v1919
      %v2046 = vpop.f32.mrb[0].mxu0
      %v2047 = vadd.f32 0.0, %v2046
      %v2048 = vpop.f32.mrb[0].mxu0
      %2049 = vmatprep.mubr.f32.mxu0 0.0
      %2050 = vmatmul.mubr.f32.gmra.mrb[0].mxu0 %v1922
      %v2051 = vpop.f32.mrb[0].mxu0
      %v2052 = vadd.f32 0.0, %v2051
      %v2053 = vpop.f32.mrb[0].mxu0
      %2054 = vmatprep.mubr.f32.mxu0 0.0
      %2055 = vmatmul.mubr.f32.gmra.mrb[0].mxu0 %v1925
      %v2056 = vpop.f32.mrb[0].mxu0
      %v2057 = vadd.f32 0.0, %v2056
      %v2058 = vpop.f32.mrb[0].mxu0
      %2059 = vmatprep.mubr.f32.mxu0 0.0
      %2060 = vmatmul.mubr.f32.gmra.mrb[0].mxu0 %v1928
      %v2061 = vpop.f32.mrb[0].mxu0
      %v2062 = vadd.f32 0.0, %v2061
      %v2063 = vpop.f32.mrb[0].mxu0
      %2064 = vmatprep.mubr.f32.mxu0 0.0
      %2065 = vmatmul.mubr.f32.gmra.mrb[0].mxu0 %v1931
      %v2066 = vpop.f32.mrb[0].mxu0
      %v2067 = vadd.f32 0.0, %v2066
      %v2068 = vpop.f32.mrb[0].mxu0
      %2069 = vmatprep.mubr.f32.mxu0 0.0
      %2070 = vmatmul.mubr.f32.gmra.mrb[0].mxu0 %v1934
      %v2071 = vpop.f32.mrb[0].mxu0
      %v2072 = vadd.f32 0.0, %v2071
      %v2073 = vpop.f32.mrb[0].mxu0
      %2074 = vmatprep.mubr.f32.mxu0 0.0
      %2075 = vmatmul.mubr.f32.gmra.mrb[0].mxu0 %v1937
      %v2076 = vpop.f32.mrb[0].mxu0
      %v2077 = vadd.f32 0.0, %v2076
      %v2078 = vpop.f32.mrb[0].mxu0
      %2079 = vmatprep.mubr.f32.mxu0 0.0
      %2080 = vmatmul.mubr.f32.gmra.mrb[0].mxu0 %v1940
      %v2081 = vpop.f32.mrb[0].mxu0
      %v2082 = vadd.f32 0.0, %v2081
      %v2083 = vpop.f32.mrb[0].mxu0
      %2084 = vmatprep.mubr.f32.mxu0 0.0
      %2085 = vmatmul.mubr.f32.gmra.mrb[0].mxu0 %v1943
      %v2086 = vpop.f32.mrb[0].mxu0
      %v2087 = vadd.f32 0.0, %v2086
      %v2088 = vpop.f32.mrb[0].mxu0
      %2089 = vdwg.mxu0
      %v2090 = vadd.f32 %v1862, %v2012
      %v2091 = vadd.f32 %v1863, %v2017
      %v2092 = vadd.f32 %v1864, %v2022
      %v2093 = vadd.f32 %v1865, %v2027
      %v2094 = vadd.f32 %v1866, %v2032
      %v2095 = vadd.f32 %v1867, %v2037
      %v2096 = vadd.f32 %v1868, %v2042
      %v2097 = vadd.f32 %v1869, %v2047
      %v2098 = vadd.f32 %v1870, %v2052
      %v2099 = vadd.f32 %v1871, %v2057
      %v2100 = vadd.f32 %v1872, %v2062
      %v2101 = vadd.f32 %v1873, %v2067
      %v2102 = vadd.f32 %v1874, %v2072
      %v2103 = vadd.f32 %v1875, %v2077
      %v2104 = vadd.f32 %v1876, %v2082
      %v2105 = vadd.f32 %v1877, %v2087
      %v2106 = vld [vmem:[%s1878 + $0x2] sm:$0xff]
      %v2107 = vld [vmem:[%s1878 + $0xa] sm:$0xff]
      %v2108 = vld [vmem:[%s1878 + $0x1a] sm:$0xff]
      %v2109 = vld [vmem:[%s1878 + $0x22] sm:$0xff]
      %v2110 = vld [vmem:[%s1878 + $0x32] sm:$0xff]
      %v2111 = vld [vmem:[%s1878 + $0x3a] sm:$0xff]
      %v2112 = vld [vmem:[%s1878 + $0x4a] sm:$0xff]
      %v2113 = vld [vmem:[%s1878 + $0x52] sm:$0xff]
      %v2114 = vld [vmem:[%s1878 + $0x62] sm:$0xff]
      %v2115 = vld [vmem:[%s1878 + $0x6a] sm:$0xff]
      %v2116 = vld [vmem:[%s1878 + $0x7a] sm:$0xff]
      %v2117 = vld [vmem:[%s1878 + $0x82] sm:$0xff]
      %v2118 = vld [vmem:[%s1878 + $0x92] sm:$0xff]
      %v2119 = vld [vmem:[%s1878 + $0x9a] sm:$0xff]
      %v2120 = vld [vmem:[%s1878 + $0xaa] sm:$0xff]
      %v2121 = vld [vmem:[%s1878 + $0xb2] sm:$0xff]
      %s2122 = scalar_lea.vmem %s3, 56
      %v2123 = vld [vmem:[%s2122] sm:$0xff]
      %v2125 = vsel %vm494, %v2106, 0
      %v2128 = vsel %vm494, %v2107, 0
      %v2131 = vsel %vm494, %v2108, 0
      %v2134 = vsel %vm494, %v2109, 0
      %v2137 = vsel %vm494, %v2110, 0
      %v2140 = vsel %vm494, %v2111, 0
      %v2143 = vsel %vm494, %v2112, 0
      %v2146 = vsel %vm494, %v2113, 0
      %v2149 = vsel %vm494, %v2114, 0
      %v2152 = vsel %vm494, %v2115, 0
      %v2155 = vsel %vm494, %v2116, 0
      %v2158 = vsel %vm494, %v2117, 0
      %v2161 = vsel %vm494, %v2118, 0
      %v2164 = vsel %vm494, %v2119, 0
      %v2167 = vsel %vm494, %v2120, 0
      %v2170 = vsel %vm494, %v2121, 0
      %2172 = vmatprep.subr.mxu0 0.0
      %2173 = vmatpush1.msra.mxu0 %v2123
      %2174 = vmatprep.subr.mxu0 0.0
      %2175 = vmatpush1.msra.mxu0 0.0
      %2176 = vmatprep.subr.mxu0 0.0
      %2177 = vmatpush1.msra.mxu0 0.0
      %2178 = vmatprep.subr.mxu0 0.0
      %2179 = vmatpush1.msra.mxu0 0.0
      %2180 = vmatprep.subr.mxu0 0.0
      %2181 = vmatpush1.msra.mxu0 0.0
      %2182 = vmatprep.subr.mxu0 0.0
      %2183 = vmatpush1.msra.mxu0 0.0
      %2184 = vmatprep.subr.mxu0 0.0
      %2185 = vmatpush1.msra.mxu0 0.0
      %2186 = vmatprep.subr.mxu0 0.0
      %2187 = vmatpush1.msra.mxu0 0.0
      %2188 = vmatprep.subr.mxu0 0.0
      %2189 = vmatpush1.msra.mxu0 0.0
      %2190 = vmatprep.subr.mxu0 0.0
      %2191 = vmatpush1.msra.mxu0 0.0
      %2192 = vmatprep.subr.mxu0 0.0
      %2193 = vmatpush1.msra.mxu0 0.0
      %2194 = vmatprep.subr.mxu0 0.0
      %2195 = vmatpush1.msra.mxu0 0.0
      %2196 = vmatprep.subr.mxu0 0.0
      %2197 = vmatpush1.msra.mxu0 0.0
      %2198 = vmatprep.subr.mxu0 0.0
      %2199 = vmatpush1.msra.mxu0 0.0
      %2200 = vmatprep.subr.mxu0 0.0
      %2201 = vmatpush1.msra.mxu0 0.0
      %2202 = vmatprep.subr.mxu0 0.0
      %2203 = vmatpush1.msra.mxu0 0.0
      %2204 = vmatprep.subr.mxu0 0.0
      %2205 = vmatpush1.msra.mxu0 0.0
      %2206 = vmatprep.subr.mxu0 0.0
      %2207 = vmatpush1.msra.mxu0 0.0
      %2208 = vmatprep.subr.mxu0 0.0
      %2209 = vmatpush1.msra.mxu0 0.0
      %2210 = vmatprep.subr.mxu0 0.0
      %2211 = vmatpush1.msra.mxu0 0.0
      %2212 = vmatprep.subr.mxu0 0.0
      %2213 = vmatpush1.msra.mxu0 0.0
      %2214 = vmatprep.subr.mxu0 0.0
      %2215 = vmatpush1.msra.mxu0 0.0
      %2216 = vmatprep.subr.mxu0 0.0
      %2217 = vmatpush1.msra.mxu0 0.0
      %2218 = vmatprep.subr.mxu0 0.0
      %2219 = vmatpush1.msra.mxu0 0.0
      %2220 = vmatprep.subr.mxu0 0.0
      %2221 = vmatpush1.msra.mxu0 0.0
      %2222 = vmatprep.subr.mxu0 0.0
      %2223 = vmatpush1.msra.mxu0 0.0
      %2224 = vmatprep.subr.mxu0 0.0
      %2225 = vmatpush1.msra.mxu0 0.0
      %2226 = vmatprep.subr.mxu0 0.0
      %2227 = vmatpush1.msra.mxu0 0.0
      %2228 = vmatprep.subr.mxu0 0.0
      %2229 = vmatpush1.msra.mxu0 0.0
      %2230 = vmatprep.subr.mxu0 0.0
      %2231 = vmatpush1.msra.mxu0 0.0
      %2232 = vmatprep.subr.mxu0 0.0
      %2233 = vmatpush1.msra.mxu0 0.0
      %2234 = vmatprep.subr.mxu0 0.0
      %2235 = vmatpush1.msra.mxu0 0.0
      %2236 = vmatprep.mubr.f32.mxu0 0.0
      %2237 = vmatmul.mubr.f32.gmra.mrb[0].mxu0 %v2125
      %v2238 = vpop.f32.mrb[0].mxu0
      %v2239 = vadd.f32 0.0, %v2238
      %v2240 = vpop.f32.mrb[0].mxu0
      %2241 = vmatprep.mubr.f32.mxu0 0.0
      %2242 = vmatmul.mubr.f32.gmra.mrb[0].mxu0 %v2128
      %v2243 = vpop.f32.mrb[0].mxu0
      %v2244 = vadd.f32 0.0, %v2243
      %v2245 = vpop.f32.mrb[0].mxu0
      %2246 = vmatprep.mubr.f32.mxu0 0.0
      %2247 = vmatmul.mubr.f32.gmra.mrb[0].mxu0 %v2131
      %v2248 = vpop.f32.mrb[0].mxu0
      %v2249 = vadd.f32 0.0, %v2248
      %v2250 = vpop.f32.mrb[0].mxu0
      %2251 = vmatprep.mubr.f32.mxu0 0.0
      %2252 = vmatmul.mubr.f32.gmra.mrb[0].mxu0 %v2134
      %v2253 = vpop.f32.mrb[0].mxu0
      %v2254 = vadd.f32 0.0, %v2253
      %v2255 = vpop.f32.mrb[0].mxu0
      %2256 = vmatprep.mubr.f32.mxu0 0.0
      %2257 = vmatmul.mubr.f32.gmra.mrb[0].mxu0 %v2137
      %v2258 = vpop.f32.mrb[0].mxu0
      %v2259 = vadd.f32 0.0, %v2258
      %v2260 = vpop.f32.mrb[0].mxu0
      %2261 = vmatprep.mubr.f32.mxu0 0.0
      %2262 = vmatmul.mubr.f32.gmra.mrb[0].mxu0 %v2140
      %v2263 = vpop.f32.mrb[0].mxu0
      %v2264 = vadd.f32 0.0, %v2263
      %v2265 = vpop.f32.mrb[0].mxu0
      %2266 = vmatprep.mubr.f32.mxu0 0.0
      %2267 = vmatmul.mubr.f32.gmra.mrb[0].mxu0 %v2143
      %v2268 = vpop.f32.mrb[0].mxu0
      %v2269 = vadd.f32 0.0, %v2268
      %v2270 = vpop.f32.mrb[0].mxu0
      %2271 = vmatprep.mubr.f32.mxu0 0.0
      %2272 = vmatmul.mubr.f32.gmra.mrb[0].mxu0 %v2146
      %v2273 = vpop.f32.mrb[0].mxu0
      %v2274 = vadd.f32 0.0, %v2273
      %v2275 = vpop.f32.mrb[0].mxu0
      %2276 = vmatprep.mubr.f32.mxu0 0.0
      %2277 = vmatmul.mubr.f32.gmra.mrb[0].mxu0 %v2149
      %v2278 = vpop.f32.mrb[0].mxu0
      %v2279 = vadd.f32 0.0, %v2278
      %v2280 = vpop.f32.mrb[0].mxu0
      %2281 = vmatprep.mubr.f32.mxu0 0.0
      %2282 = vmatmul.mubr.f32.gmra.mrb[0].mxu0 %v2152
      %v2283 = vpop.f32.mrb[0].mxu0
      %v2284 = vadd.f32 0.0, %v2283
      %v2285 = vpop.f32.mrb[0].mxu0
      %2286 = vmatprep.mubr.f32.mxu0 0.0
      %2287 = vmatmul.mubr.f32.gmra.mrb[0].mxu0 %v2155
      %v2288 = vpop.f32.mrb[0].mxu0
      %v2289 = vadd.f32 0.0, %v2288
      %v2290 = vpop.f32.mrb[0].mxu0
      %2291 = vmatprep.mubr.f32.mxu0 0.0
      %2292 = vmatmul.mubr.f32.gmra.mrb[0].mxu0 %v2158
      %v2293 = vpop.f32.mrb[0].mxu0
      %v2294 = vadd.f32 0.0, %v2293
      %v2295 = vpop.f32.mrb[0].mxu0
      %2296 = vmatprep.mubr.f32.mxu0 0.0
      %2297 = vmatmul.mubr.f32.gmra.mrb[0].mxu0 %v2161
      %v2298 = vpop.f32.mrb[0].mxu0
      %v2299 = vadd.f32 0.0, %v2298
      %v2300 = vpop.f32.mrb[0].mxu0
      %2301 = vmatprep.mubr.f32.mxu0 0.0
      %2302 = vmatmul.mubr.f32.gmra.mrb[0].mxu0 %v2164
      %v2303 = vpop.f32.mrb[0].mxu0
      %v2304 = vadd.f32 0.0, %v2303
      %v2305 = vpop.f32.mrb[0].mxu0
      %2306 = vmatprep.mubr.f32.mxu0 0.0
      %2307 = vmatmul.mubr.f32.gmra.mrb[0].mxu0 %v2167
      %v2308 = vpop.f32.mrb[0].mxu0
      %v2309 = vadd.f32 0.0, %v2308
      %v2310 = vpop.f32.mrb[0].mxu0
      %2311 = vmatprep.mubr.f32.mxu0 0.0
      %2312 = vmatmul.mubr.f32.gmra.mrb[0].mxu0 %v2170
      %v2313 = vpop.f32.mrb[0].mxu0
      %v2314 = vadd.f32 0.0, %v2313
      %v2315 = vpop.f32.mrb[0].mxu0
      %2316 = vdwg.mxu0
      %v2317 = vadd.f32 %v2090, %v2239
      %v2318 = vadd.f32 %v2091, %v2244
      %v2319 = vadd.f32 %v2092, %v2249
      %v2320 = vadd.f32 %v2093, %v2254
      %v2321 = vadd.f32 %v2094, %v2259
      %v2322 = vadd.f32 %v2095, %v2264
      %v2323 = vadd.f32 %v2096, %v2269
      %v2324 = vadd.f32 %v2097, %v2274
      %v2325 = vadd.f32 %v2098, %v2279
      %v2326 = vadd.f32 %v2099, %v2284
      %v2327 = vadd.f32 %v2100, %v2289
      %v2328 = vadd.f32 %v2101, %v2294
      %v2329 = vadd.f32 %v2102, %v2299
      %v2330 = vadd.f32 %v2103, %v2304
      %v2331 = vadd.f32 %v2104, %v2309
      %v2332 = vadd.f32 %v2105, %v2314
      %v2333 = vld [vmem:[%s1878 + $0x4] sm:$0xff]
      %v2334 = vld [vmem:[%s1878 + $0xc] sm:$0xff]
      %v2335 = vld [vmem:[%s1878 + $0x1c] sm:$0xff]
      %v2336 = vld [vmem:[%s1878 + $0x24] sm:$0xff]
      %v2337 = vld [vmem:[%s1878 + $0x34] sm:$0xff]
      %v2338 = vld [vmem:[%s1878 + $0x3c] sm:$0xff]
      %v2339 = vld [vmem:[%s1878 + $0x4c] sm:$0xff]
      %v2340 = vld [vmem:[%s1878 + $0x54] sm:$0xff]
      %v2341 = vld [vmem:[%s1878 + $0x64] sm:$0xff]
      %v2342 = vld [vmem:[%s1878 + $0x6c] sm:$0xff]
      %v2343 = vld [vmem:[%s1878 + $0x7c] sm:$0xff]
      %v2344 = vld [vmem:[%s1878 + $0x84] sm:$0xff]
      %v2345 = vld [vmem:[%s1878 + $0x94] sm:$0xff]
      %v2346 = vld [vmem:[%s1878 + $0x9c] sm:$0xff]
      %v2347 = vld [vmem:[%s1878 + $0xac] sm:$0xff]
      %v2348 = vld [vmem:[%s1878 + $0xb4] sm:$0xff]
      %s2349 = scalar_lea.vmem %s3, 64
      %v2350 = vld [vmem:[%s2349] sm:$0xff]
      %v2352 = vsel %vm494, %v2333, 0
      %v2355 = vsel %vm494, %v2334, 0
      %v2358 = vsel %vm494, %v2335, 0
      %v2361 = vsel %vm494, %v2336, 0
      %v2364 = vsel %vm494, %v2337, 0
      %v2367 = vsel %vm494, %v2338, 0
      %v2370 = vsel %vm494, %v2339, 0
      %v2373 = vsel %vm494, %v2340, 0
      %v2376 = vsel %vm494, %v2341, 0
      %v2379 = vsel %vm494, %v2342, 0
      %v2382 = vsel %vm494, %v2343, 0
      %v2385 = vsel %vm494, %v2344, 0
      %v2388 = vsel %vm494, %v2345, 0
      %v2391 = vsel %vm494, %v2346, 0
      %v2394 = vsel %vm494, %v2347, 0
      %v2397 = vsel %vm494, %v2348, 0
      %2399 = vmatprep.subr.mxu0 0.0
      %2400 = vmatpush1.msra.mxu0 %v2350
      %2401 = vmatprep.subr.mxu0 0.0
      %2402 = vmatpush1.msra.mxu0 0.0
      %2403 = vmatprep.subr.mxu0 0.0
      %2404 = vmatpush1.msra.mxu0 0.0
      %2405 = vmatprep.subr.mxu0 0.0
      %2406 = vmatpush1.msra.mxu0 0.0
      %2407 = vmatprep.subr.mxu0 0.0
      %2408 = vmatpush1.msra.mxu0 0.0
      %2409 = vmatprep.subr.mxu0 0.0
      %2410 = vmatpush1.msra.mxu0 0.0
      %2411 = vmatprep.subr.mxu0 0.0
      %2412 = vmatpush1.msra.mxu0 0.0
      %2413 = vmatprep.subr.mxu0 0.0
      %2414 = vmatpush1.msra.mxu0 0.0
      %2415 = vmatprep.subr.mxu0 0.0
      %2416 = vmatpush1.msra.mxu0 0.0
      %2417 = vmatprep.subr.mxu0 0.0
      %2418 = vmatpush1.msra.mxu0 0.0
      %2419 = vmatprep.subr.mxu0 0.0
      %2420 = vmatpush1.msra.mxu0 0.0
      %2421 = vmatprep.subr.mxu0 0.0
      %2422 = vmatpush1.msra.mxu0 0.0
      %2423 = vmatprep.subr.mxu0 0.0
      %2424 = vmatpush1.msra.mxu0 0.0
      %2425 = vmatprep.subr.mxu0 0.0
      %2426 = vmatpush1.msra.mxu0 0.0
      %2427 = vmatprep.subr.mxu0 0.0
      %2428 = vmatpush1.msra.mxu0 0.0
      %2429 = vmatprep.subr.mxu0 0.0
      %2430 = vmatpush1.msra.mxu0 0.0
      %2431 = vmatprep.subr.mxu0 0.0
      %2432 = vmatpush1.msra.mxu0 0.0
      %2433 = vmatprep.subr.mxu0 0.0
      %2434 = vmatpush1.msra.mxu0 0.0
      %2435 = vmatprep.subr.mxu0 0.0
      %2436 = vmatpush1.msra.mxu0 0.0
      %2437 = vmatprep.subr.mxu0 0.0
      %2438 = vmatpush1.msra.mxu0 0.0
      %2439 = vmatprep.subr.mxu0 0.0
      %2440 = vmatpush1.msra.mxu0 0.0
      %2441 = vmatprep.subr.mxu0 0.0
      %2442 = vmatpush1.msra.mxu0 0.0
      %2443 = vmatprep.subr.mxu0 0.0
      %2444 = vmatpush1.msra.mxu0 0.0
      %2445 = vmatprep.subr.mxu0 0.0
      %2446 = vmatpush1.msra.mxu0 0.0
      %2447 = vmatprep.subr.mxu0 0.0
      %2448 = vmatpush1.msra.mxu0 0.0
      %2449 = vmatprep.subr.mxu0 0.0
      %2450 = vmatpush1.msra.mxu0 0.0
      %2451 = vmatprep.subr.mxu0 0.0
      %2452 = vmatpush1.msra.mxu0 0.0
      %2453 = vmatprep.subr.mxu0 0.0
      %2454 = vmatpush1.msra.mxu0 0.0
      %2455 = vmatprep.subr.mxu0 0.0
      %2456 = vmatpush1.msra.mxu0 0.0
      %2457 = vmatprep.subr.mxu0 0.0
      %2458 = vmatpush1.msra.mxu0 0.0
      %2459 = vmatprep.subr.mxu0 0.0
      %2460 = vmatpush1.msra.mxu0 0.0
      %2461 = vmatprep.subr.mxu0 0.0
      %2462 = vmatpush1.msra.mxu0 0.0
      %2463 = vmatprep.mubr.f32.mxu0 0.0
      %2464 = vmatmul.mubr.f32.gmra.mrb[0].mxu0 %v2352
      %v2465 = vpop.f32.mrb[0].mxu0
      %v2466 = vadd.f32 0.0, %v2465
      %v2467 = vpop.f32.mrb[0].mxu0
      %2468 = vmatprep.mubr.f32.mxu0 0.0
      %2469 = vmatmul.mubr.f32.gmra.mrb[0].mxu0 %v2355
      %v2470 = vpop.f32.mrb[0].mxu0
      %v2471 = vadd.f32 0.0, %v2470
      %v2472 = vpop.f32.mrb[0].mxu0
      %2473 = vmatprep.mubr.f32.mxu0 0.0
      %2474 = vmatmul.mubr.f32.gmra.mrb[0].mxu0 %v2358
      %v2475 = vpop.f32.mrb[0].mxu0
      %v2476 = vadd.f32 0.0, %v2475
      %v2477 = vpop.f32.mrb[0].mxu0
      %2478 = vmatprep.mubr.f32.mxu0 0.0
      %2479 = vmatmul.mubr.f32.gmra.mrb[0].mxu0 %v2361
      %v2480 = vpop.f32.mrb[0].mxu0
      %v2481 = vadd.f32 0.0, %v2480
      %v2482 = vpop.f32.mrb[0].mxu0
      %2483 = vmatprep.mubr.f32.mxu0 0.0
      %2484 = vmatmul.mubr.f32.gmra.mrb[0].mxu0 %v2364
      %v2485 = vpop.f32.mrb[0].mxu0
      %v2486 = vadd.f32 0.0, %v2485
      %v2487 = vpop.f32.mrb[0].mxu0
      %2488 = vmatprep.mubr.f32.mxu0 0.0
      %2489 = vmatmul.mubr.f32.gmra.mrb[0].mxu0 %v2367
      %v2490 = vpop.f32.mrb[0].mxu0
      %v2491 = vadd.f32 0.0, %v2490
      %v2492 = vpop.f32.mrb[0].mxu0
      %2493 = vmatprep.mubr.f32.mxu0 0.0
      %2494 = vmatmul.mubr.f32.gmra.mrb[0].mxu0 %v2370
      %v2495 = vpop.f32.mrb[0].mxu0
      %v2496 = vadd.f32 0.0, %v2495
      %v2497 = vpop.f32.mrb[0].mxu0
      %2498 = vmatprep.mubr.f32.mxu0 0.0
      %2499 = vmatmul.mubr.f32.gmra.mrb[0].mxu0 %v2373
      %v2500 = vpop.f32.mrb[0].mxu0
      %v2501 = vadd.f32 0.0, %v2500
      %v2502 = vpop.f32.mrb[0].mxu0
      %2503 = vmatprep.mubr.f32.mxu0 0.0
      %2504 = vmatmul.mubr.f32.gmra.mrb[0].mxu0 %v2376
      %v2505 = vpop.f32.mrb[0].mxu0
      %v2506 = vadd.f32 0.0, %v2505
      %v2507 = vpop.f32.mrb[0].mxu0
      %2508 = vmatprep.mubr.f32.mxu0 0.0
      %2509 = vmatmul.mubr.f32.gmra.mrb[0].mxu0 %v2379
      %v2510 = vpop.f32.mrb[0].mxu0
      %v2511 = vadd.f32 0.0, %v2510
      %v2512 = vpop.f32.mrb[0].mxu0
      %2513 = vmatprep.mubr.f32.mxu0 0.0
      %2514 = vmatmul.mubr.f32.gmra.mrb[0].mxu0 %v2382
      %v2515 = vpop.f32.mrb[0].mxu0
      %v2516 = vadd.f32 0.0, %v2515
      %v2517 = vpop.f32.mrb[0].mxu0
      %2518 = vmatprep.mubr.f32.mxu0 0.0
      %2519 = vmatmul.mubr.f32.gmra.mrb[0].mxu0 %v2385
      %v2520 = vpop.f32.mrb[0].mxu0
      %v2521 = vadd.f32 0.0, %v2520
      %v2522 = vpop.f32.mrb[0].mxu0
      %2523 = vmatprep.mubr.f32.mxu0 0.0
      %2524 = vmatmul.mubr.f32.gmra.mrb[0].mxu0 %v2388
      %v2525 = vpop.f32.mrb[0].mxu0
      %v2526 = vadd.f32 0.0, %v2525
      %v2527 = vpop.f32.mrb[0].mxu0
      %2528 = vmatprep.mubr.f32.mxu0 0.0
      %2529 = vmatmul.mubr.f32.gmra.mrb[0].mxu0 %v2391
      %v2530 = vpop.f32.mrb[0].mxu0
      %v2531 = vadd.f32 0.0, %v2530
      %v2532 = vpop.f32.mrb[0].mxu0
      %2533 = vmatprep.mubr.f32.mxu0 0.0
      %2534 = vmatmul.mubr.f32.gmra.mrb[0].mxu0 %v2394
      %v2535 = vpop.f32.mrb[0].mxu0
      %v2536 = vadd.f32 0.0, %v2535
      %v2537 = vpop.f32.mrb[0].mxu0
      %2538 = vmatprep.mubr.f32.mxu0 0.0
      %2539 = vmatmul.mubr.f32.gmra.mrb[0].mxu0 %v2397
      %v2540 = vpop.f32.mrb[0].mxu0
      %v2541 = vadd.f32 0.0, %v2540
      %v2542 = vpop.f32.mrb[0].mxu0
      %2543 = vdwg.mxu0
      %v2544 = vadd.f32 %v2317, %v2466
      %v2545 = vadd.f32 %v2318, %v2471
      %v2546 = vadd.f32 %v2319, %v2476
      %v2547 = vadd.f32 %v2320, %v2481
      %v2548 = vadd.f32 %v2321, %v2486
      %v2549 = vadd.f32 %v2322, %v2491
      %v2550 = vadd.f32 %v2323, %v2496
      %v2551 = vadd.f32 %v2324, %v2501
      %v2552 = vadd.f32 %v2325, %v2506
      %v2553 = vadd.f32 %v2326, %v2511
      %v2554 = vadd.f32 %v2327, %v2516
      %v2555 = vadd.f32 %v2328, %v2521
      %v2556 = vadd.f32 %v2329, %v2526
      %v2557 = vadd.f32 %v2330, %v2531
      %v2558 = vadd.f32 %v2331, %v2536
      %v2559 = vadd.f32 %v2332, %v2541
      %v2560 = vld [vmem:[%s4] sm:$0x1]
      %v2562 = vlaneseq
      %v2563 = vshrl.u32 %v2562, 7
      %v2564 = vsub.s32 0, %v2563
      %v2565 = vrot.slane %v2560, %v2564
      %v2567 = vadd.f32 %v2544, %v2565
      %v2568 = vadd.f32 %v2545, %v2565
      %v2569 = vadd.f32 %v2546, %v2565
      %v2570 = vadd.f32 %v2547, %v2565
      %v2571 = vadd.f32 %v2548, %v2565
      %v2572 = vadd.f32 %v2549, %v2565
      %v2573 = vadd.f32 %v2550, %v2565
      %v2574 = vadd.f32 %v2551, %v2565
      %v2575 = vadd.f32 %v2552, %v2565
      %v2576 = vadd.f32 %v2553, %v2565
      %v2577 = vadd.f32 %v2554, %v2565
      %v2578 = vadd.f32 %v2555, %v2565
      %v2579 = vadd.f32 %v2556, %v2565
      %v2580 = vadd.f32 %v2557, %v2565
      %v2581 = vadd.f32 %v2558, %v2565
      %v2582 = vadd.f32 %v2559, %v2565
      %vm2583 = vcmp.gt.f32.partialorder %v2567, 0.0
      %vm2584 = vcmp.gt.f32.partialorder %v2568, 0.0
      %vm2585 = vcmp.gt.f32.partialorder %v2569, 0.0
      %vm2586 = vcmp.gt.f32.partialorder %v2570, 0.0
      %vm2587 = vcmp.gt.f32.partialorder %v2571, 0.0
      %vm2588 = vcmp.gt.f32.partialorder %v2572, 0.0
      %vm2589 = vcmp.gt.f32.partialorder %v2573, 0.0
      %vm2590 = vcmp.gt.f32.partialorder %v2574, 0.0
      %vm2591 = vcmp.gt.f32.partialorder %v2575, 0.0
      %vm2592 = vcmp.gt.f32.partialorder %v2576, 0.0
      %vm2593 = vcmp.gt.f32.partialorder %v2577, 0.0
      %vm2594 = vcmp.gt.f32.partialorder %v2578, 0.0
      %vm2595 = vcmp.gt.f32.partialorder %v2579, 0.0
      %vm2596 = vcmp.gt.f32.partialorder %v2580, 0.0
      %vm2597 = vcmp.gt.f32.partialorder %v2581, 0.0
      %vm2598 = vcmp.gt.f32.partialorder %v2582, 0.0
      %v2599 = vmul.f32 %v2567, 1.442695
      %v2600 = vpow.pop %v2599
      %v2601 = vmul.f32 %v2568, 1.442695
      %v2602 = vpow.pop %v2601
      %v2603 = vmul.f32 %v2569, 1.442695
      %v2604 = vpow.pop %v2603
      %v2605 = vmul.f32 %v2570, 1.442695
      %v2606 = vpow.pop %v2605
      %v2607 = vmul.f32 %v2571, 1.442695
      %v2608 = vpow.pop %v2607
      %v2609 = vmul.f32 %v2572, 1.442695
      %v2610 = vpow.pop %v2609
      %v2611 = vmul.f32 %v2573, 1.442695
      %v2612 = vpow.pop %v2611
      %v2613 = vmul.f32 %v2574, 1.442695
      %v2614 = vpow.pop %v2613
      %v2615 = vmul.f32 %v2575, 1.442695
      %v2616 = vpow.pop %v2615
      %v2617 = vmul.f32 %v2576, 1.442695
      %v2618 = vpow.pop %v2617
      %v2619 = vmul.f32 %v2577, 1.442695
      %v2620 = vpow.pop %v2619
      %v2621 = vmul.f32 %v2578, 1.442695
      %v2622 = vpow.pop %v2621
      %v2623 = vmul.f32 %v2579, 1.442695
      %v2624 = vpow.pop %v2623
      %v2625 = vmul.f32 %v2580, 1.442695
      %v2626 = vpow.pop %v2625
      %v2627 = vmul.f32 %v2581, 1.442695
      %v2628 = vpow.pop %v2627
      %v2629 = vmul.f32 %v2582, 1.442695
      %v2630 = vpow.pop %v2629
      %v2631 = vsub.f32 %v2600, 1.0
      %v2632 = vsub.f32 %v2602, 1.0
      %v2633 = vsub.f32 %v2604, 1.0
      %v2634 = vsub.f32 %v2606, 1.0
      %v2635 = vsub.f32 %v2608, 1.0
      %v2636 = vsub.f32 %v2610, 1.0
      %v2637 = vsub.f32 %v2612, 1.0
      %v2638 = vsub.f32 %v2614, 1.0
      %v2639 = vsub.f32 %v2616, 1.0
      %v2640 = vsub.f32 %v2618, 1.0
      %v2641 = vsub.f32 %v2620, 1.0
      %v2642 = vsub.f32 %v2622, 1.0
      %v2643 = vsub.f32 %v2624, 1.0
      %v2644 = vsub.f32 %v2626, 1.0
      %v2645 = vsub.f32 %v2628, 1.0
      %v2646 = vsub.f32 %v2630, 1.0
      %v2647 = vmul.f32 %v2631, 1.6732632
      %v2648 = vmul.f32 %v2632, 1.6732632
      %v2649 = vmul.f32 %v2633, 1.6732632
      %v2650 = vmul.f32 %v2634, 1.6732632
      %v2651 = vmul.f32 %v2635, 1.6732632
      %v2652 = vmul.f32 %v2636, 1.6732632
      %v2653 = vmul.f32 %v2637, 1.6732632
      %v2654 = vmul.f32 %v2638, 1.6732632
      %v2655 = vmul.f32 %v2639, 1.6732632
      %v2656 = vmul.f32 %v2640, 1.6732632
      %v2657 = vmul.f32 %v2641, 1.6732632
      %v2658 = vmul.f32 %v2642, 1.6732632
      %v2659 = vmul.f32 %v2643, 1.6732632
      %v2660 = vmul.f32 %v2644, 1.6732632
      %v2661 = vmul.f32 %v2645, 1.6732632
      %v2662 = vmul.f32 %v2646, 1.6732632
      %v2663 = vsel %vm2583, %v2567, %v2647
      %v2664 = vsel %vm2584, %v2568, %v2648
      %v2665 = vsel %vm2585, %v2569, %v2649
      %v2666 = vsel %vm2586, %v2570, %v2650
      %v2667 = vsel %vm2587, %v2571, %v2651
      %v2668 = vsel %vm2588, %v2572, %v2652
      %v2669 = vsel %vm2589, %v2573, %v2653
      %v2670 = vsel %vm2590, %v2574, %v2654
      %v2671 = vsel %vm2591, %v2575, %v2655
      %v2672 = vsel %vm2592, %v2576, %v2656
      %v2673 = vsel %vm2593, %v2577, %v2657
      %v2674 = vsel %vm2594, %v2578, %v2658
      %v2675 = vsel %vm2595, %v2579, %v2659
      %v2676 = vsel %vm2596, %v2580, %v2660
      %v2677 = vsel %vm2597, %v2581, %v2661
      %v2678 = vsel %vm2598, %v2582, %v2662
      %v2679 = vmul.f32 %v2663, 1.050701
      %v2680 = vmul.f32 %v2664, 1.050701
      %v2681 = vmul.f32 %v2665, 1.050701
      %v2682 = vmul.f32 %v2666, 1.050701
      %v2683 = vmul.f32 %v2667, 1.050701
      %v2684 = vmul.f32 %v2668, 1.050701
      %v2685 = vmul.f32 %v2669, 1.050701
      %v2686 = vmul.f32 %v2670, 1.050701
      %v2687 = vmul.f32 %v2671, 1.050701
      %v2688 = vmul.f32 %v2672, 1.050701
      %v2689 = vmul.f32 %v2673, 1.050701
      %v2690 = vmul.f32 %v2674, 1.050701
      %v2691 = vmul.f32 %v2675, 1.050701
      %v2692 = vmul.f32 %v2676, 1.050701
      %v2693 = vmul.f32 %v2677, 1.050701
      %v2694 = vmul.f32 %v2678, 1.050701
      %v2695 = vld [vmem:[%s5] sm:$0x1]
      %v2697 = vlaneseq
      %v2698 = vshrl.u32 %v2697, 7
      %v2699 = vsub.s32 0, %v2698
      %v2700 = vrot.slane %v2695, %v2699
      %v2702 = vmul.f32 %v2679, %v2700
      %v2703 = vmul.f32 %v2680, %v2700
      %v2704 = vmul.f32 %v2681, %v2700
      %v2705 = vmul.f32 %v2682, %v2700
      %v2706 = vmul.f32 %v2683, %v2700
      %v2707 = vmul.f32 %v2684, %v2700
      %v2708 = vmul.f32 %v2685, %v2700
      %v2709 = vmul.f32 %v2686, %v2700
      %v2710 = vmul.f32 %v2687, %v2700
      %v2711 = vmul.f32 %v2688, %v2700
      %v2712 = vmul.f32 %v2689, %v2700
      %v2713 = vmul.f32 %v2690, %v2700
      %v2714 = vmul.f32 %v2691, %v2700
      %v2715 = vmul.f32 %v2692, %v2700
      %v2716 = vmul.f32 %v2693, %v2700
      %v2717 = vmul.f32 %v2694, %v2700
      %v2718 = vld [vmem:[%s6] sm:$0x1]
      %v2720 = vlaneseq
      %v2721 = vshrl.u32 %v2720, 7
      %v2722 = vsub.s32 0, %v2721
      %v2723 = vrot.slane %v2718, %v2722
      %v2725 = vadd.f32 %v2702, %v2723
      %v2726 = vadd.f32 %v2703, %v2723
      %v2727 = vadd.f32 %v2704, %v2723
      %v2728 = vadd.f32 %v2705, %v2723
      %v2729 = vadd.f32 %v2706, %v2723
      %v2730 = vadd.f32 %v2707, %v2723
      %v2731 = vadd.f32 %v2708, %v2723
      %v2732 = vadd.f32 %v2709, %v2723
      %v2733 = vadd.f32 %v2710, %v2723
      %v2734 = vadd.f32 %v2711, %v2723
      %v2735 = vadd.f32 %v2712, %v2723
      %v2736 = vadd.f32 %v2713, %v2723
      %v2737 = vadd.f32 %v2714, %v2723
      %v2738 = vadd.f32 %v2715, %v2723
      %v2739 = vadd.f32 %v2716, %v2723
      %v2740 = vadd.f32 %v2717, %v2723
      %2741 = vst.msk [vmem:[%s455] sm:$0xff] %vm494, %v2725
      %2742 = vst.msk [vmem:[%s455 + $0x8] sm:$0xff] %vm494, %v2726
      %2743 = vst.msk [vmem:[%s455 + $0x10] sm:$0xff] %vm494, %v2727
      %2744 = vst.msk [vmem:[%s455 + $0x18] sm:$0xff] %vm494, %v2728
      %2745 = vst.msk [vmem:[%s455 + $0x20] sm:$0xff] %vm494, %v2729
      %2746 = vst.msk [vmem:[%s455 + $0x28] sm:$0xff] %vm494, %v2730
      %2747 = vst.msk [vmem:[%s455 + $0x30] sm:$0xff] %vm494, %v2731
      %2748 = vst.msk [vmem:[%s455 + $0x38] sm:$0xff] %vm494, %v2732
      %2749 = vst.msk [vmem:[%s455 + $0x40] sm:$0xff] %vm494, %v2733
      %2750 = vst.msk [vmem:[%s455 + $0x48] sm:$0xff] %vm494, %v2734
      %2751 = vst.msk [vmem:[%s455 + $0x50] sm:$0xff] %vm494, %v2735
      %2752 = vst.msk [vmem:[%s455 + $0x58] sm:$0xff] %vm494, %v2736
      %2753 = vst.msk [vmem:[%s455 + $0x60] sm:$0xff] %vm494, %v2737
      %2754 = vst.msk [vmem:[%s455 + $0x68] sm:$0xff] %vm494, %v2738
      %2755 = vst.msk [vmem:[%s455 + $0x70] sm:$0xff] %vm494, %v2739
      %2756 = vst.msk [vmem:[%s455 + $0x78] sm:$0xff] %vm494, %v2740
      %s2757 = smul.u32 8, %s23
      %p2758 = scmp.lt.s32.totalorder %s22, 1
      %s2759 = scalar_select %p2758, %s22, 1
      %p2760 = scmp.lt.s32.totalorder %s2757, 15
      %s2761 = scalar_select %p2760, %s2757, 15
      %s2762 = smul.addr %s2761, 2
      %s2763 = smul.addr %s2759, 32
      %s2764 = sadd.s32 %s2762, %s2763
      %s2765 = smul.addr %s2764, 8
      %s2766 = scalar_lea.vmem %s7, %s2765
      // Predicated region
      $region49: #{deconv_block_forward.4} parent=47 // pred_check
        %p2767 = pneg %p234
      $region50: #{deconv_block_forward.4} parent=47 // pred_check_branch
        %2769 = sbr.rel (%p2767) target = $region52
      $region51: #{deconv_block_forward.4} parent=47 // pred_region
        %s2770 = smul.u32 8, %s23
      $region52: #{deconv_block_forward.4} parent=47 // pred_fallthru
        _
    $region48: #{deconv_block_forward.4} parent=5 // pred_fallthru
      _
    %p2771 = scmp.le.s32.totalorder 2, %s13
    // Predicated region
    $region53: #{deconv_block_forward.4} parent=5 // pred_check
      %p2772 = pneg %p2771
    $region54: #{deconv_block_forward.4} parent=5 // pred_check_branch
      %2774 = sbr.rel (%p2772) target = $region56
    $region55: #{deconv_block_forward.4} parent=5 // pred_region
      %s2775 = ssub.s32 %s13, 2
      // Predicated region
      $region57: #{deconv_block_forward.4} parent=55 // pred_check
        %p2776 = pneg %p240
      $region58: #{deconv_block_forward.4} parent=55 // pred_check_branch
        %2778 = sbr.rel (%p2776) target = $region60
      $region59: #{deconv_block_forward.4} parent=55 // pred_region
        %s2779 = smul.u32 8, %s25
        %p2780 = scmp.lt.s32.totalorder %s24, 1
        %s2781 = scalar_select %p2780, %s24, 1
        %p2782 = scmp.lt.s32.totalorder %s2779, 15
        %s2783 = scalar_select %p2782, %s2779, 15
        %s2784 = smul.addr %s2783, 2
        %s2785 = smul.addr %s2781, 32
        %s2786 = sadd.s32 %s2784, %s2785
        %s2787 = smul.addr %s2786, 8
        %s2788 = scalar_lea.vmem %s7, %s2787
      $region60: #{deconv_block_forward.4} parent=55 // pred_fallthru
        _
    $region56: #{deconv_block_forward.4} parent=5 // pred_fallthru
      _
  $region6: #{deconv_block_forward.4} parent=0 // loop_footer
    %s17 = sadd.s32 1, %s13
  $region7: #{deconv_block_forward.4} parent=0 // loop_footer_branch
    %12 = sbr.rel target = $region3
  $region8: #{deconv_block_forward.4} parent=0 // loop_exit
    _

</llo_original>
